<compile_context>
chip_gen: v7x
topology: tpu7x:2x2x1
jax: 0.10.0
libtpu: 0.0.40
codegen_flags: <defaults>
</compile_context>

<pallas_src>
import functools

import jax
import jax.numpy as jnp
from jax.experimental import pallas as pl
from jax.experimental.pallas import tpu as pltpu


def _round_up(x, m):
    return ((x + m - 1) // m) * m


# ----------------------------- Fused kernel ----------------------------------
# One grid step = one block of B images:
#   in-kernel im2col (9 tap matmuls) -> folded BN bias -> ReLU -> global pool.
def conv_bn_relu_pool_kernel(x_ref, w_ref, b_ref, o_ref, *, H, W, inv_hw):
    # x_ref : (B, H+2, W+2, Cin) f32  zero-padded NHWC images for this step
    # w_ref : (9, Cin, CF)       bf16 conv taps (BN scale folded in), Cout->CF pad
    # b_ref : (1, CF)            f32  folded BN bias (zero in padded lanes)
    # o_ref : (1, B, CF)         f32  global-average-pooled features
    B = x_ref.shape[0]
    Cin = x_ref.shape[3]
    CF = w_ref.shape[2]
    M = B * H * W

    acc = jnp.zeros((M, CF), jnp.float32)
    for t in range(9):                       # static unroll over the 3x3 taps
        dh, dw = t // 3, t % 3
        patch = x_ref[:, dh:dh + H, dw:dw + W, :]          # (B, H, W, Cin)
        patch2d = patch.reshape(M, Cin).astype(jnp.bfloat16)
        acc = acc + jnp.dot(patch2d, w_ref[t],
                            preferred_element_type=jnp.float32)

    y = jnp.maximum(acc + b_ref[...], 0.0)                 # BN bias + ReLU
    pooled = jnp.sum(y.reshape(B, H * W, CF), axis=1) * inv_hw   # (B, CF)
    o_ref[0] = pooled


# ------------------------------ Wrapper ---------------------------------------
def omni_model_forward(x_nchw, params, *, imgs_per_step=None):
    """Forward pass. x_nchw: (N, Cin, H, W) float32 -> logits (N, num_classes)."""
    N, Cin, H, W = x_nchw.shape
    Cout = params["conv_w"].shape[-1]
    CF = _round_up(Cout, 128)               # conv output channels, lane-dense

    # Images per grid step: batch enough to amortize per-step overhead, but
    # keep >=2 grid steps when possible (v7x has 2 TensorCores) and stay
    # inside a rough VMEM budget.
    if imgs_per_step is None:
        target_steps = 2 if N >= 2 else 1
        imgs_per_step = max(1, -(-N // target_steps))
        per_img = H * W * CF * 4 + 2 * (H + 2) * (W + 2) * Cin * 4
        budget = 8 * 1024 * 1024
        imgs_per_step = max(1, min(imgs_per_step, budget // max(per_img, 1)))
    B_blk = int(imgs_per_step)
    num_blocks = -(-N // B_blk)
    N_pad = num_blocks * B_blk

    # ---- wrapper-side layout plumbing (cheap, on the small raw input) ----
    # NCHW -> NHWC, zero-pad H/W by 1 (conv padding=1), pad batch to a
    # whole number of blocks.
    x = jnp.transpose(x_nchw, (0, 2, 3, 1)).astype(jnp.float32)
    x = jnp.pad(x, ((0, N_pad - N), (1, 1), (1, 1), (0, 0)))

    # Fold BN (eval) scale into the conv weights; keep bias as one operand.
    eps = 1e-5
    scale = params["bn_gamma"] / jnp.sqrt(params["bn_var"] + eps)   # (Cout,)
    bias = params["bn_beta"] - params["bn_mean"] * scale            # (Cout,)
    w = params["conv_w"] * scale[None, None, :]                     # (9,Cin,Cout)
    w = jnp.pad(w, ((0, 0), (0, 0), (0, CF - Cout))).astype(jnp.bfloat16)
    b = jnp.pad(bias, (0, CF - Cout)).reshape(1, CF).astype(jnp.float32)

    kernel = functools.partial(conv_bn_relu_pool_kernel,
                               H=H, W=W, inv_hw=1.0 / float(H * W))

    # Loose VMEM estimate for this block size (input dbl-buffered, consts,
    # output dbl-buffered, f32 activations); clamp to sane chip-wide limits.
    est = (2 * B_blk * (H + 2) * (W + 2) * Cin * 4
           + 9 * Cin * CF * 2 + CF * 4
           + 2 * B_blk * CF * 4
           + B_blk * H * W * CF * 4)
    vmem_limit = int(min(64 * 2**20, max(32 * 2**20, 4 * est)))

    def _run(single_buffer_consts):
        extra = {"pipeline_mode": pl.Buffered(1)} if single_buffer_consts else {}
        in_specs = [
            pl.BlockSpec((B_blk, H + 2, W + 2, Cin), lambda n: (n, 0, 0, 0)),
            pl.BlockSpec((9, Cin, CF), lambda n: (0, 0, 0), **extra),
            pl.BlockSpec((1, CF), lambda n: (0, 0), **extra),
        ]
        out = pl.pallas_call(
            kernel,
            out_shape=jax.ShapeDtypeStruct((num_blocks, B_blk, CF), jnp.float32),
            grid=(num_blocks,),
            in_specs=in_specs,
            out_specs=pl.BlockSpec((1, B_blk, CF), lambda n: (n, 0, 0)),
            compiler_params=pltpu.CompilerParams(
                dimension_semantics=("parallel",),
                vmem_limit_bytes=vmem_limit),
        )(x, w, b)
        return jax.block_until_ready(out)

    try:
        pooled = _run(True)
    except Exception:
        # pipeline_mode / Buffered(1) not supported by this JAX build:
        # fall back to default double-buffered constant operands.
        pooled = _run(False)

    pooled = pooled.reshape(N_pad, CF)[:N, :Cout]           # (N, Cout)

    # Classifier hoisted out of the kernel: one batched exact-f32 matmul.
    return pooled @ params["fc_w"] + params["fc_b"]


# --------------------------- Pure-JAX reference --------------------------------
def _reference_forward(x_nchw, params):
    N, Cin, H, W = x_nchw.shape
    Cout = params["conv_w"].shape[-1]
    x = jnp.transpose(x_nchw, (0, 2, 3, 1))
    x_pad = jnp.pad(x, ((0, 0), (1, 1), (1, 1), (0, 0)))
    acc = jnp.zeros((N, H, W, Cout), jnp.float32)
    for dh in range(3):
        for dw in range(3):
            patch = x_pad[:, dh:dh + H, dw:dw + W, :]
            acc = acc + jnp.einsum("nhwc,co->nhwo", patch,
                                   params["conv_w"][dh * 3 + dw])
    eps = 1e-5
    scale = params["bn_gamma"] / jnp.sqrt(params["bn_var"] + eps)
    bias = params["bn_beta"] - params["bn_mean"] * scale
    y = jnp.maximum(acc * scale + bias, 0.0)
    pooled = jnp.mean(y, axis=(1, 2))
    return pooled @ params["fc_w"] + params["fc_b"]


def init_params(key, Cin=4, Cout=32, num_classes=10):
    k1, k2, k3, k4 = jax.random.split(key, 4)
    # Conv weight stored as (9, Cin, Cout) == taps (dh, dw) flattened row-major
    # (PyTorch layout would be (Cout, Cin, 3, 3); this is its transpose/reshape).
    conv_w = 0.1 * jax.random.normal(k1, (9, Cin, Cout), dtype=jnp.float32)
    return {
        "conv_w": conv_w,
        "bn_gamma": jnp.ones((Cout,), jnp.float32),
        "bn_beta": jnp.zeros((Cout,), jnp.float32),
        "bn_mean": 0.01 * jax.random.normal(k2, (Cout,), dtype=jnp.float32),
        "bn_var": jnp.ones((Cout,), jnp.float32),
        "fc_w": 0.1 * jax.random.normal(k3, (Cout, num_classes),
                                        dtype=jnp.float32),
        "fc_b": 0.01 * jax.random.normal(k4, (num_classes,),
                                         dtype=jnp.float32),
    }


if __name__ == "__main__":
    key = jax.random.PRNGKey(0)
    kx, kp = jax.random.split(key)

    N, Cin, H, W = 2, 4, 16, 16
    num_classes = 10

    x = jax.random.normal(kx, (N, Cin, H, W), dtype=jnp.float32)  # NCHW input
    params = init_params(kp, Cin=Cin, Cout=32, num_classes=num_classes)

    logits = omni_model_forward(x, params)
    logits = jax.block_until_ready(logits)

    ref = _reference_forward(x, params)

    assert logits.shape == (N, num_classes)
    assert bool(jnp.all(jnp.isfinite(logits)))
    # bf16 MXU inputs for the conv -> loose tolerance vs the f32 reference.
    assert jnp.allclose(logits, ref, atol=5e-2, rtol=5e-2)
    print("KERNEL_OK")
</pallas_src>

<mosaic_0001>
module attributes {stable_mosaic.version = 11 : i64} {
  func.func @conv_bn_relu_pool_kernel(%arg0: i32, %arg1: memref<1x18x18x4xf32, #tpu.memory_space<vmem>>, %arg2: memref<9x4x128xbf16, #tpu.memory_space<vmem>>, %arg3: memref<1x128xf32, #tpu.memory_space<vmem>>, %arg4: memref<1x1x128xf32, #tpu.memory_space<vmem>>) attributes {dimension_semantics = [#tpu.dimension_semantics<parallel>], iteration_bounds = array<i64: 2>, scalar_prefetch = 0 : i64, scratch_operands = 0 : i64, tpu.core_type = #tpu.core_type<tc>, window_params = [{transform_indices = @transform_0, window_bounds = array<i64: 1, 18, 18, 4>}, {pipeline_mode = #tpu.pipeline_mode<synchronous>, transform_indices = @transform_1, window_bounds = array<i64: 9, 4, 128>}, {pipeline_mode = #tpu.pipeline_mode<synchronous>, transform_indices = @transform_2, window_bounds = array<i64: 1, 128>}, {transform_indices = @transform_3, window_bounds = array<i64: 1, 1, 128>}]} {
    %cst = arith.constant 0.000000e+00 : f32
    %0 = vector.broadcast %cst : f32 to vector<256x128xf32>
    %c0 = arith.constant 0 : index
    %c0_0 = arith.constant 0 : index
    %c0_1 = arith.constant 0 : index
    %c0_2 = arith.constant 0 : index
    %1 = vector.load %arg1[%c0, %c0_0, %c0_1, %c0_2] : memref<1x18x18x4xf32, #tpu.memory_space<vmem>>, vector<1x16x16x4xf32>
    %2 = vector.shape_cast %1 : vector<1x16x16x4xf32> to vector<256x4xf32>
    %3 = arith.truncf %2 : vector<256x4xf32> to vector<256x4xbf16>
    %c0_3 = arith.constant 0 : index
    %c0_4 = arith.constant 0 : index
    %c0_5 = arith.constant 0 : index
    %4 = vector.load %arg2[%c0_3, %c0_4, %c0_5] : memref<9x4x128xbf16, #tpu.memory_space<vmem>>, vector<1x4x128xbf16>
    %5 = vector.shape_cast %4 : vector<1x4x128xbf16> to vector<4x128xbf16>
    %cst_6 = arith.constant dense<0.000000e+00> : vector<256x128xf32>
    %6 = tpu.matmul %3, %5, %cst_6 {dimension_numbers = #tpu.dot_dimension_numbers<[1], [0], [0], [1], [0, 0, 1, 1], [], []>} : vector<256x4xbf16>, vector<4x128xbf16>, vector<256x128xf32> -> vector<256x128xf32>
    %7 = arith.addf %0, %6 : vector<256x128xf32>
    %c0_7 = arith.constant 0 : index
    %c0_8 = arith.constant 0 : index
    %c1 = arith.constant 1 : index
    %c0_9 = arith.constant 0 : index
    %8 = vector.load %arg1[%c0_7, %c0_8, %c1, %c0_9] : memref<1x18x18x4xf32, #tpu.memory_space<vmem>>, vector<1x16x16x4xf32>
    %9 = vector.shape_cast %8 : vector<1x16x16x4xf32> to vector<256x4xf32>
    %10 = arith.truncf %9 : vector<256x4xf32> to vector<256x4xbf16>
    %c1_10 = arith.constant 1 : index
    %c0_11 = arith.constant 0 : index
    %c0_12 = arith.constant 0 : index
    %11 = vector.load %arg2[%c1_10, %c0_11, %c0_12] : memref<9x4x128xbf16, #tpu.memory_space<vmem>>, vector<1x4x128xbf16>
    %12 = vector.shape_cast %11 : vector<1x4x128xbf16> to vector<4x128xbf16>
    %cst_13 = arith.constant dense<0.000000e+00> : vector<256x128xf32>
    %13 = tpu.matmul %10, %12, %cst_13 {dimension_numbers = #tpu.dot_dimension_numbers<[1], [0], [0], [1], [0, 0, 1, 1], [], []>} : vector<256x4xbf16>, vector<4x128xbf16>, vector<256x128xf32> -> vector<256x128xf32>
    %14 = arith.addf %7, %13 : vector<256x128xf32>
    %c0_14 = arith.constant 0 : index
    %c0_15 = arith.constant 0 : index
    %c2 = arith.constant 2 : index
    %c0_16 = arith.constant 0 : index
    %15 = vector.load %arg1[%c0_14, %c0_15, %c2, %c0_16] : memref<1x18x18x4xf32, #tpu.memory_space<vmem>>, vector<1x16x16x4xf32>
    %16 = vector.shape_cast %15 : vector<1x16x16x4xf32> to vector<256x4xf32>
    %17 = arith.truncf %16 : vector<256x4xf32> to vector<256x4xbf16>
    %c2_17 = arith.constant 2 : index
    %c0_18 = arith.constant 0 : index
    %c0_19 = arith.constant 0 : index
    %18 = vector.load %arg2[%c2_17, %c0_18, %c0_19] : memref<9x4x128xbf16, #tpu.memory_space<vmem>>, vector<1x4x128xbf16>
    %19 = vector.shape_cast %18 : vector<1x4x128xbf16> to vector<4x128xbf16>
    %cst_20 = arith.constant dense<0.000000e+00> : vector<256x128xf32>
    %20 = tpu.matmul %17, %19, %cst_20 {dimension_numbers = #tpu.dot_dimension_numbers<[1], [0], [0], [1], [0, 0, 1, 1], [], []>} : vector<256x4xbf16>, vector<4x128xbf16>, vector<256x128xf32> -> vector<256x128xf32>
    %21 = arith.addf %14, %20 : vector<256x128xf32>
    %c0_21 = arith.constant 0 : index
    %c1_22 = arith.constant 1 : index
    %c0_23 = arith.constant 0 : index
    %c0_24 = arith.constant 0 : index
    %22 = vector.load %arg1[%c0_21, %c1_22, %c0_23, %c0_24] : memref<1x18x18x4xf32, #tpu.memory_space<vmem>>, vector<1x16x16x4xf32>
    %23 = vector.shape_cast %22 : vector<1x16x16x4xf32> to vector<256x4xf32>
    %24 = arith.truncf %23 : vector<256x4xf32> to vector<256x4xbf16>
    %c3 = arith.constant 3 : index
    %c0_25 = arith.constant 0 : index
    %c0_26 = arith.constant 0 : index
    %25 = vector.load %arg2[%c3, %c0_25, %c0_26] : memref<9x4x128xbf16, #tpu.memory_space<vmem>>, vector<1x4x128xbf16>
    %26 = vector.shape_cast %25 : vector<1x4x128xbf16> to vector<4x128xbf16>
    %cst_27 = arith.constant dense<0.000000e+00> : vector<256x128xf32>
    %27 = tpu.matmul %24, %26, %cst_27 {dimension_numbers = #tpu.dot_dimension_numbers<[1], [0], [0], [1], [0, 0, 1, 1], [], []>} : vector<256x4xbf16>, vector<4x128xbf16>, vector<256x128xf32> -> vector<256x128xf32>
    %28 = arith.addf %21, %27 : vector<256x128xf32>
    %c0_28 = arith.constant 0 : index
    %c1_29 = arith.constant 1 : index
    %c1_30 = arith.constant 1 : index
    %c0_31 = arith.constant 0 : index
    %29 = vector.load %arg1[%c0_28, %c1_29, %c1_30, %c0_31] : memref<1x18x18x4xf32, #tpu.memory_space<vmem>>, vector<1x16x16x4xf32>
    %30 = vector.shape_cast %29 : vector<1x16x16x4xf32> to vector<256x4xf32>
    %31 = arith.truncf %30 : vector<256x4xf32> to vector<256x4xbf16>
    %c4 = arith.constant 4 : index
    %c0_32 = arith.constant 0 : index
    %c0_33 = arith.constant 0 : index
    %32 = vector.load %arg2[%c4, %c0_32, %c0_33] : memref<9x4x128xbf16, #tpu.memory_space<vmem>>, vector<1x4x128xbf16>
    %33 = vector.shape_cast %32 : vector<1x4x128xbf16> to vector<4x128xbf16>
    %cst_34 = arith.constant dense<0.000000e+00> : vector<256x128xf32>
    %34 = tpu.matmul %31, %33, %cst_34 {dimension_numbers = #tpu.dot_dimension_numbers<[1], [0], [0], [1], [0, 0, 1, 1], [], []>} : vector<256x4xbf16>, vector<4x128xbf16>, vector<256x128xf32> -> vector<256x128xf32>
    %35 = arith.addf %28, %34 : vector<256x128xf32>
    %c0_35 = arith.constant 0 : index
    %c1_36 = arith.constant 1 : index
    %c2_37 = arith.constant 2 : index
    %c0_38 = arith.constant 0 : index
    %36 = vector.load %arg1[%c0_35, %c1_36, %c2_37, %c0_38] : memref<1x18x18x4xf32, #tpu.memory_space<vmem>>, vector<1x16x16x4xf32>
    %37 = vector.shape_cast %36 : vector<1x16x16x4xf32> to vector<256x4xf32>
    %38 = arith.truncf %37 : vector<256x4xf32> to vector<256x4xbf16>
    %c5 = arith.constant 5 : index
    %c0_39 = arith.constant 0 : index
    %c0_40 = arith.constant 0 : index
    %39 = vector.load %arg2[%c5, %c0_39, %c0_40] : memref<9x4x128xbf16, #tpu.memory_space<vmem>>, vector<1x4x128xbf16>
    %40 = vector.shape_cast %39 : vector<1x4x128xbf16> to vector<4x128xbf16>
    %cst_41 = arith.constant dense<0.000000e+00> : vector<256x128xf32>
    %41 = tpu.matmul %38, %40, %cst_41 {dimension_numbers = #tpu.dot_dimension_numbers<[1], [0], [0], [1], [0, 0, 1, 1], [], []>} : vector<256x4xbf16>, vector<4x128xbf16>, vector<256x128xf32> -> vector<256x128xf32>
    %42 = arith.addf %35, %41 : vector<256x128xf32>
    %c0_42 = arith.constant 0 : index
    %c2_43 = arith.constant 2 : index
    %c0_44 = arith.constant 0 : index
    %c0_45 = arith.constant 0 : index
    %43 = vector.load %arg1[%c0_42, %c2_43, %c0_44, %c0_45] : memref<1x18x18x4xf32, #tpu.memory_space<vmem>>, vector<1x16x16x4xf32>
    %44 = vector.shape_cast %43 : vector<1x16x16x4xf32> to vector<256x4xf32>
    %45 = arith.truncf %44 : vector<256x4xf32> to vector<256x4xbf16>
    %c6 = arith.constant 6 : index
    %c0_46 = arith.constant 0 : index
    %c0_47 = arith.constant 0 : index
    %46 = vector.load %arg2[%c6, %c0_46, %c0_47] : memref<9x4x128xbf16, #tpu.memory_space<vmem>>, vector<1x4x128xbf16>
    %47 = vector.shape_cast %46 : vector<1x4x128xbf16> to vector<4x128xbf16>
    %cst_48 = arith.constant dense<0.000000e+00> : vector<256x128xf32>
    %48 = tpu.matmul %45, %47, %cst_48 {dimension_numbers = #tpu.dot_dimension_numbers<[1], [0], [0], [1], [0, 0, 1, 1], [], []>} : vector<256x4xbf16>, vector<4x128xbf16>, vector<256x128xf32> -> vector<256x128xf32>
    %49 = arith.addf %42, %48 : vector<256x128xf32>
    %c0_49 = arith.constant 0 : index
    %c2_50 = arith.constant 2 : index
    %c1_51 = arith.constant 1 : index
    %c0_52 = arith.constant 0 : index
    %50 = vector.load %arg1[%c0_49, %c2_50, %c1_51, %c0_52] : memref<1x18x18x4xf32, #tpu.memory_space<vmem>>, vector<1x16x16x4xf32>
    %51 = vector.shape_cast %50 : vector<1x16x16x4xf32> to vector<256x4xf32>
    %52 = arith.truncf %51 : vector<256x4xf32> to vector<256x4xbf16>
    %c7 = arith.constant 7 : index
    %c0_53 = arith.constant 0 : index
    %c0_54 = arith.constant 0 : index
    %53 = vector.load %arg2[%c7, %c0_53, %c0_54] : memref<9x4x128xbf16, #tpu.memory_space<vmem>>, vector<1x4x128xbf16>
    %54 = vector.shape_cast %53 : vector<1x4x128xbf16> to vector<4x128xbf16>
    %cst_55 = arith.constant dense<0.000000e+00> : vector<256x128xf32>
    %55 = tpu.matmul %52, %54, %cst_55 {dimension_numbers = #tpu.dot_dimension_numbers<[1], [0], [0], [1], [0, 0, 1, 1], [], []>} : vector<256x4xbf16>, vector<4x128xbf16>, vector<256x128xf32> -> vector<256x128xf32>
    %56 = arith.addf %49, %55 : vector<256x128xf32>
    %c0_56 = arith.constant 0 : index
    %c2_57 = arith.constant 2 : index
    %c2_58 = arith.constant 2 : index
    %c0_59 = arith.constant 0 : index
    %57 = vector.load %arg1[%c0_56, %c2_57, %c2_58, %c0_59] : memref<1x18x18x4xf32, #tpu.memory_space<vmem>>, vector<1x16x16x4xf32>
    %58 = vector.shape_cast %57 : vector<1x16x16x4xf32> to vector<256x4xf32>
    %59 = arith.truncf %58 : vector<256x4xf32> to vector<256x4xbf16>
    %c8 = arith.constant 8 : index
    %c0_60 = arith.constant 0 : index
    %c0_61 = arith.constant 0 : index
    %60 = vector.load %arg2[%c8, %c0_60, %c0_61] : memref<9x4x128xbf16, #tpu.memory_space<vmem>>, vector<1x4x128xbf16>
    %61 = vector.shape_cast %60 : vector<1x4x128xbf16> to vector<4x128xbf16>
    %cst_62 = arith.constant dense<0.000000e+00> : vector<256x128xf32>
    %62 = tpu.matmul %59, %61, %cst_62 {dimension_numbers = #tpu.dot_dimension_numbers<[1], [0], [0], [1], [0, 0, 1, 1], [], []>} : vector<256x4xbf16>, vector<4x128xbf16>, vector<256x128xf32> -> vector<256x128xf32>
    %63 = arith.addf %56, %62 : vector<256x128xf32>
    %c0_63 = arith.constant 0 : index
    %c0_64 = arith.constant 0 : index
    %64 = vector.load %arg3[%c0_63, %c0_64] : memref<1x128xf32, #tpu.memory_space<vmem>>, vector<1x128xf32>
    %65 = vector.broadcast %64 : vector<1x128xf32> to vector<256x128xf32>
    %66 = arith.addf %63, %65 : vector<256x128xf32>
    %cst_65 = arith.constant 0.000000e+00 : f32
    %67 = vector.broadcast %cst_65 : f32 to vector<256x128xf32>
    %68 = arith.maximumf %66, %67 : vector<256x128xf32>
    %69 = vector.shape_cast %68 : vector<256x128xf32> to vector<1x256x128xf32>
    %cst_66 = arith.constant dense<0.000000e+00> : vector<1x128xf32>
    %70 = vector.multi_reduction <add>, %69, %cst_66 [1] : vector<1x256x128xf32> to vector<1x128xf32>
    %cst_67 = arith.constant 3.906250e-03 : f32
    %71 = vector.broadcast %cst_67 : f32 to vector<1x128xf32>
    %72 = arith.mulf %70, %71 : vector<1x128xf32>
    %c0_68 = arith.constant 0 : index
    %c0_69 = arith.constant 0 : index
    %c0_70 = arith.constant 0 : index
    %73 = vector.load %arg4[%c0_68, %c0_69, %c0_70] : memref<1x1x128xf32, #tpu.memory_space<vmem>>, vector<1x1x128xf32>
    %74 = vector.shape_cast %73 : vector<1x1x128xf32> to vector<1x128xf32>
    %75 = vector.shape_cast %72 : vector<1x128xf32> to vector<1x1x128xf32>
    tpu.vector_store %arg4[%c0_68, %c0_69, %c0_70], %75 {strides = array<i32>} : memref<1x1x128xf32, #tpu.memory_space<vmem>>, vector<1x1x128xf32>,
    return
  }
  func.func @transform_0(%arg0: i32) -> (i32, i32, i32, i32) {
    %c0_i32 = arith.constant 0 : i32
    %c0_i32_0 = arith.constant 0 : i32
    %c0_i32_1 = arith.constant 0 : i32
    %c0_i32_2 = arith.constant 0 : i32
    return %arg0, %c0_i32, %c0_i32_0, %c0_i32_1 : i32, i32, i32, i32
  }
  func.func @transform_1(%arg0: i32) -> (i32, i32, i32) {
    %c0_i32 = arith.constant 0 : i32
    %c0_i32_0 = arith.constant 0 : i32
    %c0_i32_1 = arith.constant 0 : i32
    %c0_i32_2 = arith.constant 0 : i32
    return %c0_i32, %c0_i32_0, %c0_i32_1 : i32, i32, i32
  }
  func.func @transform_2(%arg0: i32) -> (i32, i32) {
    %c0_i32 = arith.constant 0 : i32
    %c0_i32_0 = arith.constant 0 : i32
    %c0_i32_1 = arith.constant 0 : i32
    return %c0_i32, %c0_i32_0 : i32, i32
  }
  func.func @transform_3(%arg0: i32) -> (i32, i32, i32) {
    %c0_i32 = arith.constant 0 : i32
    %c0_i32_0 = arith.constant 0 : i32
    %c0_i32_1 = arith.constant 0 : i32
    return %arg0, %c0_i32, %c0_i32_0 : i32, i32, i32
  }
}

module attributes {stable_mosaic.version = 11 : i64} {
  func.func @conv_bn_relu_pool_kernel(%arg0: i32, %arg1: memref<1x18x18x4xf32, #tpu.memory_space<vmem>>, %arg2: memref<9x4x128xbf16, #tpu.memory_space<vmem>>, %arg3: memref<1x128xf32, #tpu.memory_space<vmem>>, %arg4: memref<1x1x128xf32, #tpu.memory_space<vmem>>) attributes {dimension_semantics = [#tpu.dimension_semantics<parallel>], iteration_bounds = array<i64: 2>, scalar_prefetch = 0 : i64, scratch_operands = 0 : i64, tpu.core_type = #tpu.core_type<tc>, window_params = [{transform_indices = @transform_0, window_bounds = array<i64: 1, 18, 18, 4>}, {pipeline_mode = #tpu.pipeline_mode<synchronous>, transform_indices = @transform_1, window_bounds = array<i64: 9, 4, 128>}, {pipeline_mode = #tpu.pipeline_mode<synchronous>, transform_indices = @transform_2, window_bounds = array<i64: 1, 128>}, {transform_indices = @transform_3, window_bounds = array<i64: 1, 1, 128>}]} {
    %cst = arith.constant 0.000000e+00 : f32
    %0 = vector.broadcast %cst : f32 to vector<256x128xf32>
    %c0 = arith.constant 0 : index
    %c0_0 = arith.constant 0 : index
    %c0_1 = arith.constant 0 : index
    %c0_2 = arith.constant 0 : index
    %1 = vector.load %arg1[%c0, %c0_0, %c0_1, %c0_2] : memref<1x18x18x4xf32, #tpu.memory_space<vmem>>, vector<1x16x16x4xf32>
    %2 = vector.shape_cast %1 : vector<1x16x16x4xf32> to vector<256x4xf32>
    %3 = arith.truncf %2 : vector<256x4xf32> to vector<256x4xbf16>
    %c0_3 = arith.constant 0 : index
    %c0_4 = arith.constant 0 : index
    %c0_5 = arith.constant 0 : index
    %4 = vector.load %arg2[%c0_3, %c0_4, %c0_5] : memref<9x4x128xbf16, #tpu.memory_space<vmem>>, vector<1x4x128xbf16>
    %5 = vector.shape_cast %4 : vector<1x4x128xbf16> to vector<4x128xbf16>
    %cst_6 = arith.constant dense<0.000000e+00> : vector<256x128xf32>
    %6 = tpu.matmul %3, %5, %cst_6 {dimension_numbers = #tpu.dot_dimension_numbers<[1], [0], [0], [1], [0, 0, 1, 1], [], []>} : vector<256x4xbf16>, vector<4x128xbf16>, vector<256x128xf32> -> vector<256x128xf32>
    %7 = arith.addf %0, %6 : vector<256x128xf32>
    %c0_7 = arith.constant 0 : index
    %c0_8 = arith.constant 0 : index
    %c1 = arith.constant 1 : index
    %c0_9 = arith.constant 0 : index
    %8 = vector.load %arg1[%c0_7, %c0_8, %c1, %c0_9] : memref<1x18x18x4xf32, #tpu.memory_space<vmem>>, vector<1x16x16x4xf32>
    %9 = vector.shape_cast %8 : vector<1x16x16x4xf32> to vector<256x4xf32>
    %10 = arith.truncf %9 : vector<256x4xf32> to vector<256x4xbf16>
    %c1_10 = arith.constant 1 : index
    %c0_11 = arith.constant 0 : index
    %c0_12 = arith.constant 0 : index
    %11 = vector.load %arg2[%c1_10, %c0_11, %c0_12] : memref<9x4x128xbf16, #tpu.memory_space<vmem>>, vector<1x4x128xbf16>
    %12 = vector.shape_cast %11 : vector<1x4x128xbf16> to vector<4x128xbf16>
    %cst_13 = arith.constant dense<0.000000e+00> : vector<256x128xf32>
    %13 = tpu.matmul %10, %12, %cst_13 {dimension_numbers = #tpu.dot_dimension_numbers<[1], [0], [0], [1], [0, 0, 1, 1], [], []>} : vector<256x4xbf16>, vector<4x128xbf16>, vector<256x128xf32> -> vector<256x128xf32>
    %14 = arith.addf %7, %13 : vector<256x128xf32>
    %c0_14 = arith.constant 0 : index
    %c0_15 = arith.constant 0 : index
    %c2 = arith.constant 2 : index
    %c0_16 = arith.constant 0 : index
    %15 = vector.load %arg1[%c0_14, %c0_15, %c2, %c0_16] : memref<1x18x18x4xf32, #tpu.memory_space<vmem>>, vector<1x16x16x4xf32>
    %16 = vector.shape_cast %15 : vector<1x16x16x4xf32> to vector<256x4xf32>
    %17 = arith.truncf %16 : vector<256x4xf32> to vector<256x4xbf16>
    %c2_17 = arith.constant 2 : index
    %c0_18 = arith.constant 0 : index
    %c0_19 = arith.constant 0 : index
    %18 = vector.load %arg2[%c2_17, %c0_18, %c0_19] : memref<9x4x128xbf16, #tpu.memory_space<vmem>>, vector<1x4x128xbf16>
    %19 = vector.shape_cast %18 : vector<1x4x128xbf16> to vector<4x128xbf16>
    %cst_20 = arith.constant dense<0.000000e+00> : vector<256x128xf32>
    %20 = tpu.matmul %17, %19, %cst_20 {dimension_numbers = #tpu.dot_dimension_numbers<[1], [0], [0], [1], [0, 0, 1, 1], [], []>} : vector<256x4xbf16>, vector<4x128xbf16>, vector<256x128xf32> -> vector<256x128xf32>
    %21 = arith.addf %14, %20 : vector<256x128xf32>
    %c0_21 = arith.constant 0 : index
    %c1_22 = arith.constant 1 : index
    %c0_23 = arith.constant 0 : index
    %c0_24 = arith.constant 0 : index
    %22 = vector.load %arg1[%c0_21, %c1_22, %c0_23, %c0_24] : memref<1x18x18x4xf32, #tpu.memory_space<vmem>>, vector<1x16x16x4xf32>
    %23 = vector.shape_cast %22 : vector<1x16x16x4xf32> to vector<256x4xf32>
    %24 = arith.truncf %23 : vector<256x4xf32> to vector<256x4xbf16>
    %c3 = arith.constant 3 : index
    %c0_25 = arith.constant 0 : index
    %c0_26 = arith.constant 0 : index
    %25 = vector.load %arg2[%c3, %c0_25, %c0_26] : memref<9x4x128xbf16, #tpu.memory_space<vmem>>, vector<1x4x128xbf16>
    %26 = vector.shape_cast %25 : vector<1x4x128xbf16> to vector<4x128xbf16>
    %cst_27 = arith.constant dense<0.000000e+00> : vector<256x128xf32>
    %27 = tpu.matmul %24, %26, %cst_27 {dimension_numbers = #tpu.dot_dimension_numbers<[1], [0], [0], [1], [0, 0, 1, 1], [], []>} : vector<256x4xbf16>, vector<4x128xbf16>, vector<256x128xf32> -> vector<256x128xf32>
    %28 = arith.addf %21, %27 : vector<256x128xf32>
    %c0_28 = arith.constant 0 : index
    %c1_29 = arith.constant 1 : index
    %c1_30 = arith.constant 1 : index
    %c0_31 = arith.constant 0 : index
    %29 = vector.load %arg1[%c0_28, %c1_29, %c1_30, %c0_31] : memref<1x18x18x4xf32, #tpu.memory_space<vmem>>, vector<1x16x16x4xf32>
    %30 = vector.shape_cast %29 : vector<1x16x16x4xf32> to vector<256x4xf32>
    %31 = arith.truncf %30 : vector<256x4xf32> to vector<256x4xbf16>
    %c4 = arith.constant 4 : index
    %c0_32 = arith.constant 0 : index
    %c0_33 = arith.constant 0 : index
    %32 = vector.load %arg2[%c4, %c0_32, %c0_33] : memref<9x4x128xbf16, #tpu.memory_space<vmem>>, vector<1x4x128xbf16>
    %33 = vector.shape_cast %32 : vector<1x4x128xbf16> to vector<4x128xbf16>
    %cst_34 = arith.constant dense<0.000000e+00> : vector<256x128xf32>
    %34 = tpu.matmul %31, %33, %cst_34 {dimension_numbers = #tpu.dot_dimension_numbers<[1], [0], [0], [1], [0, 0, 1, 1], [], []>} : vector<256x4xbf16>, vector<4x128xbf16>, vector<256x128xf32> -> vector<256x128xf32>
    %35 = arith.addf %28, %34 : vector<256x128xf32>
    %c0_35 = arith.constant 0 : index
    %c1_36 = arith.constant 1 : index
    %c2_37 = arith.constant 2 : index
    %c0_38 = arith.constant 0 : index
    %36 = vector.load %arg1[%c0_35, %c1_36, %c2_37, %c0_38] : memref<1x18x18x4xf32, #tpu.memory_space<vmem>>, vector<1x16x16x4xf32>
    %37 = vector.shape_cast %36 : vector<1x16x16x4xf32> to vector<256x4xf32>
    %38 = arith.truncf %37 : vector<256x4xf32> to vector<256x4xbf16>
    %c5 = arith.constant 5 : index
    %c0_39 = arith.constant 0 : index
    %c0_40 = arith.constant 0 : index
    %39 = vector.load %arg2[%c5, %c0_39, %c0_40] : memref<9x4x128xbf16, #tpu.memory_space<vmem>>, vector<1x4x128xbf16>
    %40 = vector.shape_cast %39 : vector<1x4x128xbf16> to vector<4x128xbf16>
    %cst_41 = arith.constant dense<0.000000e+00> : vector<256x128xf32>
    %41 = tpu.matmul %38, %40, %cst_41 {dimension_numbers = #tpu.dot_dimension_numbers<[1], [0], [0], [1], [0, 0, 1, 1], [], []>} : vector<256x4xbf16>, vector<4x128xbf16>, vector<256x128xf32> -> vector<256x128xf32>
    %42 = arith.addf %35, %41 : vector<256x128xf32>
    %c0_42 = arith.constant 0 : index
    %c2_43 = arith.constant 2 : index
    %c0_44 = arith.constant 0 : index
    %c0_45 = arith.constant 0 : index
    %43 = vector.load %arg1[%c0_42, %c2_43, %c0_44, %c0_45] : memref<1x18x18x4xf32, #tpu.memory_space<vmem>>, vector<1x16x16x4xf32>
    %44 = vector.shape_cast %43 : vector<1x16x16x4xf32> to vector<256x4xf32>
    %45 = arith.truncf %44 : vector<256x4xf32> to vector<256x4xbf16>
    %c6 = arith.constant 6 : index
    %c0_46 = arith.constant 0 : index
    %c0_47 = arith.constant 0 : index
    %46 = vector.load %arg2[%c6, %c0_46, %c0_47] : memref<9x4x128xbf16, #tpu.memory_space<vmem>>, vector<1x4x128xbf16>
    %47 = vector.shape_cast %46 : vector<1x4x128xbf16> to vector<4x128xbf16>
    %cst_48 = arith.constant dense<0.000000e+00> : vector<256x128xf32>
    %48 = tpu.matmul %45, %47, %cst_48 {dimension_numbers = #tpu.dot_dimension_numbers<[1], [0], [0], [1], [0, 0, 1, 1], [], []>} : vector<256x4xbf16>, vector<4x128xbf16>, vector<256x128xf32> -> vector<256x128xf32>
    %49 = arith.addf %42, %48 : vector<256x128xf32>
    %c0_49 = arith.constant 0 : index
    %c2_50 = arith.constant 2 : index
    %c1_51 = arith.constant 1 : index
    %c0_52 = arith.constant 0 : index
    %50 = vector.load %arg1[%c0_49, %c2_50, %c1_51, %c0_52] : memref<1x18x18x4xf32, #tpu.memory_space<vmem>>, vector<1x16x16x4xf32>
    %51 = vector.shape_cast %50 : vector<1x16x16x4xf32> to vector<256x4xf32>
    %52 = arith.truncf %51 : vector<256x4xf32> to vector<256x4xbf16>
    %c7 = arith.constant 7 : index
    %c0_53 = arith.constant 0 : index
    %c0_54 = arith.constant 0 : index
    %53 = vector.load %arg2[%c7, %c0_53, %c0_54] : memref<9x4x128xbf16, #tpu.memory_space<vmem>>, vector<1x4x128xbf16>
    %54 = vector.shape_cast %53 : vector<1x4x128xbf16> to vector<4x128xbf16>
    %cst_55 = arith.constant dense<0.000000e+00> : vector<256x128xf32>
    %55 = tpu.matmul %52, %54, %cst_55 {dimension_numbers = #tpu.dot_dimension_numbers<[1], [0], [0], [1], [0, 0, 1, 1], [], []>} : vector<256x4xbf16>, vector<4x128xbf16>, vector<256x128xf32> -> vector<256x128xf32>
    %56 = arith.addf %49, %55 : vector<256x128xf32>
    %c0_56 = arith.constant 0 : index
    %c2_57 = arith.constant 2 : index
    %c2_58 = arith.constant 2 : index
    %c0_59 = arith.constant 0 : index
    %57 = vector.load %arg1[%c0_56, %c2_57, %c2_58, %c0_59] : memref<1x18x18x4xf32, #tpu.memory_space<vmem>>, vector<1x16x16x4xf32>
    %58 = vector.shape_cast %57 : vector<1x16x16x4xf32> to vector<256x4xf32>
    %59 = arith.truncf %58 : vector<256x4xf32> to vector<256x4xbf16>
    %c8 = arith.constant 8 : index
    %c0_60 = arith.constant 0 : index
    %c0_61 = arith.constant 0 : index
    %60 = vector.load %arg2[%c8, %c0_60, %c0_61] : memref<9x4x128xbf16, #tpu.memory_space<vmem>>, vector<1x4x128xbf16>
    %61 = vector.shape_cast %60 : vector<1x4x128xbf16> to vector<4x128xbf16>
    %cst_62 = arith.constant dense<0.000000e+00> : vector<256x128xf32>
    %62 = tpu.matmul %59, %61, %cst_62 {dimension_numbers = #tpu.dot_dimension_numbers<[1], [0], [0], [1], [0, 0, 1, 1], [], []>} : vector<256x4xbf16>, vector<4x128xbf16>, vector<256x128xf32> -> vector<256x128xf32>
    %63 = arith.addf %56, %62 : vector<256x128xf32>
    %c0_63 = arith.constant 0 : index
    %c0_64 = arith.constant 0 : index
    %64 = vector.load %arg3[%c0_63, %c0_64] : memref<1x128xf32, #tpu.memory_space<vmem>>, vector<1x128xf32>
    %65 = vector.broadcast %64 : vector<1x128xf32> to vector<256x128xf32>
    %66 = arith.addf %63, %65 : vector<256x128xf32>
    %cst_65 = arith.constant 0.000000e+00 : f32
    %67 = vector.broadcast %cst_65 : f32 to vector<256x128xf32>
    %68 = arith.maximumf %66, %67 : vector<256x128xf32>
    %69 = vector.shape_cast %68 : vector<256x128xf32> to vector<1x256x128xf32>
    %cst_66 = arith.constant dense<0.000000e+00> : vector<1x128xf32>
    %70 = vector.multi_reduction <add>, %69, %cst_66 [1] : vector<1x256x128xf32> to vector<1x128xf32>
    %cst_67 = arith.constant 3.906250e-03 : f32
    %71 = vector.broadcast %cst_67 : f32 to vector<1x128xf32>
    %72 = arith.mulf %70, %71 : vector<1x128xf32>
    %c0_68 = arith.constant 0 : index
    %c0_69 = arith.constant 0 : index
    %c0_70 = arith.constant 0 : index
    %73 = vector.load %arg4[%c0_68, %c0_69, %c0_70] : memref<1x1x128xf32, #tpu.memory_space<vmem>>, vector<1x1x128xf32>
    %74 = vector.shape_cast %73 : vector<1x1x128xf32> to vector<1x128xf32>
    %75 = vector.shape_cast %72 : vector<1x128xf32> to vector<1x1x128xf32>
    tpu.vector_store %arg4[%c0_68, %c0_69, %c0_70], %75 {strides = array<i32>} : memref<1x1x128xf32, #tpu.memory_space<vmem>>, vector<1x1x128xf32>,
    return
  }
  func.func @transform_0(%arg0: i32) -> (i32, i32, i32, i32) {
    %c0_i32 = arith.constant 0 : i32
    %c0_i32_0 = arith.constant 0 : i32
    %c0_i32_1 = arith.constant 0 : i32
    %c0_i32_2 = arith.constant 0 : i32
    return %arg0, %c0_i32, %c0_i32_0, %c0_i32_1 : i32, i32, i32, i32
  }
  func.func @transform_1(%arg0: i32) -> (i32, i32, i32) {
    %c0_i32 = arith.constant 0 : i32
    %c0_i32_0 = arith.constant 0 : i32
    %c0_i32_1 = arith.constant 0 : i32
    %c0_i32_2 = arith.constant 0 : i32
    return %c0_i32, %c0_i32_0, %c0_i32_1 : i32, i32, i32
  }
  func.func @transform_2(%arg0: i32) -> (i32, i32) {
    %c0_i32 = arith.constant 0 : i32
    %c0_i32_0 = arith.constant 0 : i32
    %c0_i32_1 = arith.constant 0 : i32
    return %c0_i32, %c0_i32_0 : i32, i32
  }
  func.func @transform_3(%arg0: i32) -> (i32, i32, i32) {
    %c0_i32 = arith.constant 0 : i32
    %c0_i32_0 = arith.constant 0 : i32
    %c0_i32_1 = arith.constant 0 : i32
    return %arg0, %c0_i32, %c0_i32_0 : i32, i32, i32
  }
}

</mosaic_0001>

<llo_original>
// kernel: tpu_custom_call.1
$region0: #{tpu_custom_call.1}
  #allocation0 [shape = 'u32[]', space=smem, size = 0x4, offset = 0x4, fixed_abs, tag = 'smem constant byte address 0x4 - core index']
  #allocation1 [shape = 'u32[144,128]{1,0:T(1,128)}', space=vmem, size = 0x12000, scoped, tag = 'internal scratch']
  %s0 = inlined_call_operand.vmem [shape: f32[2,18,18,4], index: 0, kind: input, shape index: {}]
  %s1 = inlined_call_operand.vmem [shape: bf16[9,4,128], index: 1, kind: input, shape index: {}]
  %s2 = inlined_call_operand.vmem [shape: f32[1,128], index: 2, kind: input, shape index: {}]
  %s3 = inlined_call_operand.hbm [shape: f32[2,1,128], index: 3, kind: output, shape index: {}]
  %s4 = sld [smem:[#allocation0]]
  $region45: #{tpu_custom_call.1} parent=0
    _
  %s6 = ssub.s32 1, %s4
  %s7 = scalar_select 0, %s6, %s4
  $region1: #{tpu_custom_call.1} parent=0
    #allocation2 [shape = 'u8[1024]{0}', space=vmem, size = 0x400, scoped, tag = 'output window, operand 0']
    #allocation3 [shape = 's32[2]{0}', space=sflag, size = 0x8, scoped, tag = 'scoped memory for tpu_custom_call.1']
    %8 = vsyncpa [#allocation3], 0
    %s9 = scalar_lea.sflag [#allocation3], 1
    %10 = vsyncpa %s9, 0
    loop: start=0, step=1, limit=4
    $region2: #{tpu_custom_call.1} parent=1 // loop_pre_header
      _
    $region3: #{tpu_custom_call.1} parent=1 // loop_header
      %s12 = sphi 0, %s16
      %p13 = scmp.ge.s32.totalorder %s12, 4
      %s22 = sphi 0, %s24
      %s25 = sphi 0, %s22
      %s26 = sphi 0, %s25
      %s42 = sphi 0, %s26
      %s46 = sphi 0, %s46
      %s48 = sphi 0, %s46
      %s49 = sphi 0, %s48
      %s63 = sphi 0, %s49
      %s67 = sphi 0, %s67
      %s69 = sphi 0, %s67
      %s70 = sphi 0, %s69
      %s84 = sphi 0, %s70
      %s90 = sphi 0, %s92
      %s93 = sphi 0, %s90
      %s94 = sphi 0, %s93
      %s110 = sphi 0, %s94
    $region4: #{tpu_custom_call.1} parent=1 // loop_header_branch
      %15 = sbr.rel (%p13) target = $region8
    $region5: #{tpu_custom_call.1} parent=1 // loop_body
      %s17 = ssub.s32 %s12, 1
      %s18 = ssub.s32 %s12, 2
      %s19 = sadd.s32 %s12, 1
      %s20 = ssub.s32 %s12, %s19
      %p21 = scmp.eq.s32.totalorder %s20, 0
      %s23 = sadd.s32 %s22, 1
      %s24 = scalar_select %p21, %s22, %s23
      %p27 = pneg %p21
      %p28 = scmp.eq.s32.totalorder %s12, 1
      %p29 = por %p27, %p28
      %p30 = scmp.ne.s32.totalorder %s22, %s25
      %p31 = scmp.eq.s32.totalorder %s12, 0
      %p32 = por %p30, %p31
      %p33 = scmp.ne.s32.totalorder %s22, %s25
      %p34 = scmp.eq.s32.totalorder %s17, 1
      %p35 = por %p33, %p34
      %p36 = scmp.ne.s32.totalorder %s25, %s26
      %p37 = scmp.eq.s32.totalorder %s17, 0
      %p38 = por %p36, %p37
      %p39 = scmp.ne.s32.totalorder %s25, %s26
      %p40 = scmp.eq.s32.totalorder %s18, 1
      %p41 = por %p39, %p40
      %p43 = scmp.ne.s32.totalorder %s26, %s42
      %p44 = scmp.eq.s32.totalorder %s18, 0
      %p45 = por %p43, %p44
      %s47 = sadd.s32 %s46, 1
      %p50 = scmp.eq.s32.totalorder %s12, 1
      %p51 = scmp.ne.s32.totalorder %s46, %s48
      %p52 = scmp.eq.s32.totalorder %s12, 0
      %p53 = por %p51, %p52
      %p54 = scmp.ne.s32.totalorder %s46, %s48
      %p55 = scmp.eq.s32.totalorder %s17, 1
      %p56 = por %p54, %p55
      %p57 = scmp.ne.s32.totalorder %s48, %s49
      %p58 = scmp.eq.s32.totalorder %s17, 0
      %p59 = por %p57, %p58
      %p60 = scmp.ne.s32.totalorder %s48, %s49
      %p61 = scmp.eq.s32.totalorder %s18, 1
      %p62 = por %p60, %p61
      %p64 = scmp.ne.s32.totalorder %s49, %s63
      %p65 = scmp.eq.s32.totalorder %s18, 0
      %p66 = por %p64, %p65
      %s68 = sadd.s32 %s67, 1
      %p71 = scmp.eq.s32.totalorder %s12, 1
      %p72 = scmp.ne.s32.totalorder %s67, %s69
      %p73 = scmp.eq.s32.totalorder %s12, 0
      %p74 = por %p72, %p73
      %p75 = scmp.ne.s32.totalorder %s67, %s69
      %p76 = scmp.eq.s32.totalorder %s17, 1
      %p77 = por %p75, %p76
      %p78 = scmp.ne.s32.totalorder %s69, %s70
      %p79 = scmp.eq.s32.totalorder %s17, 0
      %p80 = por %p78, %p79
      %p81 = scmp.ne.s32.totalorder %s69, %s70
      %p82 = scmp.eq.s32.totalorder %s18, 1
      %p83 = por %p81, %p82
      %p85 = scmp.ne.s32.totalorder %s70, %s84
      %p86 = scmp.eq.s32.totalorder %s18, 0
      %p87 = por %p85, %p86
      %s88 = ssub.s32 %s12, %s19
      %p89 = scmp.eq.s32.totalorder %s88, 0
      %s91 = sadd.s32 %s90, 1
      %s92 = scalar_select %p89, %s90, %s91
      %p95 = pneg %p89
      %p96 = scmp.eq.s32.totalorder %s12, 1
      %p97 = por %p95, %p96
      %p98 = scmp.ne.s32.totalorder %s90, %s93
      %p99 = scmp.eq.s32.totalorder %s12, 0
      %p100 = por %p98, %p99
      %p101 = scmp.ne.s32.totalorder %s90, %s93
      %p102 = scmp.eq.s32.totalorder %s17, 1
      %p103 = por %p101, %p102
      %p104 = scmp.ne.s32.totalorder %s93, %s94
      %p105 = scmp.eq.s32.totalorder %s17, 0
      %p106 = por %p104, %p105
      %p107 = scmp.ne.s32.totalorder %s93, %s94
      %p108 = scmp.eq.s32.totalorder %s18, 1
      %p109 = por %p107, %p108
      %p111 = scmp.ne.s32.totalorder %s94, %s110
      %p112 = scmp.eq.s32.totalorder %s18, 0
      %p113 = por %p111, %p112
      %p114 = scmp.le.s32.totalorder 1, %s12
      %p115 = scmp.lt.s32.totalorder %s12, 3
      %p116 = pnand %p114, %p115
      %p117 = pneg %p116
      // Predicated region
      $region9: #{tpu_custom_call.1} parent=5 // pred_check
        _
      $region10: #{tpu_custom_call.1} parent=5 // pred_check_branch
        %119 = sbr.rel (%p116) target = $region12
      $region11: #{tpu_custom_call.1} parent=5 // pred_region
        %s120 = ssub.s32 %s12, 1
        // Predicated region
        $region13: #{tpu_custom_call.1} parent=11 // pred_check
          %p121 = pneg %p59
        $region14: #{tpu_custom_call.1} parent=11 // pred_check_branch
          %123 = sbr.rel (%p121) target = $region16
        $region15: #{tpu_custom_call.1} parent=11 // pred_region
          _
        $region16: #{tpu_custom_call.1} parent=11 // pred_fallthru
          _
        // Predicated region
        $region17: #{tpu_custom_call.1} parent=11 // pred_check
          %p124 = pneg %p80
        $region18: #{tpu_custom_call.1} parent=11 // pred_check_branch
          %126 = sbr.rel (%p124) target = $region20
        $region19: #{tpu_custom_call.1} parent=11 // pred_region
          _
        $region20: #{tpu_custom_call.1} parent=11 // pred_fallthru
          _
      $region12: #{tpu_custom_call.1} parent=5 // pred_fallthru
        _
      %p127 = scmp.lt.s32.totalorder %s12, 2
      // Predicated region
      $region21: #{tpu_custom_call.1} parent=5 // pred_check
        %p128 = pneg %p127
      $region22: #{tpu_custom_call.1} parent=5 // pred_check_branch
        %130 = sbr.rel (%p128) target = $region24
      $region23: #{tpu_custom_call.1} parent=5 // pred_region
        // Predicated region
        $region25: #{tpu_custom_call.1} parent=23 // pred_check
          %p131 = pneg %p32
        $region26: #{tpu_custom_call.1} parent=23 // pred_check_branch
          %133 = sbr.rel (%p131) target = $region28
        $region27: #{tpu_custom_call.1} parent=23 // pred_region
          %p134 = scmp.lt.s32.totalorder %s12, 1
          %s135 = scalar_select %p134, %s12, 1
          %s136 = smul.addr %s135, 54
          %s137 = smul.addr %s136, 8
          %s138 = scalar_lea.vmem %s0, %s137
        $region28: #{tpu_custom_call.1} parent=23 // pred_fallthru
          _
      $region24: #{tpu_custom_call.1} parent=5 // pred_fallthru
        _
      %p139 = scmp.le.s32.totalorder 1, %s12
      %p140 = scmp.lt.s32.totalorder %s12, 3
      %p141 = pnand %p139, %p140
      %p142 = pneg %p141
      // Predicated region
      $region29: #{tpu_custom_call.1} parent=5 // pred_check
        _
      $region30: #{tpu_custom_call.1} parent=5 // pred_check_branch
        %144 = sbr.rel (%p141) target = $region32
      $region31: #{tpu_custom_call.1} parent=5 // pred_region
        %s145 = ssub.s32 %s12, 1
        %p146 = scmp.lt.s32.totalorder %s17, 1
        %s147 = scalar_select %p146, %s17, 1
        %s148 = smul.addr %s147, 54
        %s149 = smul.addr %s148, 8
        %s150 = scalar_lea.vmem %s0, %s149
        %p151 = pneg %p38
        %p152 = pneg %p35
        %p153 = pneg %p59
        %p154 = pneg %p56
        %p155 = pneg %p80
        %p156 = pneg %p77
        %p157 = pneg %p106
        %p158 = pneg %p103
        %s159 = sand.u32 %s93, 1
        %s160 = scalar_lea.sflag [#allocation3], %s159
        %s161 = sand.u32 %s93, 1
        %s162 = scalar_lea.vmem [#allocation2], %s161
        %p163 = scmp.lt.s32.totalorder %s17, 1
        %s164 = scalar_select %p163, %s17, 1
        %s165 = smul.addr %s164, 54
        %s166 = smul.addr %s165, 8
        %s167 = scalar_lea.vmem %s0, %s166
        %v169 = vld [vmem:[%s167] sm:$0xff]
        %v170 = vld [vmem:[%s167 + $0x8] sm:$0xff]
        %v171 = vld [vmem:[%s167 + $0x18] sm:$0xff]
        %v172 = vld [vmem:[%s167 + $0x20] sm:$0xff]
        %v173 = vld [vmem:[%s167 + $0x30] sm:$0xff]
        %v174 = vld [vmem:[%s167 + $0x38] sm:$0xff]
        %v175 = vld [vmem:[%s167 + $0x48] sm:$0xff]
        %v176 = vld [vmem:[%s167 + $0x50] sm:$0xff]
        %v177 = vld [vmem:[%s167 + $0x60] sm:$0xff]
        %v178 = vld [vmem:[%s167 + $0x68] sm:$0xff]
        %v179 = vld [vmem:[%s167 + $0x78] sm:$0xff]
        %v180 = vld [vmem:[%s167 + $0x80] sm:$0xff]
        %v181 = vld [vmem:[%s167 + $0x90] sm:$0xff]
        %v182 = vld [vmem:[%s167 + $0x98] sm:$0xff]
        %v183 = vld [vmem:[%s167 + $0xa8] sm:$0xff]
        %v184 = vld [vmem:[%s167 + $0xb0] sm:$0xff]
        %v185 = vld [vmem:[%s167 + $0xc0] sm:$0xff]
        %v186 = vld [vmem:[%s167 + $0xc8] sm:$0xff]
        %v187 = vld [vmem:[%s167 + $0xd8] sm:$0xff]
        %v188 = vld [vmem:[%s167 + $0xe0] sm:$0xff]
        %v189 = vld [vmem:[%s167 + $0xf0] sm:$0xff]
        %v190 = vld [vmem:[%s167 + $0xf8] sm:$0xff]
        %v191 = vld [vmem:[%s167 + $0x108] sm:$0xff]
        %v192 = vld [vmem:[%s167 + $0x110] sm:$0xff]
        %v193 = vld [vmem:[%s167 + $0x120] sm:$0xff]
        %v194 = vld [vmem:[%s167 + $0x128] sm:$0xff]
        %v195 = vld [vmem:[%s167 + $0x138] sm:$0xff]
        %v196 = vld [vmem:[%s167 + $0x140] sm:$0xff]
        %v197 = vld [vmem:[%s167 + $0x150] sm:$0xff]
        %v198 = vld [vmem:[%s167 + $0x158] sm:$0xff]
        %v199 = vld [vmem:[%s167 + $0x168] sm:$0xff]
        %v200 = vld [vmem:[%s167 + $0x170] sm:$0xff]
        %v201 = vpack.c.bf16 %v170, %v169
        %v202 = vpack.c.bf16 %v172, %v171
        %v203 = vpack.c.bf16 %v174, %v173
        %v204 = vpack.c.bf16 %v176, %v175
        %v205 = vpack.c.bf16 %v178, %v177
        %v206 = vpack.c.bf16 %v180, %v179
        %v207 = vpack.c.bf16 %v182, %v181
        %v208 = vpack.c.bf16 %v184, %v183
        %v209 = vpack.c.bf16 %v186, %v185
        %v210 = vpack.c.bf16 %v188, %v187
        %v211 = vpack.c.bf16 %v190, %v189
        %v212 = vpack.c.bf16 %v192, %v191
        %v213 = vpack.c.bf16 %v194, %v193
        %v214 = vpack.c.bf16 %v196, %v195
        %v215 = vpack.c.bf16 %v198, %v197
        %v216 = vpack.c.bf16 %v200, %v199
        %v217 = vld [vmem:[%s1] sm:$0x3]
        %v218 = vld [vmem:[%s167 + $0x1] sm:$0xff]
        %v219 = vld [vmem:[%s167 + $0x9] sm:$0xff]
        %v220 = vld [vmem:[%s167 + $0x19] sm:$0xff]
        %v221 = vld [vmem:[%s167 + $0x21] sm:$0xff]
        %v222 = vld [vmem:[%s167 + $0x31] sm:$0xff]
        %v223 = vld [vmem:[%s167 + $0x39] sm:$0xff]
        %v224 = vld [vmem:[%s167 + $0x49] sm:$0xff]
        %v225 = vld [vmem:[%s167 + $0x51] sm:$0xff]
        %v226 = vld [vmem:[%s167 + $0x61] sm:$0xff]
        %v227 = vld [vmem:[%s167 + $0x69] sm:$0xff]
        %v228 = vld [vmem:[%s167 + $0x79] sm:$0xff]
        %v229 = vld [vmem:[%s167 + $0x81] sm:$0xff]
        %v230 = vld [vmem:[%s167 + $0x91] sm:$0xff]
        %v231 = vld [vmem:[%s167 + $0x99] sm:$0xff]
        %v232 = vld [vmem:[%s167 + $0xa9] sm:$0xff]
        %v233 = vld [vmem:[%s167 + $0xb1] sm:$0xff]
        %v234 = vld [vmem:[%s167 + $0xc1] sm:$0xff]
        %v235 = vld [vmem:[%s167 + $0xc9] sm:$0xff]
        %v236 = vld [vmem:[%s167 + $0xd9] sm:$0xff]
        %v237 = vld [vmem:[%s167 + $0xe1] sm:$0xff]
        %v238 = vld [vmem:[%s167 + $0xf1] sm:$0xff]
        %v239 = vld [vmem:[%s167 + $0xf9] sm:$0xff]
        %v240 = vld [vmem:[%s167 + $0x109] sm:$0xff]
        %v241 = vld [vmem:[%s167 + $0x111] sm:$0xff]
        %v242 = vld [vmem:[%s167 + $0x121] sm:$0xff]
        %v243 = vld [vmem:[%s167 + $0x129] sm:$0xff]
        %v244 = vld [vmem:[%s167 + $0x139] sm:$0xff]
        %v245 = vld [vmem:[%s167 + $0x141] sm:$0xff]
        %v246 = vld [vmem:[%s167 + $0x151] sm:$0xff]
        %v247 = vld [vmem:[%s167 + $0x159] sm:$0xff]
        %v248 = vld [vmem:[%s167 + $0x169] sm:$0xff]
        %v249 = vld [vmem:[%s167 + $0x171] sm:$0xff]
        %v250 = vpack.c.bf16 %v219, %v218
        %v251 = vpack.c.bf16 %v221, %v220
        %v252 = vpack.c.bf16 %v223, %v222
        %v253 = vpack.c.bf16 %v225, %v224
        %v254 = vpack.c.bf16 %v227, %v226
        %v255 = vpack.c.bf16 %v229, %v228
        %v256 = vpack.c.bf16 %v231, %v230
        %v257 = vpack.c.bf16 %v233, %v232
        %v258 = vpack.c.bf16 %v235, %v234
        %v259 = vpack.c.bf16 %v237, %v236
        %v260 = vpack.c.bf16 %v239, %v238
        %v261 = vpack.c.bf16 %v241, %v240
        %v262 = vpack.c.bf16 %v243, %v242
        %v263 = vpack.c.bf16 %v245, %v244
        %v264 = vpack.c.bf16 %v247, %v246
        %v265 = vpack.c.bf16 %v249, %v248
        %s266 = scalar_lea.vmem %s1, 2
        %v267 = vld [vmem:[%s266] sm:$0x3]
        %vm268 = vcmask 31744
        %v270 = vsel %vm268, %v250, 0
        %v273 = vsel %vm268, %v251, 0
        %v276 = vsel %vm268, %v252, 0
        %v279 = vsel %vm268, %v253, 0
        %v282 = vsel %vm268, %v254, 0
        %v285 = vsel %vm268, %v255, 0
        %v288 = vsel %vm268, %v256, 0
        %v291 = vsel %vm268, %v257, 0
        %v294 = vsel %vm268, %v258, 0
        %v297 = vsel %vm268, %v259, 0
        %v300 = vsel %vm268, %v260, 0
        %v303 = vsel %vm268, %v261, 0
        %v306 = vsel %vm268, %v262, 0
        %v309 = vsel %vm268, %v263, 0
        %v312 = vsel %vm268, %v264, 0
        %v315 = vsel %vm268, %v265, 0
        %vm317 = vcmask 1041408
        %v319 = vsel %vm317, %v267, 0
        %321 = vmatprep.subr.bf16.mxu0 0
        %322 = vmatpush1.bf16.msra.mxu0 %v319
        %323 = vmatprep.subr.bf16.mxu0 0
        %324 = vmatpush1.bf16.msra.mxu0 0
        %325 = vmatprep.subr.bf16.mxu0 0
        %326 = vmatpush1.bf16.msra.mxu0 0
        %327 = vmatprep.subr.bf16.mxu0 0
        %328 = vmatpush1.bf16.msra.mxu0 0
        %329 = vmatprep.subr.bf16.mxu0 0
        %330 = vmatpush1.bf16.msra.mxu0 0
        %331 = vmatprep.subr.bf16.mxu0 0
        %332 = vmatpush1.bf16.msra.mxu0 0
        %333 = vmatprep.subr.bf16.mxu0 0
        %334 = vmatpush1.bf16.msra.mxu0 0
        %335 = vmatprep.subr.bf16.mxu0 0
        %336 = vmatpush1.bf16.msra.mxu0 0
        %337 = vmatprep.subr.bf16.mxu0 0
        %338 = vmatpush1.bf16.msra.mxu0 0
        %339 = vmatprep.subr.bf16.mxu0 0
        %340 = vmatpush1.bf16.msra.mxu0 0
        %341 = vmatprep.subr.bf16.mxu0 0
        %342 = vmatpush1.bf16.msra.mxu0 0
        %343 = vmatprep.subr.bf16.mxu0 0
        %344 = vmatpush1.bf16.msra.mxu0 0
        %345 = vmatprep.subr.bf16.mxu0 0
        %346 = vmatpush1.bf16.msra.mxu0 0
        %347 = vmatprep.subr.bf16.mxu0 0
        %348 = vmatpush1.bf16.msra.mxu0 0
        %349 = vmatprep.subr.bf16.mxu0 0
        %350 = vmatpush1.bf16.msra.mxu0 0
        %351 = vmatprep.subr.bf16.mxu0 0
        %352 = vmatpush1.bf16.msra.mxu0 0
        %353 = vmatprep.mubr.bf16.mxu0 0
        %354 = vmatmul.mubr.bf16.gmra.mrb[0].mxu0 %v270
        %v355 = vpop.f32.mrb[0].mxu0
        %v356 = vadd.f32 0.0, %v355
        %v357 = vpop.f32.mrb[0].mxu0
        %v358 = vpop.f32.mrb[0].mxu0
        %v359 = vadd.f32 0.0, %v358
        %v360 = vpop.f32.mrb[0].mxu0
        %361 = vmatprep.mubr.bf16.mxu0 0
        %362 = vmatmul.mubr.bf16.gmra.mrb[0].mxu0 %v273
        %v363 = vpop.f32.mrb[0].mxu0
        %v364 = vadd.f32 0.0, %v363
        %v365 = vpop.f32.mrb[0].mxu0
        %v366 = vpop.f32.mrb[0].mxu0
        %v367 = vadd.f32 0.0, %v366
        %v368 = vpop.f32.mrb[0].mxu0
        %369 = vmatprep.mubr.bf16.mxu0 0
        %370 = vmatmul.mubr.bf16.gmra.mrb[0].mxu0 %v276
        %v371 = vpop.f32.mrb[0].mxu0
        %v372 = vadd.f32 0.0, %v371
        %v373 = vpop.f32.mrb[0].mxu0
        %v374 = vpop.f32.mrb[0].mxu0
        %v375 = vadd.f32 0.0, %v374
        %v376 = vpop.f32.mrb[0].mxu0
        %377 = vmatprep.mubr.bf16.mxu0 0
        %378 = vmatmul.mubr.bf16.gmra.mrb[0].mxu0 %v279
        %v379 = vpop.f32.mrb[0].mxu0
        %v380 = vadd.f32 0.0, %v379
        %v381 = vpop.f32.mrb[0].mxu0
        %v382 = vpop.f32.mrb[0].mxu0
        %v383 = vadd.f32 0.0, %v382
        %v384 = vpop.f32.mrb[0].mxu0
        %385 = vmatprep.mubr.bf16.mxu0 0
        %386 = vmatmul.mubr.bf16.gmra.mrb[0].mxu0 %v282
        %v387 = vpop.f32.mrb[0].mxu0
        %v388 = vadd.f32 0.0, %v387
        %v389 = vpop.f32.mrb[0].mxu0
        %v390 = vpop.f32.mrb[0].mxu0
        %v391 = vadd.f32 0.0, %v390
        %v392 = vpop.f32.mrb[0].mxu0
        %393 = vmatprep.mubr.bf16.mxu0 0
        %394 = vmatmul.mubr.bf16.gmra.mrb[0].mxu0 %v285
        %v395 = vpop.f32.mrb[0].mxu0
        %v396 = vadd.f32 0.0, %v395
        %v397 = vpop.f32.mrb[0].mxu0
        %v398 = vpop.f32.mrb[0].mxu0
        %v399 = vadd.f32 0.0, %v398
        %v400 = vpop.f32.mrb[0].mxu0
        %401 = vmatprep.mubr.bf16.mxu0 0
        %402 = vmatmul.mubr.bf16.gmra.mrb[0].mxu0 %v288
        %v403 = vpop.f32.mrb[0].mxu0
        %v404 = vadd.f32 0.0, %v403
        %v405 = vpop.f32.mrb[0].mxu0
        %v406 = vpop.f32.mrb[0].mxu0
        %v407 = vadd.f32 0.0, %v406
        %v408 = vpop.f32.mrb[0].mxu0
        %409 = vmatprep.mubr.bf16.mxu0 0
        %410 = vmatmul.mubr.bf16.gmra.mrb[0].mxu0 %v291
        %v411 = vpop.f32.mrb[0].mxu0
        %v412 = vadd.f32 0.0, %v411
        %v413 = vpop.f32.mrb[0].mxu0
        %v414 = vpop.f32.mrb[0].mxu0
        %v415 = vadd.f32 0.0, %v414
        %v416 = vpop.f32.mrb[0].mxu0
        %417 = vmatprep.mubr.bf16.mxu0 0
        %418 = vmatmul.mubr.bf16.gmra.mrb[0].mxu0 %v294
        %v419 = vpop.f32.mrb[0].mxu0
        %v420 = vadd.f32 0.0, %v419
        %v421 = vpop.f32.mrb[0].mxu0
        %v422 = vpop.f32.mrb[0].mxu0
        %v423 = vadd.f32 0.0, %v422
        %v424 = vpop.f32.mrb[0].mxu0
        %425 = vmatprep.mubr.bf16.mxu0 0
        %426 = vmatmul.mubr.bf16.gmra.mrb[0].mxu0 %v297
        %v427 = vpop.f32.mrb[0].mxu0
        %v428 = vadd.f32 0.0, %v427
        %v429 = vpop.f32.mrb[0].mxu0
        %v430 = vpop.f32.mrb[0].mxu0
        %v431 = vadd.f32 0.0, %v430
        %v432 = vpop.f32.mrb[0].mxu0
        %433 = vmatprep.mubr.bf16.mxu0 0
        %434 = vmatmul.mubr.bf16.gmra.mrb[0].mxu0 %v300
        %v435 = vpop.f32.mrb[0].mxu0
        %v436 = vadd.f32 0.0, %v435
        %v437 = vpop.f32.mrb[0].mxu0
        %v438 = vpop.f32.mrb[0].mxu0
        %v439 = vadd.f32 0.0, %v438
        %v440 = vpop.f32.mrb[0].mxu0
        %441 = vmatprep.mubr.bf16.mxu0 0
        %442 = vmatmul.mubr.bf16.gmra.mrb[0].mxu0 %v303
        %v443 = vpop.f32.mrb[0].mxu0
        %v444 = vadd.f32 0.0, %v443
        %v445 = vpop.f32.mrb[0].mxu0
        %v446 = vpop.f32.mrb[0].mxu0
        %v447 = vadd.f32 0.0, %v446
        %v448 = vpop.f32.mrb[0].mxu0
        %449 = vmatprep.mubr.bf16.mxu0 0
        %450 = vmatmul.mubr.bf16.gmra.mrb[0].mxu0 %v306
        %v451 = vpop.f32.mrb[0].mxu0
        %v452 = vadd.f32 0.0, %v451
        %v453 = vpop.f32.mrb[0].mxu0
        %v454 = vpop.f32.mrb[0].mxu0
        %v455 = vadd.f32 0.0, %v454
        %v456 = vpop.f32.mrb[0].mxu0
        %457 = vmatprep.mubr.bf16.mxu0 0
        %458 = vmatmul.mubr.bf16.gmra.mrb[0].mxu0 %v309
        %v459 = vpop.f32.mrb[0].mxu0
        %v460 = vadd.f32 0.0, %v459
        %v461 = vpop.f32.mrb[0].mxu0
        %v462 = vpop.f32.mrb[0].mxu0
        %v463 = vadd.f32 0.0, %v462
        %v464 = vpop.f32.mrb[0].mxu0
        %465 = vmatprep.mubr.bf16.mxu0 0
        %466 = vmatmul.mubr.bf16.gmra.mrb[0].mxu0 %v312
        %v467 = vpop.f32.mrb[0].mxu0
        %v468 = vadd.f32 0.0, %v467
        %v469 = vpop.f32.mrb[0].mxu0
        %v470 = vpop.f32.mrb[0].mxu0
        %v471 = vadd.f32 0.0, %v470
        %v472 = vpop.f32.mrb[0].mxu0
        %473 = vmatprep.mubr.bf16.mxu0 0
        %474 = vmatmul.mubr.bf16.gmra.mrb[0].mxu0 %v315
        %v475 = vpop.f32.mrb[0].mxu0
        %v476 = vadd.f32 0.0, %v475
        %v477 = vpop.f32.mrb[0].mxu0
        %v478 = vpop.f32.mrb[0].mxu0
        %v479 = vadd.f32 0.0, %v478
        %v480 = vpop.f32.mrb[0].mxu0
        %481 = vdwg.mxu0
        %v483 = vsel %vm268, %v201, 0
        %v486 = vsel %vm268, %v202, 0
        %v489 = vsel %vm268, %v203, 0
        %v492 = vsel %vm268, %v204, 0
        %v495 = vsel %vm268, %v205, 0
        %v498 = vsel %vm268, %v206, 0
        %v501 = vsel %vm268, %v207, 0
        %v504 = vsel %vm268, %v208, 0
        %v507 = vsel %vm268, %v209, 0
        %v510 = vsel %vm268, %v210, 0
        %v513 = vsel %vm268, %v211, 0
        %v516 = vsel %vm268, %v212, 0
        %v519 = vsel %vm268, %v213, 0
        %v522 = vsel %vm268, %v214, 0
        %v525 = vsel %vm268, %v215, 0
        %v528 = vsel %vm268, %v216, 0
        %v531 = vsel %vm317, %v217, 0
        %533 = vmatprep.subr.bf16.mxu0 0
        %534 = vmatpush1.bf16.msra.mxu0 %v531
        %535 = vmatprep.subr.bf16.mxu0 0
        %536 = vmatpush1.bf16.msra.mxu0 0
        %537 = vmatprep.subr.bf16.mxu0 0
        %538 = vmatpush1.bf16.msra.mxu0 0
        %539 = vmatprep.subr.bf16.mxu0 0
        %540 = vmatpush1.bf16.msra.mxu0 0
        %541 = vmatprep.subr.bf16.mxu0 0
        %542 = vmatpush1.bf16.msra.mxu0 0
        %543 = vmatprep.subr.bf16.mxu0 0
        %544 = vmatpush1.bf16.msra.mxu0 0
        %545 = vmatprep.subr.bf16.mxu0 0
        %546 = vmatpush1.bf16.msra.mxu0 0
        %547 = vmatprep.subr.bf16.mxu0 0
        %548 = vmatpush1.bf16.msra.mxu0 0
        %549 = vmatprep.subr.bf16.mxu0 0
        %550 = vmatpush1.bf16.msra.mxu0 0
        %551 = vmatprep.subr.bf16.mxu0 0
        %552 = vmatpush1.bf16.msra.mxu0 0
        %553 = vmatprep.subr.bf16.mxu0 0
        %554 = vmatpush1.bf16.msra.mxu0 0
        %555 = vmatprep.subr.bf16.mxu0 0
        %556 = vmatpush1.bf16.msra.mxu0 0
        %557 = vmatprep.subr.bf16.mxu0 0
        %558 = vmatpush1.bf16.msra.mxu0 0
        %559 = vmatprep.subr.bf16.mxu0 0
        %560 = vmatpush1.bf16.msra.mxu0 0
        %561 = vmatprep.subr.bf16.mxu0 0
        %562 = vmatpush1.bf16.msra.mxu0 0
        %563 = vmatprep.subr.bf16.mxu0 0
        %564 = vmatpush1.bf16.msra.mxu0 0
        %565 = vmatprep.mubr.bf16.mxu0 0
        %566 = vmatmul.mubr.bf16.gmra.mrb[0].mxu0 %v483
        %v567 = vpop.f32.mrb[0].mxu0
        %v568 = vadd.f32 %v356, %v567
        %v569 = vpop.f32.mrb[0].mxu0
        %v570 = vpop.f32.mrb[0].mxu0
        %v571 = vadd.f32 %v359, %v570
        %v572 = vpop.f32.mrb[0].mxu0
        %573 = vmatprep.mubr.bf16.mxu0 0
        %574 = vmatmul.mubr.bf16.gmra.mrb[0].mxu0 %v486
        %v575 = vpop.f32.mrb[0].mxu0
        %v576 = vadd.f32 %v364, %v575
        %v577 = vpop.f32.mrb[0].mxu0
        %v578 = vpop.f32.mrb[0].mxu0
        %v579 = vadd.f32 %v367, %v578
        %v580 = vpop.f32.mrb[0].mxu0
        %581 = vmatprep.mubr.bf16.mxu0 0
        %582 = vmatmul.mubr.bf16.gmra.mrb[0].mxu0 %v489
        %v583 = vpop.f32.mrb[0].mxu0
        %v584 = vadd.f32 %v372, %v583
        %v585 = vpop.f32.mrb[0].mxu0
        %v586 = vpop.f32.mrb[0].mxu0
        %v587 = vadd.f32 %v375, %v586
        %v588 = vpop.f32.mrb[0].mxu0
        %589 = vmatprep.mubr.bf16.mxu0 0
        %590 = vmatmul.mubr.bf16.gmra.mrb[0].mxu0 %v492
        %v591 = vpop.f32.mrb[0].mxu0
        %v592 = vadd.f32 %v380, %v591
        %v593 = vpop.f32.mrb[0].mxu0
        %v594 = vpop.f32.mrb[0].mxu0
        %v595 = vadd.f32 %v383, %v594
        %v596 = vpop.f32.mrb[0].mxu0
        %597 = vmatprep.mubr.bf16.mxu0 0
        %598 = vmatmul.mubr.bf16.gmra.mrb[0].mxu0 %v495
        %v599 = vpop.f32.mrb[0].mxu0
        %v600 = vadd.f32 %v388, %v599
        %v601 = vpop.f32.mrb[0].mxu0
        %v602 = vpop.f32.mrb[0].mxu0
        %v603 = vadd.f32 %v391, %v602
        %v604 = vpop.f32.mrb[0].mxu0
        %605 = vmatprep.mubr.bf16.mxu0 0
        %606 = vmatmul.mubr.bf16.gmra.mrb[0].mxu0 %v498
        %v607 = vpop.f32.mrb[0].mxu0
        %v608 = vadd.f32 %v396, %v607
        %v609 = vpop.f32.mrb[0].mxu0
        %v610 = vpop.f32.mrb[0].mxu0
        %v611 = vadd.f32 %v399, %v610
        %v612 = vpop.f32.mrb[0].mxu0
        %613 = vmatprep.mubr.bf16.mxu0 0
        %614 = vmatmul.mubr.bf16.gmra.mrb[0].mxu0 %v501
        %v615 = vpop.f32.mrb[0].mxu0
        %v616 = vadd.f32 %v404, %v615
        %v617 = vpop.f32.mrb[0].mxu0
        %v618 = vpop.f32.mrb[0].mxu0
        %v619 = vadd.f32 %v407, %v618
        %v620 = vpop.f32.mrb[0].mxu0
        %621 = vmatprep.mubr.bf16.mxu0 0
        %622 = vmatmul.mubr.bf16.gmra.mrb[0].mxu0 %v504
        %v623 = vpop.f32.mrb[0].mxu0
        %v624 = vadd.f32 %v412, %v623
        %v625 = vpop.f32.mrb[0].mxu0
        %v626 = vpop.f32.mrb[0].mxu0
        %v627 = vadd.f32 %v415, %v626
        %v628 = vpop.f32.mrb[0].mxu0
        %629 = vmatprep.mubr.bf16.mxu0 0
        %630 = vmatmul.mubr.bf16.gmra.mrb[0].mxu0 %v507
        %v631 = vpop.f32.mrb[0].mxu0
        %v632 = vadd.f32 %v420, %v631
        %v633 = vpop.f32.mrb[0].mxu0
        %v634 = vpop.f32.mrb[0].mxu0
        %v635 = vadd.f32 %v423, %v634
        %v636 = vpop.f32.mrb[0].mxu0
        %637 = vmatprep.mubr.bf16.mxu0 0
        %638 = vmatmul.mubr.bf16.gmra.mrb[0].mxu0 %v510
        %v639 = vpop.f32.mrb[0].mxu0
        %v640 = vadd.f32 %v428, %v639
        %v641 = vpop.f32.mrb[0].mxu0
        %v642 = vpop.f32.mrb[0].mxu0
        %v643 = vadd.f32 %v431, %v642
        %v644 = vpop.f32.mrb[0].mxu0
        %645 = vmatprep.mubr.bf16.mxu0 0
        %646 = vmatmul.mubr.bf16.gmra.mrb[0].mxu0 %v513
        %v647 = vpop.f32.mrb[0].mxu0
        %v648 = vadd.f32 %v436, %v647
        %v649 = vpop.f32.mrb[0].mxu0
        %v650 = vpop.f32.mrb[0].mxu0
        %v651 = vadd.f32 %v439, %v650
        %v652 = vpop.f32.mrb[0].mxu0
        %653 = vmatprep.mubr.bf16.mxu0 0
        %654 = vmatmul.mubr.bf16.gmra.mrb[0].mxu0 %v516
        %v655 = vpop.f32.mrb[0].mxu0
        %v656 = vadd.f32 %v444, %v655
        %v657 = vpop.f32.mrb[0].mxu0
        %v658 = vpop.f32.mrb[0].mxu0
        %v659 = vadd.f32 %v447, %v658
        %v660 = vpop.f32.mrb[0].mxu0
        %661 = vmatprep.mubr.bf16.mxu0 0
        %662 = vmatmul.mubr.bf16.gmra.mrb[0].mxu0 %v519
        %v663 = vpop.f32.mrb[0].mxu0
        %v664 = vadd.f32 %v452, %v663
        %v665 = vpop.f32.mrb[0].mxu0
        %v666 = vpop.f32.mrb[0].mxu0
        %v667 = vadd.f32 %v455, %v666
        %v668 = vpop.f32.mrb[0].mxu0
        %669 = vmatprep.mubr.bf16.mxu0 0
        %670 = vmatmul.mubr.bf16.gmra.mrb[0].mxu0 %v522
        %v671 = vpop.f32.mrb[0].mxu0
        %v672 = vadd.f32 %v460, %v671
        %v673 = vpop.f32.mrb[0].mxu0
        %v674 = vpop.f32.mrb[0].mxu0
        %v675 = vadd.f32 %v463, %v674
        %v676 = vpop.f32.mrb[0].mxu0
        %677 = vmatprep.mubr.bf16.mxu0 0
        %678 = vmatmul.mubr.bf16.gmra.mrb[0].mxu0 %v525
        %v679 = vpop.f32.mrb[0].mxu0
        %v680 = vadd.f32 %v468, %v679
        %v681 = vpop.f32.mrb[0].mxu0
        %v682 = vpop.f32.mrb[0].mxu0
        %v683 = vadd.f32 %v471, %v682
        %v684 = vpop.f32.mrb[0].mxu0
        %685 = vmatprep.mubr.bf16.mxu0 0
        %686 = vmatmul.mubr.bf16.gmra.mrb[0].mxu0 %v528
        %v687 = vpop.f32.mrb[0].mxu0
        %v688 = vadd.f32 %v476, %v687
        %v689 = vpop.f32.mrb[0].mxu0
        %v690 = vpop.f32.mrb[0].mxu0
        %v691 = vadd.f32 %v479, %v690
        %v692 = vpop.f32.mrb[0].mxu0
        %693 = vdwg.mxu0
        %v694 = vld [vmem:[%s167 + $0x2] sm:$0xff]
        %v695 = vld [vmem:[%s167 + $0xa] sm:$0xff]
        %v696 = vld [vmem:[%s167 + $0x1a] sm:$0xff]
        %v697 = vld [vmem:[%s167 + $0x22] sm:$0xff]
        %v698 = vld [vmem:[%s167 + $0x32] sm:$0xff]
        %v699 = vld [vmem:[%s167 + $0x3a] sm:$0xff]
        %v700 = vld [vmem:[%s167 + $0x4a] sm:$0xff]
        %v701 = vld [vmem:[%s167 + $0x52] sm:$0xff]
        %v702 = vld [vmem:[%s167 + $0x62] sm:$0xff]
        %v703 = vld [vmem:[%s167 + $0x6a] sm:$0xff]
        %v704 = vld [vmem:[%s167 + $0x7a] sm:$0xff]
        %v705 = vld [vmem:[%s167 + $0x82] sm:$0xff]
        %v706 = vld [vmem:[%s167 + $0x92] sm:$0xff]
        %v707 = vld [vmem:[%s167 + $0x9a] sm:$0xff]
        %v708 = vld [vmem:[%s167 + $0xaa] sm:$0xff]
        %v709 = vld [vmem:[%s167 + $0xb2] sm:$0xff]
        %v710 = vld [vmem:[%s167 + $0xc2] sm:$0xff]
        %v711 = vld [vmem:[%s167 + $0xca] sm:$0xff]
        %v712 = vld [vmem:[%s167 + $0xda] sm:$0xff]
        %v713 = vld [vmem:[%s167 + $0xe2] sm:$0xff]
        %v714 = vld [vmem:[%s167 + $0xf2] sm:$0xff]
        %v715 = vld [vmem:[%s167 + $0xfa] sm:$0xff]
        %v716 = vld [vmem:[%s167 + $0x10a] sm:$0xff]
        %v717 = vld [vmem:[%s167 + $0x112] sm:$0xff]
        %v718 = vld [vmem:[%s167 + $0x122] sm:$0xff]
        %v719 = vld [vmem:[%s167 + $0x12a] sm:$0xff]
        %v720 = vld [vmem:[%s167 + $0x13a] sm:$0xff]
        %v721 = vld [vmem:[%s167 + $0x142] sm:$0xff]
        %v722 = vld [vmem:[%s167 + $0x152] sm:$0xff]
        %v723 = vld [vmem:[%s167 + $0x15a] sm:$0xff]
        %v724 = vld [vmem:[%s167 + $0x16a] sm:$0xff]
        %v725 = vld [vmem:[%s167 + $0x172] sm:$0xff]
        %v726 = vpack.c.bf16 %v695, %v694
        %v727 = vpack.c.bf16 %v697, %v696
        %v728 = vpack.c.bf16 %v699, %v698
        %v729 = vpack.c.bf16 %v701, %v700
        %v730 = vpack.c.bf16 %v703, %v702
        %v731 = vpack.c.bf16 %v705, %v704
        %v732 = vpack.c.bf16 %v707, %v706
        %v733 = vpack.c.bf16 %v709, %v708
        %v734 = vpack.c.bf16 %v711, %v710
        %v735 = vpack.c.bf16 %v713, %v712
        %v736 = vpack.c.bf16 %v715, %v714
        %v737 = vpack.c.bf16 %v717, %v716
        %v738 = vpack.c.bf16 %v719, %v718
        %v739 = vpack.c.bf16 %v721, %v720
        %v740 = vpack.c.bf16 %v723, %v722
        %v741 = vpack.c.bf16 %v725, %v724
        %s742 = scalar_lea.vmem %s1, 4
        %v743 = vld [vmem:[%s742] sm:$0x3]
        %v745 = vsel %vm268, %v726, 0
        %v748 = vsel %vm268, %v727, 0
        %v751 = vsel %vm268, %v728, 0
        %v754 = vsel %vm268, %v729, 0
        %v757 = vsel %vm268, %v730, 0
        %v760 = vsel %vm268, %v731, 0
        %v763 = vsel %vm268, %v732, 0
        %v766 = vsel %vm268, %v733, 0
        %v769 = vsel %vm268, %v734, 0
        %v772 = vsel %vm268, %v735, 0
        %v775 = vsel %vm268, %v736, 0
        %v778 = vsel %vm268, %v737, 0
        %v781 = vsel %vm268, %v738, 0
        %v784 = vsel %vm268, %v739, 0
        %v787 = vsel %vm268, %v740, 0
        %v790 = vsel %vm268, %v741, 0
        %v793 = vsel %vm317, %v743, 0
        %795 = vmatprep.subr.bf16.mxu0 0
        %796 = vmatpush1.bf16.msra.mxu0 %v793
        %797 = vmatprep.subr.bf16.mxu0 0
        %798 = vmatpush1.bf16.msra.mxu0 0
        %799 = vmatprep.subr.bf16.mxu0 0
        %800 = vmatpush1.bf16.msra.mxu0 0
        %801 = vmatprep.subr.bf16.mxu0 0
        %802 = vmatpush1.bf16.msra.mxu0 0
        %803 = vmatprep.subr.bf16.mxu0 0
        %804 = vmatpush1.bf16.msra.mxu0 0
        %805 = vmatprep.subr.bf16.mxu0 0
        %806 = vmatpush1.bf16.msra.mxu0 0
        %807 = vmatprep.subr.bf16.mxu0 0
        %808 = vmatpush1.bf16.msra.mxu0 0
        %809 = vmatprep.subr.bf16.mxu0 0
        %810 = vmatpush1.bf16.msra.mxu0 0
        %811 = vmatprep.subr.bf16.mxu0 0
        %812 = vmatpush1.bf16.msra.mxu0 0
        %813 = vmatprep.subr.bf16.mxu0 0
        %814 = vmatpush1.bf16.msra.mxu0 0
        %815 = vmatprep.subr.bf16.mxu0 0
        %816 = vmatpush1.bf16.msra.mxu0 0
        %817 = vmatprep.subr.bf16.mxu0 0
        %818 = vmatpush1.bf16.msra.mxu0 0
        %819 = vmatprep.subr.bf16.mxu0 0
        %820 = vmatpush1.bf16.msra.mxu0 0
        %821 = vmatprep.subr.bf16.mxu0 0
        %822 = vmatpush1.bf16.msra.mxu0 0
        %823 = vmatprep.subr.bf16.mxu0 0
        %824 = vmatpush1.bf16.msra.mxu0 0
        %825 = vmatprep.subr.bf16.mxu0 0
        %826 = vmatpush1.bf16.msra.mxu0 0
        %827 = vmatprep.mubr.bf16.mxu0 0
        %828 = vmatmul.mubr.bf16.gmra.mrb[0].mxu0 %v745
        %v829 = vpop.f32.mrb[0].mxu0
        %v830 = vadd.f32 0.0, %v829
        %v831 = vpop.f32.mrb[0].mxu0
        %v832 = vpop.f32.mrb[0].mxu0
        %v833 = vadd.f32 0.0, %v832
        %v834 = vpop.f32.mrb[0].mxu0
        %835 = vmatprep.mubr.bf16.mxu0 0
        %836 = vmatmul.mubr.bf16.gmra.mrb[0].mxu0 %v748
        %v837 = vpop.f32.mrb[0].mxu0
        %v838 = vadd.f32 0.0, %v837
        %v839 = vpop.f32.mrb[0].mxu0
        %v840 = vpop.f32.mrb[0].mxu0
        %v841 = vadd.f32 0.0, %v840
        %v842 = vpop.f32.mrb[0].mxu0
        %843 = vmatprep.mubr.bf16.mxu0 0
        %844 = vmatmul.mubr.bf16.gmra.mrb[0].mxu0 %v751
        %v845 = vpop.f32.mrb[0].mxu0
        %v846 = vadd.f32 0.0, %v845
        %v847 = vpop.f32.mrb[0].mxu0
        %v848 = vpop.f32.mrb[0].mxu0
        %v849 = vadd.f32 0.0, %v848
        %v850 = vpop.f32.mrb[0].mxu0
        %851 = vmatprep.mubr.bf16.mxu0 0
        %852 = vmatmul.mubr.bf16.gmra.mrb[0].mxu0 %v754
        %v853 = vpop.f32.mrb[0].mxu0
        %v854 = vadd.f32 0.0, %v853
        %v855 = vpop.f32.mrb[0].mxu0
        %v856 = vpop.f32.mrb[0].mxu0
        %v857 = vadd.f32 0.0, %v856
        %v858 = vpop.f32.mrb[0].mxu0
        %859 = vmatprep.mubr.bf16.mxu0 0
        %860 = vmatmul.mubr.bf16.gmra.mrb[0].mxu0 %v757
        %v861 = vpop.f32.mrb[0].mxu0
        %v862 = vadd.f32 0.0, %v861
        %v863 = vpop.f32.mrb[0].mxu0
        %v864 = vpop.f32.mrb[0].mxu0
        %v865 = vadd.f32 0.0, %v864
        %v866 = vpop.f32.mrb[0].mxu0
        %867 = vmatprep.mubr.bf16.mxu0 0
        %868 = vmatmul.mubr.bf16.gmra.mrb[0].mxu0 %v760
        %v869 = vpop.f32.mrb[0].mxu0
        %v870 = vadd.f32 0.0, %v869
        %v871 = vpop.f32.mrb[0].mxu0
        %v872 = vpop.f32.mrb[0].mxu0
        %v873 = vadd.f32 0.0, %v872
        %v874 = vpop.f32.mrb[0].mxu0
        %875 = vmatprep.mubr.bf16.mxu0 0
        %876 = vmatmul.mubr.bf16.gmra.mrb[0].mxu0 %v763
        %v877 = vpop.f32.mrb[0].mxu0
        %v878 = vadd.f32 0.0, %v877
        %v879 = vpop.f32.mrb[0].mxu0
        %v880 = vpop.f32.mrb[0].mxu0
        %v881 = vadd.f32 0.0, %v880
        %v882 = vpop.f32.mrb[0].mxu0
        %883 = vmatprep.mubr.bf16.mxu0 0
        %884 = vmatmul.mubr.bf16.gmra.mrb[0].mxu0 %v766
        %v885 = vpop.f32.mrb[0].mxu0
        %v886 = vadd.f32 0.0, %v885
        %v887 = vpop.f32.mrb[0].mxu0
        %v888 = vpop.f32.mrb[0].mxu0
        %v889 = vadd.f32 0.0, %v888
        %v890 = vpop.f32.mrb[0].mxu0
        %891 = vmatprep.mubr.bf16.mxu0 0
        %892 = vmatmul.mubr.bf16.gmra.mrb[0].mxu0 %v769
        %v893 = vpop.f32.mrb[0].mxu0
        %v894 = vadd.f32 0.0, %v893
        %v895 = vpop.f32.mrb[0].mxu0
        %v896 = vpop.f32.mrb[0].mxu0
        %v897 = vadd.f32 0.0, %v896
        %v898 = vpop.f32.mrb[0].mxu0
        %899 = vmatprep.mubr.bf16.mxu0 0
        %900 = vmatmul.mubr.bf16.gmra.mrb[0].mxu0 %v772
        %v901 = vpop.f32.mrb[0].mxu0
        %v902 = vadd.f32 0.0, %v901
        %v903 = vpop.f32.mrb[0].mxu0
        %v904 = vpop.f32.mrb[0].mxu0
        %v905 = vadd.f32 0.0, %v904
        %v906 = vpop.f32.mrb[0].mxu0
        %907 = vmatprep.mubr.bf16.mxu0 0
        %908 = vmatmul.mubr.bf16.gmra.mrb[0].mxu0 %v775
        %v909 = vpop.f32.mrb[0].mxu0
        %v910 = vadd.f32 0.0, %v909
        %v911 = vpop.f32.mrb[0].mxu0
        %v912 = vpop.f32.mrb[0].mxu0
        %v913 = vadd.f32 0.0, %v912
        %v914 = vpop.f32.mrb[0].mxu0
        %915 = vmatprep.mubr.bf16.mxu0 0
        %916 = vmatmul.mubr.bf16.gmra.mrb[0].mxu0 %v778
        %v917 = vpop.f32.mrb[0].mxu0
        %v918 = vadd.f32 0.0, %v917
        %v919 = vpop.f32.mrb[0].mxu0
        %v920 = vpop.f32.mrb[0].mxu0
        %v921 = vadd.f32 0.0, %v920
        %v922 = vpop.f32.mrb[0].mxu0
        %923 = vmatprep.mubr.bf16.mxu0 0
        %924 = vmatmul.mubr.bf16.gmra.mrb[0].mxu0 %v781
        %v925 = vpop.f32.mrb[0].mxu0
        %v926 = vadd.f32 0.0, %v925
        %v927 = vpop.f32.mrb[0].mxu0
        %v928 = vpop.f32.mrb[0].mxu0
        %v929 = vadd.f32 0.0, %v928
        %v930 = vpop.f32.mrb[0].mxu0
        %931 = vmatprep.mubr.bf16.mxu0 0
        %932 = vmatmul.mubr.bf16.gmra.mrb[0].mxu0 %v784
        %v933 = vpop.f32.mrb[0].mxu0
        %v934 = vadd.f32 0.0, %v933
        %v935 = vpop.f32.mrb[0].mxu0
        %v936 = vpop.f32.mrb[0].mxu0
        %v937 = vadd.f32 0.0, %v936
        %v938 = vpop.f32.mrb[0].mxu0
        %939 = vmatprep.mubr.bf16.mxu0 0
        %940 = vmatmul.mubr.bf16.gmra.mrb[0].mxu0 %v787
        %v941 = vpop.f32.mrb[0].mxu0
        %v942 = vadd.f32 0.0, %v941
        %v943 = vpop.f32.mrb[0].mxu0
        %v944 = vpop.f32.mrb[0].mxu0
        %v945 = vadd.f32 0.0, %v944
        %v946 = vpop.f32.mrb[0].mxu0
        %947 = vmatprep.mubr.bf16.mxu0 0
        %948 = vmatmul.mubr.bf16.gmra.mrb[0].mxu0 %v790
        %v949 = vpop.f32.mrb[0].mxu0
        %v950 = vadd.f32 0.0, %v949
        %v951 = vpop.f32.mrb[0].mxu0
        %v952 = vpop.f32.mrb[0].mxu0
        %v953 = vadd.f32 0.0, %v952
        %v954 = vpop.f32.mrb[0].mxu0
        %955 = vdwg.mxu0
        %v956 = vadd.f32 %v568, %v830
        %v957 = vadd.f32 %v571, %v833
        %v958 = vadd.f32 %v576, %v838
        %v959 = vadd.f32 %v579, %v841
        %v960 = vadd.f32 %v584, %v846
        %v961 = vadd.f32 %v587, %v849
        %v962 = vadd.f32 %v592, %v854
        %v963 = vadd.f32 %v595, %v857
        %v964 = vadd.f32 %v600, %v862
        %v965 = vadd.f32 %v603, %v865
        %v966 = vadd.f32 %v608, %v870
        %v967 = vadd.f32 %v611, %v873
        %v968 = vadd.f32 %v616, %v878
        %v969 = vadd.f32 %v619, %v881
        %v970 = vadd.f32 %v624, %v886
        %v971 = vadd.f32 %v627, %v889
        %v972 = vadd.f32 %v632, %v894
        %v973 = vadd.f32 %v635, %v897
        %v974 = vadd.f32 %v640, %v902
        %v975 = vadd.f32 %v643, %v905
        %v976 = vadd.f32 %v648, %v910
        %v977 = vadd.f32 %v651, %v913
        %v978 = vadd.f32 %v656, %v918
        %v979 = vadd.f32 %v659, %v921
        %v980 = vadd.f32 %v664, %v926
        %v981 = vadd.f32 %v667, %v929
        %v982 = vadd.f32 %v672, %v934
        %v983 = vadd.f32 %v675, %v937
        %v984 = vadd.f32 %v680, %v942
        %v985 = vadd.f32 %v683, %v945
        %v986 = vadd.f32 %v688, %v950
        %v987 = vadd.f32 %v691, %v953
        %s988 = scalar_lea.vmem %s167, 24
        %v989 = vld [vmem:[%s988] sm:$0xff]
        %v990 = vld [vmem:[%s988 + $0x8] sm:$0xff]
        %v991 = vld [vmem:[%s988 + $0x18] sm:$0xff]
        %v992 = vld [vmem:[%s988 + $0x20] sm:$0xff]
        %v993 = vld [vmem:[%s988 + $0x30] sm:$0xff]
        %v994 = vld [vmem:[%s988 + $0x38] sm:$0xff]
        %v995 = vld [vmem:[%s988 + $0x48] sm:$0xff]
        %v996 = vld [vmem:[%s988 + $0x50] sm:$0xff]
        %v997 = vld [vmem:[%s988 + $0x60] sm:$0xff]
        %v998 = vld [vmem:[%s988 + $0x68] sm:$0xff]
        %v999 = vld [vmem:[%s988 + $0x78] sm:$0xff]
        %v1000 = vld [vmem:[%s988 + $0x80] sm:$0xff]
        %v1001 = vld [vmem:[%s988 + $0x90] sm:$0xff]
        %v1002 = vld [vmem:[%s988 + $0x98] sm:$0xff]
        %v1003 = vld [vmem:[%s988 + $0xa8] sm:$0xff]
        %v1004 = vld [vmem:[%s988 + $0xb0] sm:$0xff]
        %v1005 = vld [vmem:[%s988 + $0xc0] sm:$0xff]
        %v1006 = vld [vmem:[%s988 + $0xc8] sm:$0xff]
        %v1007 = vld [vmem:[%s988 + $0xd8] sm:$0xff]
        %v1008 = vld [vmem:[%s988 + $0xe0] sm:$0xff]
        %v1009 = vld [vmem:[%s988 + $0xf0] sm:$0xff]
        %v1010 = vld [vmem:[%s988 + $0xf8] sm:$0xff]
        %v1011 = vld [vmem:[%s988 + $0x108] sm:$0xff]
        %v1012 = vld [vmem:[%s988 + $0x110] sm:$0xff]
        %v1013 = vld [vmem:[%s988 + $0x120] sm:$0xff]
        %v1014 = vld [vmem:[%s988 + $0x128] sm:$0xff]
        %v1015 = vld [vmem:[%s988 + $0x138] sm:$0xff]
        %v1016 = vld [vmem:[%s988 + $0x140] sm:$0xff]
        %v1017 = vld [vmem:[%s988 + $0x150] sm:$0xff]
        %v1018 = vld [vmem:[%s988 + $0x158] sm:$0xff]
        %v1019 = vld [vmem:[%s988 + $0x168] sm:$0xff]
        %v1020 = vld [vmem:[%s988 + $0x170] sm:$0xff]
        %v1021 = vpack.c.bf16 %v990, %v989
        %v1022 = vpack.c.bf16 %v992, %v991
        %v1023 = vpack.c.bf16 %v994, %v993
        %v1024 = vpack.c.bf16 %v996, %v995
        %v1025 = vpack.c.bf16 %v998, %v997
        %v1026 = vpack.c.bf16 %v1000, %v999
        %v1027 = vpack.c.bf16 %v1002, %v1001
        %v1028 = vpack.c.bf16 %v1004, %v1003
        %v1029 = vpack.c.bf16 %v1006, %v1005
        %v1030 = vpack.c.bf16 %v1008, %v1007
        %v1031 = vpack.c.bf16 %v1010, %v1009
        %v1032 = vpack.c.bf16 %v1012, %v1011
        %v1033 = vpack.c.bf16 %v1014, %v1013
        %v1034 = vpack.c.bf16 %v1016, %v1015
        %v1035 = vpack.c.bf16 %v1018, %v1017
        %v1036 = vpack.c.bf16 %v1020, %v1019
        %s1037 = scalar_lea.vmem %s1, 6
        %v1038 = vld [vmem:[%s1037] sm:$0x3]
        %v1040 = vsel %vm268, %v1021, 0
        %v1043 = vsel %vm268, %v1022, 0
        %v1046 = vsel %vm268, %v1023, 0
        %v1049 = vsel %vm268, %v1024, 0
        %v1052 = vsel %vm268, %v1025, 0
        %v1055 = vsel %vm268, %v1026, 0
        %v1058 = vsel %vm268, %v1027, 0
        %v1061 = vsel %vm268, %v1028, 0
        %v1064 = vsel %vm268, %v1029, 0
        %v1067 = vsel %vm268, %v1030, 0
        %v1070 = vsel %vm268, %v1031, 0
        %v1073 = vsel %vm268, %v1032, 0
        %v1076 = vsel %vm268, %v1033, 0
        %v1079 = vsel %vm268, %v1034, 0
        %v1082 = vsel %vm268, %v1035, 0
        %v1085 = vsel %vm268, %v1036, 0
        %v1088 = vsel %vm317, %v1038, 0
        %1090 = vmatprep.subr.bf16.mxu0 0
        %1091 = vmatpush1.bf16.msra.mxu0 %v1088
        %1092 = vmatprep.subr.bf16.mxu0 0
        %1093 = vmatpush1.bf16.msra.mxu0 0
        %1094 = vmatprep.subr.bf16.mxu0 0
        %1095 = vmatpush1.bf16.msra.mxu0 0
        %1096 = vmatprep.subr.bf16.mxu0 0
        %1097 = vmatpush1.bf16.msra.mxu0 0
        %1098 = vmatprep.subr.bf16.mxu0 0
        %1099 = vmatpush1.bf16.msra.mxu0 0
        %1100 = vmatprep.subr.bf16.mxu0 0
        %1101 = vmatpush1.bf16.msra.mxu0 0
        %1102 = vmatprep.subr.bf16.mxu0 0
        %1103 = vmatpush1.bf16.msra.mxu0 0
        %1104 = vmatprep.subr.bf16.mxu0 0
        %1105 = vmatpush1.bf16.msra.mxu0 0
        %1106 = vmatprep.subr.bf16.mxu0 0
        %1107 = vmatpush1.bf16.msra.mxu0 0
        %1108 = vmatprep.subr.bf16.mxu0 0
        %1109 = vmatpush1.bf16.msra.mxu0 0
        %1110 = vmatprep.subr.bf16.mxu0 0
        %1111 = vmatpush1.bf16.msra.mxu0 0
        %1112 = vmatprep.subr.bf16.mxu0 0
        %1113 = vmatpush1.bf16.msra.mxu0 0
        %1114 = vmatprep.subr.bf16.mxu0 0
        %1115 = vmatpush1.bf16.msra.mxu0 0
        %1116 = vmatprep.subr.bf16.mxu0 0
        %1117 = vmatpush1.bf16.msra.mxu0 0
        %1118 = vmatprep.subr.bf16.mxu0 0
        %1119 = vmatpush1.bf16.msra.mxu0 0
        %1120 = vmatprep.subr.bf16.mxu0 0
        %1121 = vmatpush1.bf16.msra.mxu0 0
        %1122 = vmatprep.mubr.bf16.mxu0 0
        %1123 = vmatmul.mubr.bf16.gmra.mrb[0].mxu0 %v1040
        %v1124 = vpop.f32.mrb[0].mxu0
        %v1125 = vadd.f32 0.0, %v1124
        %v1126 = vpop.f32.mrb[0].mxu0
        %v1127 = vpop.f32.mrb[0].mxu0
        %v1128 = vadd.f32 0.0, %v1127
        %v1129 = vpop.f32.mrb[0].mxu0
        %1130 = vmatprep.mubr.bf16.mxu0 0
        %1131 = vmatmul.mubr.bf16.gmra.mrb[0].mxu0 %v1043
        %v1132 = vpop.f32.mrb[0].mxu0
        %v1133 = vadd.f32 0.0, %v1132
        %v1134 = vpop.f32.mrb[0].mxu0
        %v1135 = vpop.f32.mrb[0].mxu0
        %v1136 = vadd.f32 0.0, %v1135
        %v1137 = vpop.f32.mrb[0].mxu0
        %1138 = vmatprep.mubr.bf16.mxu0 0
        %1139 = vmatmul.mubr.bf16.gmra.mrb[0].mxu0 %v1046
        %v1140 = vpop.f32.mrb[0].mxu0
        %v1141 = vadd.f32 0.0, %v1140
        %v1142 = vpop.f32.mrb[0].mxu0
        %v1143 = vpop.f32.mrb[0].mxu0
        %v1144 = vadd.f32 0.0, %v1143
        %v1145 = vpop.f32.mrb[0].mxu0
        %1146 = vmatprep.mubr.bf16.mxu0 0
        %1147 = vmatmul.mubr.bf16.gmra.mrb[0].mxu0 %v1049
        %v1148 = vpop.f32.mrb[0].mxu0
        %v1149 = vadd.f32 0.0, %v1148
        %v1150 = vpop.f32.mrb[0].mxu0
        %v1151 = vpop.f32.mrb[0].mxu0
        %v1152 = vadd.f32 0.0, %v1151
        %v1153 = vpop.f32.mrb[0].mxu0
        %1154 = vmatprep.mubr.bf16.mxu0 0
        %1155 = vmatmul.mubr.bf16.gmra.mrb[0].mxu0 %v1052
        %v1156 = vpop.f32.mrb[0].mxu0
        %v1157 = vadd.f32 0.0, %v1156
        %v1158 = vpop.f32.mrb[0].mxu0
        %v1159 = vpop.f32.mrb[0].mxu0
        %v1160 = vadd.f32 0.0, %v1159
        %v1161 = vpop.f32.mrb[0].mxu0
        %1162 = vmatprep.mubr.bf16.mxu0 0
        %1163 = vmatmul.mubr.bf16.gmra.mrb[0].mxu0 %v1055
        %v1164 = vpop.f32.mrb[0].mxu0
        %v1165 = vadd.f32 0.0, %v1164
        %v1166 = vpop.f32.mrb[0].mxu0
        %v1167 = vpop.f32.mrb[0].mxu0
        %v1168 = vadd.f32 0.0, %v1167
        %v1169 = vpop.f32.mrb[0].mxu0
        %1170 = vmatprep.mubr.bf16.mxu0 0
        %1171 = vmatmul.mubr.bf16.gmra.mrb[0].mxu0 %v1058
        %v1172 = vpop.f32.mrb[0].mxu0
        %v1173 = vadd.f32 0.0, %v1172
        %v1174 = vpop.f32.mrb[0].mxu0
        %v1175 = vpop.f32.mrb[0].mxu0
        %v1176 = vadd.f32 0.0, %v1175
        %v1177 = vpop.f32.mrb[0].mxu0
        %1178 = vmatprep.mubr.bf16.mxu0 0
        %1179 = vmatmul.mubr.bf16.gmra.mrb[0].mxu0 %v1061
        %v1180 = vpop.f32.mrb[0].mxu0
        %v1181 = vadd.f32 0.0, %v1180
        %v1182 = vpop.f32.mrb[0].mxu0
        %v1183 = vpop.f32.mrb[0].mxu0
        %v1184 = vadd.f32 0.0, %v1183
        %v1185 = vpop.f32.mrb[0].mxu0
        %1186 = vmatprep.mubr.bf16.mxu0 0
        %1187 = vmatmul.mubr.bf16.gmra.mrb[0].mxu0 %v1064
        %v1188 = vpop.f32.mrb[0].mxu0
        %v1189 = vadd.f32 0.0, %v1188
        %v1190 = vpop.f32.mrb[0].mxu0
        %v1191 = vpop.f32.mrb[0].mxu0
        %v1192 = vadd.f32 0.0, %v1191
        %v1193 = vpop.f32.mrb[0].mxu0
        %1194 = vmatprep.mubr.bf16.mxu0 0
        %1195 = vmatmul.mubr.bf16.gmra.mrb[0].mxu0 %v1067
        %v1196 = vpop.f32.mrb[0].mxu0
        %v1197 = vadd.f32 0.0, %v1196
        %v1198 = vpop.f32.mrb[0].mxu0
        %v1199 = vpop.f32.mrb[0].mxu0
        %v1200 = vadd.f32 0.0, %v1199
        %v1201 = vpop.f32.mrb[0].mxu0
        %1202 = vmatprep.mubr.bf16.mxu0 0
        %1203 = vmatmul.mubr.bf16.gmra.mrb[0].mxu0 %v1070
        %v1204 = vpop.f32.mrb[0].mxu0
        %v1205 = vadd.f32 0.0, %v1204
        %v1206 = vpop.f32.mrb[0].mxu0
        %v1207 = vpop.f32.mrb[0].mxu0
        %v1208 = vadd.f32 0.0, %v1207
        %v1209 = vpop.f32.mrb[0].mxu0
        %1210 = vmatprep.mubr.bf16.mxu0 0
        %1211 = vmatmul.mubr.bf16.gmra.mrb[0].mxu0 %v1073
        %v1212 = vpop.f32.mrb[0].mxu0
        %v1213 = vadd.f32 0.0, %v1212
        %v1214 = vpop.f32.mrb[0].mxu0
        %v1215 = vpop.f32.mrb[0].mxu0
        %v1216 = vadd.f32 0.0, %v1215
        %v1217 = vpop.f32.mrb[0].mxu0
        %1218 = vmatprep.mubr.bf16.mxu0 0
        %1219 = vmatmul.mubr.bf16.gmra.mrb[0].mxu0 %v1076
        %v1220 = vpop.f32.mrb[0].mxu0
        %v1221 = vadd.f32 0.0, %v1220
        %v1222 = vpop.f32.mrb[0].mxu0
        %v1223 = vpop.f32.mrb[0].mxu0
        %v1224 = vadd.f32 0.0, %v1223
        %v1225 = vpop.f32.mrb[0].mxu0
        %1226 = vmatprep.mubr.bf16.mxu0 0
        %1227 = vmatmul.mubr.bf16.gmra.mrb[0].mxu0 %v1079
        %v1228 = vpop.f32.mrb[0].mxu0
        %v1229 = vadd.f32 0.0, %v1228
        %v1230 = vpop.f32.mrb[0].mxu0
        %v1231 = vpop.f32.mrb[0].mxu0
        %v1232 = vadd.f32 0.0, %v1231
        %v1233 = vpop.f32.mrb[0].mxu0
        %1234 = vmatprep.mubr.bf16.mxu0 0
        %1235 = vmatmul.mubr.bf16.gmra.mrb[0].mxu0 %v1082
        %v1236 = vpop.f32.mrb[0].mxu0
        %v1237 = vadd.f32 0.0, %v1236
        %v1238 = vpop.f32.mrb[0].mxu0
        %v1239 = vpop.f32.mrb[0].mxu0
        %v1240 = vadd.f32 0.0, %v1239
        %v1241 = vpop.f32.mrb[0].mxu0
        %1242 = vmatprep.mubr.bf16.mxu0 0
        %1243 = vmatmul.mubr.bf16.gmra.mrb[0].mxu0 %v1085
        %v1244 = vpop.f32.mrb[0].mxu0
        %v1245 = vadd.f32 0.0, %v1244
        %v1246 = vpop.f32.mrb[0].mxu0
        %v1247 = vpop.f32.mrb[0].mxu0
        %v1248 = vadd.f32 0.0, %v1247
        %v1249 = vpop.f32.mrb[0].mxu0
        %1250 = vdwg.mxu0
        %v1251 = vadd.f32 %v956, %v1125
        %v1252 = vadd.f32 %v957, %v1128
        %v1253 = vadd.f32 %v958, %v1133
        %v1254 = vadd.f32 %v959, %v1136
        %v1255 = vadd.f32 %v960, %v1141
        %v1256 = vadd.f32 %v961, %v1144
        %v1257 = vadd.f32 %v962, %v1149
        %v1258 = vadd.f32 %v963, %v1152
        %v1259 = vadd.f32 %v964, %v1157
        %v1260 = vadd.f32 %v965, %v1160
        %v1261 = vadd.f32 %v966, %v1165
        %v1262 = vadd.f32 %v967, %v1168
        %v1263 = vadd.f32 %v968, %v1173
        %v1264 = vadd.f32 %v969, %v1176
        %v1265 = vadd.f32 %v970, %v1181
        %v1266 = vadd.f32 %v971, %v1184
        %v1267 = vadd.f32 %v972, %v1189
        %v1268 = vadd.f32 %v973, %v1192
        %v1269 = vadd.f32 %v974, %v1197
        %v1270 = vadd.f32 %v975, %v1200
        %v1271 = vadd.f32 %v976, %v1205
        %v1272 = vadd.f32 %v977, %v1208
        %v1273 = vadd.f32 %v978, %v1213
        %v1274 = vadd.f32 %v979, %v1216
        %v1275 = vadd.f32 %v980, %v1221
        %v1276 = vadd.f32 %v981, %v1224
        %v1277 = vadd.f32 %v982, %v1229
        %v1278 = vadd.f32 %v983, %v1232
        %v1279 = vadd.f32 %v984, %v1237
        %v1280 = vadd.f32 %v985, %v1240
        %v1281 = vadd.f32 %v986, %v1245
        %v1282 = vadd.f32 %v987, %v1248
        %v1283 = vld [vmem:[%s988 + $0x1] sm:$0xff]
        %v1284 = vld [vmem:[%s988 + $0x9] sm:$0xff]
        %v1285 = vld [vmem:[%s988 + $0x19] sm:$0xff]
        %v1286 = vld [vmem:[%s988 + $0x21] sm:$0xff]
        %v1287 = vld [vmem:[%s988 + $0x31] sm:$0xff]
        %v1288 = vld [vmem:[%s988 + $0x39] sm:$0xff]
        %v1289 = vld [vmem:[%s988 + $0x49] sm:$0xff]
        %v1290 = vld [vmem:[%s988 + $0x51] sm:$0xff]
        %v1291 = vld [vmem:[%s988 + $0x61] sm:$0xff]
        %v1292 = vld [vmem:[%s988 + $0x69] sm:$0xff]
        %v1293 = vld [vmem:[%s988 + $0x79] sm:$0xff]
        %v1294 = vld [vmem:[%s988 + $0x81] sm:$0xff]
        %v1295 = vld [vmem:[%s988 + $0x91] sm:$0xff]
        %v1296 = vld [vmem:[%s988 + $0x99] sm:$0xff]
        %v1297 = vld [vmem:[%s988 + $0xa9] sm:$0xff]
        %v1298 = vld [vmem:[%s988 + $0xb1] sm:$0xff]
        %v1299 = vld [vmem:[%s988 + $0xc1] sm:$0xff]
        %v1300 = vld [vmem:[%s988 + $0xc9] sm:$0xff]
        %v1301 = vld [vmem:[%s988 + $0xd9] sm:$0xff]
        %v1302 = vld [vmem:[%s988 + $0xe1] sm:$0xff]
        %v1303 = vld [vmem:[%s988 + $0xf1] sm:$0xff]
        %v1304 = vld [vmem:[%s988 + $0xf9] sm:$0xff]
        %v1305 = vld [vmem:[%s988 + $0x109] sm:$0xff]
        %v1306 = vld [vmem:[%s988 + $0x111] sm:$0xff]
        %v1307 = vld [vmem:[%s988 + $0x121] sm:$0xff]
        %v1308 = vld [vmem:[%s988 + $0x129] sm:$0xff]
        %v1309 = vld [vmem:[%s988 + $0x139] sm:$0xff]
        %v1310 = vld [vmem:[%s988 + $0x141] sm:$0xff]
        %v1311 = vld [vmem:[%s988 + $0x151] sm:$0xff]
        %v1312 = vld [vmem:[%s988 + $0x159] sm:$0xff]
        %v1313 = vld [vmem:[%s988 + $0x169] sm:$0xff]
        %v1314 = vld [vmem:[%s988 + $0x171] sm:$0xff]
        %v1315 = vpack.c.bf16 %v1284, %v1283
        %v1316 = vpack.c.bf16 %v1286, %v1285
        %v1317 = vpack.c.bf16 %v1288, %v1287
        %v1318 = vpack.c.bf16 %v1290, %v1289
        %v1319 = vpack.c.bf16 %v1292, %v1291
        %v1320 = vpack.c.bf16 %v1294, %v1293
        %v1321 = vpack.c.bf16 %v1296, %v1295
        %v1322 = vpack.c.bf16 %v1298, %v1297
        %v1323 = vpack.c.bf16 %v1300, %v1299
        %v1324 = vpack.c.bf16 %v1302, %v1301
        %v1325 = vpack.c.bf16 %v1304, %v1303
        %v1326 = vpack.c.bf16 %v1306, %v1305
        %v1327 = vpack.c.bf16 %v1308, %v1307
        %v1328 = vpack.c.bf16 %v1310, %v1309
        %v1329 = vpack.c.bf16 %v1312, %v1311
        %v1330 = vpack.c.bf16 %v1314, %v1313
        %s1331 = scalar_lea.vmem %s1, 8
        %v1332 = vld [vmem:[%s1331] sm:$0x3]
        %v1334 = vsel %vm268, %v1315, 0
        %v1337 = vsel %vm268, %v1316, 0
        %v1340 = vsel %vm268, %v1317, 0
        %v1343 = vsel %vm268, %v1318, 0
        %v1346 = vsel %vm268, %v1319, 0
        %v1349 = vsel %vm268, %v1320, 0
        %v1352 = vsel %vm268, %v1321, 0
        %v1355 = vsel %vm268, %v1322, 0
        %v1358 = vsel %vm268, %v1323, 0
        %v1361 = vsel %vm268, %v1324, 0
        %v1364 = vsel %vm268, %v1325, 0
        %v1367 = vsel %vm268, %v1326, 0
        %v1370 = vsel %vm268, %v1327, 0
        %v1373 = vsel %vm268, %v1328, 0
        %v1376 = vsel %vm268, %v1329, 0
        %v1379 = vsel %vm268, %v1330, 0
        %v1382 = vsel %vm317, %v1332, 0
        %1384 = vmatprep.subr.bf16.mxu0 0
        %1385 = vmatpush1.bf16.msra.mxu0 %v1382
        %1386 = vmatprep.subr.bf16.mxu0 0
        %1387 = vmatpush1.bf16.msra.mxu0 0
        %1388 = vmatprep.subr.bf16.mxu0 0
        %1389 = vmatpush1.bf16.msra.mxu0 0
        %1390 = vmatprep.subr.bf16.mxu0 0
        %1391 = vmatpush1.bf16.msra.mxu0 0
        %1392 = vmatprep.subr.bf16.mxu0 0
        %1393 = vmatpush1.bf16.msra.mxu0 0
        %1394 = vmatprep.subr.bf16.mxu0 0
        %1395 = vmatpush1.bf16.msra.mxu0 0
        %1396 = vmatprep.subr.bf16.mxu0 0
        %1397 = vmatpush1.bf16.msra.mxu0 0
        %1398 = vmatprep.subr.bf16.mxu0 0
        %1399 = vmatpush1.bf16.msra.mxu0 0
        %1400 = vmatprep.subr.bf16.mxu0 0
        %1401 = vmatpush1.bf16.msra.mxu0 0
        %1402 = vmatprep.subr.bf16.mxu0 0
        %1403 = vmatpush1.bf16.msra.mxu0 0
        %1404 = vmatprep.subr.bf16.mxu0 0
        %1405 = vmatpush1.bf16.msra.mxu0 0
        %1406 = vmatprep.subr.bf16.mxu0 0
        %1407 = vmatpush1.bf16.msra.mxu0 0
        %1408 = vmatprep.subr.bf16.mxu0 0
        %1409 = vmatpush1.bf16.msra.mxu0 0
        %1410 = vmatprep.subr.bf16.mxu0 0
        %1411 = vmatpush1.bf16.msra.mxu0 0
        %1412 = vmatprep.subr.bf16.mxu0 0
        %1413 = vmatpush1.bf16.msra.mxu0 0
        %1414 = vmatprep.subr.bf16.mxu0 0
        %1415 = vmatpush1.bf16.msra.mxu0 0
        %1416 = vmatprep.mubr.bf16.mxu0 0
        %1417 = vmatmul.mubr.bf16.gmra.mrb[0].mxu0 %v1334
        %v1418 = vpop.f32.mrb[0].mxu0
        %v1419 = vadd.f32 0.0, %v1418
        %v1420 = vpop.f32.mrb[0].mxu0
        %v1421 = vpop.f32.mrb[0].mxu0
        %v1422 = vadd.f32 0.0, %v1421
        %v1423 = vpop.f32.mrb[0].mxu0
        %1424 = vmatprep.mubr.bf16.mxu0 0
        %1425 = vmatmul.mubr.bf16.gmra.mrb[0].mxu0 %v1337
        %v1426 = vpop.f32.mrb[0].mxu0
        %v1427 = vadd.f32 0.0, %v1426
        %v1428 = vpop.f32.mrb[0].mxu0
        %v1429 = vpop.f32.mrb[0].mxu0
        %v1430 = vadd.f32 0.0, %v1429
        %v1431 = vpop.f32.mrb[0].mxu0
        %1432 = vmatprep.mubr.bf16.mxu0 0
        %1433 = vmatmul.mubr.bf16.gmra.mrb[0].mxu0 %v1340
        %v1434 = vpop.f32.mrb[0].mxu0
        %v1435 = vadd.f32 0.0, %v1434
        %v1436 = vpop.f32.mrb[0].mxu0
        %v1437 = vpop.f32.mrb[0].mxu0
        %v1438 = vadd.f32 0.0, %v1437
        %v1439 = vpop.f32.mrb[0].mxu0
        %1440 = vmatprep.mubr.bf16.mxu0 0
        %1441 = vmatmul.mubr.bf16.gmra.mrb[0].mxu0 %v1343
        %v1442 = vpop.f32.mrb[0].mxu0
        %v1443 = vadd.f32 0.0, %v1442
        %v1444 = vpop.f32.mrb[0].mxu0
        %v1445 = vpop.f32.mrb[0].mxu0
        %v1446 = vadd.f32 0.0, %v1445
        %v1447 = vpop.f32.mrb[0].mxu0
        %1448 = vmatprep.mubr.bf16.mxu0 0
        %1449 = vmatmul.mubr.bf16.gmra.mrb[0].mxu0 %v1346
        %v1450 = vpop.f32.mrb[0].mxu0
        %v1451 = vadd.f32 0.0, %v1450
        %v1452 = vpop.f32.mrb[0].mxu0
        %v1453 = vpop.f32.mrb[0].mxu0
        %v1454 = vadd.f32 0.0, %v1453
        %v1455 = vpop.f32.mrb[0].mxu0
        %1456 = vmatprep.mubr.bf16.mxu0 0
        %1457 = vmatmul.mubr.bf16.gmra.mrb[0].mxu0 %v1349
        %v1458 = vpop.f32.mrb[0].mxu0
        %v1459 = vadd.f32 0.0, %v1458
        %v1460 = vpop.f32.mrb[0].mxu0
        %v1461 = vpop.f32.mrb[0].mxu0
        %v1462 = vadd.f32 0.0, %v1461
        %v1463 = vpop.f32.mrb[0].mxu0
        %1464 = vmatprep.mubr.bf16.mxu0 0
        %1465 = vmatmul.mubr.bf16.gmra.mrb[0].mxu0 %v1352
        %v1466 = vpop.f32.mrb[0].mxu0
        %v1467 = vadd.f32 0.0, %v1466
        %v1468 = vpop.f32.mrb[0].mxu0
        %v1469 = vpop.f32.mrb[0].mxu0
        %v1470 = vadd.f32 0.0, %v1469
        %v1471 = vpop.f32.mrb[0].mxu0
        %1472 = vmatprep.mubr.bf16.mxu0 0
        %1473 = vmatmul.mubr.bf16.gmra.mrb[0].mxu0 %v1355
        %v1474 = vpop.f32.mrb[0].mxu0
        %v1475 = vadd.f32 0.0, %v1474
        %v1476 = vpop.f32.mrb[0].mxu0
        %v1477 = vpop.f32.mrb[0].mxu0
        %v1478 = vadd.f32 0.0, %v1477
        %v1479 = vpop.f32.mrb[0].mxu0
        %1480 = vmatprep.mubr.bf16.mxu0 0
        %1481 = vmatmul.mubr.bf16.gmra.mrb[0].mxu0 %v1358
        %v1482 = vpop.f32.mrb[0].mxu0
        %v1483 = vadd.f32 0.0, %v1482
        %v1484 = vpop.f32.mrb[0].mxu0
        %v1485 = vpop.f32.mrb[0].mxu0
        %v1486 = vadd.f32 0.0, %v1485
        %v1487 = vpop.f32.mrb[0].mxu0
        %1488 = vmatprep.mubr.bf16.mxu0 0
        %1489 = vmatmul.mubr.bf16.gmra.mrb[0].mxu0 %v1361
        %v1490 = vpop.f32.mrb[0].mxu0
        %v1491 = vadd.f32 0.0, %v1490
        %v1492 = vpop.f32.mrb[0].mxu0
        %v1493 = vpop.f32.mrb[0].mxu0
        %v1494 = vadd.f32 0.0, %v1493
        %v1495 = vpop.f32.mrb[0].mxu0
        %1496 = vmatprep.mubr.bf16.mxu0 0
        %1497 = vmatmul.mubr.bf16.gmra.mrb[0].mxu0 %v1364
        %v1498 = vpop.f32.mrb[0].mxu0
        %v1499 = vadd.f32 0.0, %v1498
        %v1500 = vpop.f32.mrb[0].mxu0
        %v1501 = vpop.f32.mrb[0].mxu0
        %v1502 = vadd.f32 0.0, %v1501
        %v1503 = vpop.f32.mrb[0].mxu0
        %1504 = vmatprep.mubr.bf16.mxu0 0
        %1505 = vmatmul.mubr.bf16.gmra.mrb[0].mxu0 %v1367
        %v1506 = vpop.f32.mrb[0].mxu0
        %v1507 = vadd.f32 0.0, %v1506
        %v1508 = vpop.f32.mrb[0].mxu0
        %v1509 = vpop.f32.mrb[0].mxu0
        %v1510 = vadd.f32 0.0, %v1509
        %v1511 = vpop.f32.mrb[0].mxu0
        %1512 = vmatprep.mubr.bf16.mxu0 0
        %1513 = vmatmul.mubr.bf16.gmra.mrb[0].mxu0 %v1370
        %v1514 = vpop.f32.mrb[0].mxu0
        %v1515 = vadd.f32 0.0, %v1514
        %v1516 = vpop.f32.mrb[0].mxu0
        %v1517 = vpop.f32.mrb[0].mxu0
        %v1518 = vadd.f32 0.0, %v1517
        %v1519 = vpop.f32.mrb[0].mxu0
        %1520 = vmatprep.mubr.bf16.mxu0 0
        %1521 = vmatmul.mubr.bf16.gmra.mrb[0].mxu0 %v1373
        %v1522 = vpop.f32.mrb[0].mxu0
        %v1523 = vadd.f32 0.0, %v1522
        %v1524 = vpop.f32.mrb[0].mxu0
        %v1525 = vpop.f32.mrb[0].mxu0
        %v1526 = vadd.f32 0.0, %v1525
        %v1527 = vpop.f32.mrb[0].mxu0
        %1528 = vmatprep.mubr.bf16.mxu0 0
        %1529 = vmatmul.mubr.bf16.gmra.mrb[0].mxu0 %v1376
        %v1530 = vpop.f32.mrb[0].mxu0
        %v1531 = vadd.f32 0.0, %v1530
        %v1532 = vpop.f32.mrb[0].mxu0
        %v1533 = vpop.f32.mrb[0].mxu0
        %v1534 = vadd.f32 0.0, %v1533
        %v1535 = vpop.f32.mrb[0].mxu0
        %1536 = vmatprep.mubr.bf16.mxu0 0
        %1537 = vmatmul.mubr.bf16.gmra.mrb[0].mxu0 %v1379
        %v1538 = vpop.f32.mrb[0].mxu0
        %v1539 = vadd.f32 0.0, %v1538
        %v1540 = vpop.f32.mrb[0].mxu0
        %v1541 = vpop.f32.mrb[0].mxu0
        %v1542 = vadd.f32 0.0, %v1541
        %v1543 = vpop.f32.mrb[0].mxu0
        %1544 = vdwg.mxu0
        %v1545 = vadd.f32 %v1251, %v1419
        %v1546 = vadd.f32 %v1252, %v1422
        %v1547 = vadd.f32 %v1253, %v1427
        %v1548 = vadd.f32 %v1254, %v1430
        %v1549 = vadd.f32 %v1255, %v1435
        %v1550 = vadd.f32 %v1256, %v1438
        %v1551 = vadd.f32 %v1257, %v1443
        %v1552 = vadd.f32 %v1258, %v1446
        %v1553 = vadd.f32 %v1259, %v1451
        %v1554 = vadd.f32 %v1260, %v1454
        %v1555 = vadd.f32 %v1261, %v1459
        %v1556 = vadd.f32 %v1262, %v1462
        %v1557 = vadd.f32 %v1263, %v1467
        %v1558 = vadd.f32 %v1264, %v1470
        %v1559 = vadd.f32 %v1265, %v1475
        %v1560 = vadd.f32 %v1266, %v1478
        %v1561 = vadd.f32 %v1267, %v1483
        %v1562 = vadd.f32 %v1268, %v1486
        %v1563 = vadd.f32 %v1269, %v1491
        %v1564 = vadd.f32 %v1270, %v1494
        %v1565 = vadd.f32 %v1271, %v1499
        %v1566 = vadd.f32 %v1272, %v1502
        %v1567 = vadd.f32 %v1273, %v1507
        %v1568 = vadd.f32 %v1274, %v1510
        %v1569 = vadd.f32 %v1275, %v1515
        %v1570 = vadd.f32 %v1276, %v1518
        %v1571 = vadd.f32 %v1277, %v1523
        %v1572 = vadd.f32 %v1278, %v1526
        %v1573 = vadd.f32 %v1279, %v1531
        %v1574 = vadd.f32 %v1280, %v1534
        %v1575 = vadd.f32 %v1281, %v1539
        %v1576 = vadd.f32 %v1282, %v1542
        %v1577 = vld [vmem:[%s988 + $0x2] sm:$0xff]
        %v1578 = vld [vmem:[%s988 + $0xa] sm:$0xff]
        %v1579 = vld [vmem:[%s988 + $0x1a] sm:$0xff]
        %v1580 = vld [vmem:[%s988 + $0x22] sm:$0xff]
        %v1581 = vld [vmem:[%s988 + $0x32] sm:$0xff]
        %v1582 = vld [vmem:[%s988 + $0x3a] sm:$0xff]
        %v1583 = vld [vmem:[%s988 + $0x4a] sm:$0xff]
        %v1584 = vld [vmem:[%s988 + $0x52] sm:$0xff]
        %v1585 = vld [vmem:[%s988 + $0x62] sm:$0xff]
        %v1586 = vld [vmem:[%s988 + $0x6a] sm:$0xff]
        %v1587 = vld [vmem:[%s988 + $0x7a] sm:$0xff]
        %v1588 = vld [vmem:[%s988 + $0x82] sm:$0xff]
        %v1589 = vld [vmem:[%s988 + $0x92] sm:$0xff]
        %v1590 = vld [vmem:[%s988 + $0x9a] sm:$0xff]
        %v1591 = vld [vmem:[%s988 + $0xaa] sm:$0xff]
        %v1592 = vld [vmem:[%s988 + $0xb2] sm:$0xff]
        %v1593 = vld [vmem:[%s988 + $0xc2] sm:$0xff]
        %v1594 = vld [vmem:[%s988 + $0xca] sm:$0xff]
        %v1595 = vld [vmem:[%s988 + $0xda] sm:$0xff]
        %v1596 = vld [vmem:[%s988 + $0xe2] sm:$0xff]
        %v1597 = vld [vmem:[%s988 + $0xf2] sm:$0xff]
        %v1598 = vld [vmem:[%s988 + $0xfa] sm:$0xff]
        %v1599 = vld [vmem:[%s988 + $0x10a] sm:$0xff]
        %v1600 = vld [vmem:[%s988 + $0x112] sm:$0xff]
        %v1601 = vld [vmem:[%s988 + $0x122] sm:$0xff]
        %v1602 = vld [vmem:[%s988 + $0x12a] sm:$0xff]
        %v1603 = vld [vmem:[%s988 + $0x13a] sm:$0xff]
        %v1604 = vld [vmem:[%s988 + $0x142] sm:$0xff]
        %v1605 = vld [vmem:[%s988 + $0x152] sm:$0xff]
        %v1606 = vld [vmem:[%s988 + $0x15a] sm:$0xff]
        %v1607 = vld [vmem:[%s988 + $0x16a] sm:$0xff]
        %v1608 = vld [vmem:[%s988 + $0x172] sm:$0xff]
        %v1609 = vpack.c.bf16 %v1578, %v1577
        %v1610 = vpack.c.bf16 %v1580, %v1579
        %v1611 = vpack.c.bf16 %v1582, %v1581
        %v1612 = vpack.c.bf16 %v1584, %v1583
        %v1613 = vpack.c.bf16 %v1586, %v1585
        %v1614 = vpack.c.bf16 %v1588, %v1587
        %v1615 = vpack.c.bf16 %v1590, %v1589
        %v1616 = vpack.c.bf16 %v1592, %v1591
        %v1617 = vpack.c.bf16 %v1594, %v1593
        %v1618 = vpack.c.bf16 %v1596, %v1595
        %v1619 = vpack.c.bf16 %v1598, %v1597
        %v1620 = vpack.c.bf16 %v1600, %v1599
        %v1621 = vpack.c.bf16 %v1602, %v1601
        %v1622 = vpack.c.bf16 %v1604, %v1603
        %v1623 = vpack.c.bf16 %v1606, %v1605
        %v1624 = vpack.c.bf16 %v1608, %v1607
        %s1625 = scalar_lea.vmem %s1, 10
        %v1626 = vld [vmem:[%s1625] sm:$0x3]
        %v1628 = vsel %vm268, %v1609, 0
        %v1631 = vsel %vm268, %v1610, 0
        %v1634 = vsel %vm268, %v1611, 0
        %v1637 = vsel %vm268, %v1612, 0
        %v1640 = vsel %vm268, %v1613, 0
        %v1643 = vsel %vm268, %v1614, 0
        %v1646 = vsel %vm268, %v1615, 0
        %v1649 = vsel %vm268, %v1616, 0
        %v1652 = vsel %vm268, %v1617, 0
        %v1655 = vsel %vm268, %v1618, 0
        %v1658 = vsel %vm268, %v1619, 0
        %v1661 = vsel %vm268, %v1620, 0
        %v1664 = vsel %vm268, %v1621, 0
        %v1667 = vsel %vm268, %v1622, 0
        %v1670 = vsel %vm268, %v1623, 0
        %v1673 = vsel %vm268, %v1624, 0
        %v1676 = vsel %vm317, %v1626, 0
        %1678 = vmatprep.subr.bf16.mxu0 0
        %1679 = vmatpush1.bf16.msra.mxu0 %v1676
        %1680 = vmatprep.subr.bf16.mxu0 0
        %1681 = vmatpush1.bf16.msra.mxu0 0
        %1682 = vmatprep.subr.bf16.mxu0 0
        %1683 = vmatpush1.bf16.msra.mxu0 0
        %1684 = vmatprep.subr.bf16.mxu0 0
        %1685 = vmatpush1.bf16.msra.mxu0 0
        %1686 = vmatprep.subr.bf16.mxu0 0
        %1687 = vmatpush1.bf16.msra.mxu0 0
        %1688 = vmatprep.subr.bf16.mxu0 0
        %1689 = vmatpush1.bf16.msra.mxu0 0
        %1690 = vmatprep.subr.bf16.mxu0 0
        %1691 = vmatpush1.bf16.msra.mxu0 0
        %1692 = vmatprep.subr.bf16.mxu0 0
        %1693 = vmatpush1.bf16.msra.mxu0 0
        %1694 = vmatprep.subr.bf16.mxu0 0
        %1695 = vmatpush1.bf16.msra.mxu0 0
        %1696 = vmatprep.subr.bf16.mxu0 0
        %1697 = vmatpush1.bf16.msra.mxu0 0
        %1698 = vmatprep.subr.bf16.mxu0 0
        %1699 = vmatpush1.bf16.msra.mxu0 0
        %1700 = vmatprep.subr.bf16.mxu0 0
        %1701 = vmatpush1.bf16.msra.mxu0 0
        %1702 = vmatprep.subr.bf16.mxu0 0
        %1703 = vmatpush1.bf16.msra.mxu0 0
        %1704 = vmatprep.subr.bf16.mxu0 0
        %1705 = vmatpush1.bf16.msra.mxu0 0
        %1706 = vmatprep.subr.bf16.mxu0 0
        %1707 = vmatpush1.bf16.msra.mxu0 0
        %1708 = vmatprep.subr.bf16.mxu0 0
        %1709 = vmatpush1.bf16.msra.mxu0 0
        %1710 = vmatprep.mubr.bf16.mxu0 0
        %1711 = vmatmul.mubr.bf16.gmra.mrb[0].mxu0 %v1628
        %v1712 = vpop.f32.mrb[0].mxu0
        %v1713 = vadd.f32 0.0, %v1712
        %v1714 = vpop.f32.mrb[0].mxu0
        %v1715 = vpop.f32.mrb[0].mxu0
        %v1716 = vadd.f32 0.0, %v1715
        %v1717 = vpop.f32.mrb[0].mxu0
        %1718 = vmatprep.mubr.bf16.mxu0 0
        %1719 = vmatmul.mubr.bf16.gmra.mrb[0].mxu0 %v1631
        %v1720 = vpop.f32.mrb[0].mxu0
        %v1721 = vadd.f32 0.0, %v1720
        %v1722 = vpop.f32.mrb[0].mxu0
        %v1723 = vpop.f32.mrb[0].mxu0
        %v1724 = vadd.f32 0.0, %v1723
        %v1725 = vpop.f32.mrb[0].mxu0
        %1726 = vmatprep.mubr.bf16.mxu0 0
        %1727 = vmatmul.mubr.bf16.gmra.mrb[0].mxu0 %v1634
        %v1728 = vpop.f32.mrb[0].mxu0
        %v1729 = vadd.f32 0.0, %v1728
        %v1730 = vpop.f32.mrb[0].mxu0
        %v1731 = vpop.f32.mrb[0].mxu0
        %v1732 = vadd.f32 0.0, %v1731
        %v1733 = vpop.f32.mrb[0].mxu0
        %1734 = vmatprep.mubr.bf16.mxu0 0
        %1735 = vmatmul.mubr.bf16.gmra.mrb[0].mxu0 %v1637
        %v1736 = vpop.f32.mrb[0].mxu0
        %v1737 = vadd.f32 0.0, %v1736
        %v1738 = vpop.f32.mrb[0].mxu0
        %v1739 = vpop.f32.mrb[0].mxu0
        %v1740 = vadd.f32 0.0, %v1739
        %v1741 = vpop.f32.mrb[0].mxu0
        %1742 = vmatprep.mubr.bf16.mxu0 0
        %1743 = vmatmul.mubr.bf16.gmra.mrb[0].mxu0 %v1640
        %v1744 = vpop.f32.mrb[0].mxu0
        %v1745 = vadd.f32 0.0, %v1744
        %v1746 = vpop.f32.mrb[0].mxu0
        %v1747 = vpop.f32.mrb[0].mxu0
        %v1748 = vadd.f32 0.0, %v1747
        %v1749 = vpop.f32.mrb[0].mxu0
        %1750 = vmatprep.mubr.bf16.mxu0 0
        %1751 = vmatmul.mubr.bf16.gmra.mrb[0].mxu0 %v1643
        %v1752 = vpop.f32.mrb[0].mxu0
        %v1753 = vadd.f32 0.0, %v1752
        %v1754 = vpop.f32.mrb[0].mxu0
        %v1755 = vpop.f32.mrb[0].mxu0
        %v1756 = vadd.f32 0.0, %v1755
        %v1757 = vpop.f32.mrb[0].mxu0
        %1758 = vmatprep.mubr.bf16.mxu0 0
        %1759 = vmatmul.mubr.bf16.gmra.mrb[0].mxu0 %v1646
        %v1760 = vpop.f32.mrb[0].mxu0
        %v1761 = vadd.f32 0.0, %v1760
        %v1762 = vpop.f32.mrb[0].mxu0
        %v1763 = vpop.f32.mrb[0].mxu0
        %v1764 = vadd.f32 0.0, %v1763
        %v1765 = vpop.f32.mrb[0].mxu0
        %1766 = vmatprep.mubr.bf16.mxu0 0
        %1767 = vmatmul.mubr.bf16.gmra.mrb[0].mxu0 %v1649
        %v1768 = vpop.f32.mrb[0].mxu0
        %v1769 = vadd.f32 0.0, %v1768
        %v1770 = vpop.f32.mrb[0].mxu0
        %v1771 = vpop.f32.mrb[0].mxu0
        %v1772 = vadd.f32 0.0, %v1771
        %v1773 = vpop.f32.mrb[0].mxu0
        %1774 = vmatprep.mubr.bf16.mxu0 0
        %1775 = vmatmul.mubr.bf16.gmra.mrb[0].mxu0 %v1652
        %v1776 = vpop.f32.mrb[0].mxu0
        %v1777 = vadd.f32 0.0, %v1776
        %v1778 = vpop.f32.mrb[0].mxu0
        %v1779 = vpop.f32.mrb[0].mxu0
        %v1780 = vadd.f32 0.0, %v1779
        %v1781 = vpop.f32.mrb[0].mxu0
        %1782 = vmatprep.mubr.bf16.mxu0 0
        %1783 = vmatmul.mubr.bf16.gmra.mrb[0].mxu0 %v1655
        %v1784 = vpop.f32.mrb[0].mxu0
        %v1785 = vadd.f32 0.0, %v1784
        %v1786 = vpop.f32.mrb[0].mxu0
        %v1787 = vpop.f32.mrb[0].mxu0
        %v1788 = vadd.f32 0.0, %v1787
        %v1789 = vpop.f32.mrb[0].mxu0
        %1790 = vmatprep.mubr.bf16.mxu0 0
        %1791 = vmatmul.mubr.bf16.gmra.mrb[0].mxu0 %v1658
        %v1792 = vpop.f32.mrb[0].mxu0
        %v1793 = vadd.f32 0.0, %v1792
        %v1794 = vpop.f32.mrb[0].mxu0
        %v1795 = vpop.f32.mrb[0].mxu0
        %v1796 = vadd.f32 0.0, %v1795
        %v1797 = vpop.f32.mrb[0].mxu0
        %1798 = vmatprep.mubr.bf16.mxu0 0
        %1799 = vmatmul.mubr.bf16.gmra.mrb[0].mxu0 %v1661
        %v1800 = vpop.f32.mrb[0].mxu0
        %v1801 = vadd.f32 0.0, %v1800
        %v1802 = vpop.f32.mrb[0].mxu0
        %v1803 = vpop.f32.mrb[0].mxu0
        %v1804 = vadd.f32 0.0, %v1803
        %v1805 = vpop.f32.mrb[0].mxu0
        %1806 = vmatprep.mubr.bf16.mxu0 0
        %1807 = vmatmul.mubr.bf16.gmra.mrb[0].mxu0 %v1664
        %v1808 = vpop.f32.mrb[0].mxu0
        %v1809 = vadd.f32 0.0, %v1808
        %v1810 = vpop.f32.mrb[0].mxu0
        %v1811 = vpop.f32.mrb[0].mxu0
        %v1812 = vadd.f32 0.0, %v1811
        %v1813 = vpop.f32.mrb[0].mxu0
        %1814 = vmatprep.mubr.bf16.mxu0 0
        %1815 = vmatmul.mubr.bf16.gmra.mrb[0].mxu0 %v1667
        %v1816 = vpop.f32.mrb[0].mxu0
        %v1817 = vadd.f32 0.0, %v1816
        %v1818 = vpop.f32.mrb[0].mxu0
        %v1819 = vpop.f32.mrb[0].mxu0
        %v1820 = vadd.f32 0.0, %v1819
        %v1821 = vpop.f32.mrb[0].mxu0
        %1822 = vmatprep.mubr.bf16.mxu0 0
        %1823 = vmatmul.mubr.bf16.gmra.mrb[0].mxu0 %v1670
        %v1824 = vpop.f32.mrb[0].mxu0
        %v1825 = vadd.f32 0.0, %v1824
        %v1826 = vpop.f32.mrb[0].mxu0
        %v1827 = vpop.f32.mrb[0].mxu0
        %v1828 = vadd.f32 0.0, %v1827
        %v1829 = vpop.f32.mrb[0].mxu0
        %1830 = vmatprep.mubr.bf16.mxu0 0
        %1831 = vmatmul.mubr.bf16.gmra.mrb[0].mxu0 %v1673
        %v1832 = vpop.f32.mrb[0].mxu0
        %v1833 = vadd.f32 0.0, %v1832
        %v1834 = vpop.f32.mrb[0].mxu0
        %v1835 = vpop.f32.mrb[0].mxu0
        %v1836 = vadd.f32 0.0, %v1835
        %v1837 = vpop.f32.mrb[0].mxu0
        %1838 = vdwg.mxu0
        %v1839 = vadd.f32 %v1545, %v1713
        %v1840 = vadd.f32 %v1546, %v1716
        %v1841 = vadd.f32 %v1547, %v1721
        %v1842 = vadd.f32 %v1548, %v1724
        %v1843 = vadd.f32 %v1549, %v1729
        %v1844 = vadd.f32 %v1550, %v1732
        %v1845 = vadd.f32 %v1551, %v1737
        %v1846 = vadd.f32 %v1552, %v1740
        %v1847 = vadd.f32 %v1553, %v1745
        %v1848 = vadd.f32 %v1554, %v1748
        %v1849 = vadd.f32 %v1555, %v1753
        %v1850 = vadd.f32 %v1556, %v1756
        %v1851 = vadd.f32 %v1557, %v1761
        %v1852 = vadd.f32 %v1558, %v1764
        %v1853 = vadd.f32 %v1559, %v1769
        %v1854 = vadd.f32 %v1560, %v1772
        %v1855 = vadd.f32 %v1561, %v1777
        %v1856 = vadd.f32 %v1562, %v1780
        %v1857 = vadd.f32 %v1563, %v1785
        %v1858 = vadd.f32 %v1564, %v1788
        %v1859 = vadd.f32 %v1565, %v1793
        %v1860 = vadd.f32 %v1566, %v1796
        %v1861 = vadd.f32 %v1567, %v1801
        %v1862 = vadd.f32 %v1568, %v1804
        %v1863 = vadd.f32 %v1569, %v1809
        %v1864 = vadd.f32 %v1570, %v1812
        %v1865 = vadd.f32 %v1571, %v1817
        %v1866 = vadd.f32 %v1572, %v1820
        %v1867 = vadd.f32 %v1573, %v1825
        %v1868 = vadd.f32 %v1574, %v1828
        %v1869 = vadd.f32 %v1575, %v1833
        %v1870 = vadd.f32 %v1576, %v1836
        %s1871 = scalar_lea.vmem %s167, 48
        %v1872 = vld [vmem:[%s1871] sm:$0xff]
        %v1873 = vld [vmem:[%s1871 + $0x8] sm:$0xff]
        %v1874 = vld [vmem:[%s1871 + $0x18] sm:$0xff]
        %v1875 = vld [vmem:[%s1871 + $0x20] sm:$0xff]
        %v1876 = vld [vmem:[%s1871 + $0x30] sm:$0xff]
        %v1877 = vld [vmem:[%s1871 + $0x38] sm:$0xff]
        %v1878 = vld [vmem:[%s1871 + $0x48] sm:$0xff]
        %v1879 = vld [vmem:[%s1871 + $0x50] sm:$0xff]
        %v1880 = vld [vmem:[%s1871 + $0x60] sm:$0xff]
        %v1881 = vld [vmem:[%s1871 + $0x68] sm:$0xff]
        %v1882 = vld [vmem:[%s1871 + $0x78] sm:$0xff]
        %v1883 = vld [vmem:[%s1871 + $0x80] sm:$0xff]
        %v1884 = vld [vmem:[%s1871 + $0x90] sm:$0xff]
        %v1885 = vld [vmem:[%s1871 + $0x98] sm:$0xff]
        %v1886 = vld [vmem:[%s1871 + $0xa8] sm:$0xff]
        %v1887 = vld [vmem:[%s1871 + $0xb0] sm:$0xff]
        %v1888 = vld [vmem:[%s1871 + $0xc0] sm:$0xff]
        %v1889 = vld [vmem:[%s1871 + $0xc8] sm:$0xff]
        %v1890 = vld [vmem:[%s1871 + $0xd8] sm:$0xff]
        %v1891 = vld [vmem:[%s1871 + $0xe0] sm:$0xff]
        %v1892 = vld [vmem:[%s1871 + $0xf0] sm:$0xff]
        %v1893 = vld [vmem:[%s1871 + $0xf8] sm:$0xff]
        %v1894 = vld [vmem:[%s1871 + $0x108] sm:$0xff]
        %v1895 = vld [vmem:[%s1871 + $0x110] sm:$0xff]
        %v1896 = vld [vmem:[%s1871 + $0x120] sm:$0xff]
        %v1897 = vld [vmem:[%s1871 + $0x128] sm:$0xff]
        %v1898 = vld [vmem:[%s1871 + $0x138] sm:$0xff]
        %v1899 = vld [vmem:[%s1871 + $0x140] sm:$0xff]
        %v1900 = vld [vmem:[%s1871 + $0x150] sm:$0xff]
        %v1901 = vld [vmem:[%s1871 + $0x158] sm:$0xff]
        %v1902 = vld [vmem:[%s1871 + $0x168] sm:$0xff]
        %v1903 = vld [vmem:[%s1871 + $0x170] sm:$0xff]
        %v1904 = vpack.c.bf16 %v1873, %v1872
        %v1905 = vpack.c.bf16 %v1875, %v1874
        %v1906 = vpack.c.bf16 %v1877, %v1876
        %v1907 = vpack.c.bf16 %v1879, %v1878
        %v1908 = vpack.c.bf16 %v1881, %v1880
        %v1909 = vpack.c.bf16 %v1883, %v1882
        %v1910 = vpack.c.bf16 %v1885, %v1884
        %v1911 = vpack.c.bf16 %v1887, %v1886
        %v1912 = vpack.c.bf16 %v1889, %v1888
        %v1913 = vpack.c.bf16 %v1891, %v1890
        %v1914 = vpack.c.bf16 %v1893, %v1892
        %v1915 = vpack.c.bf16 %v1895, %v1894
        %v1916 = vpack.c.bf16 %v1897, %v1896
        %v1917 = vpack.c.bf16 %v1899, %v1898
        %v1918 = vpack.c.bf16 %v1901, %v1900
        %v1919 = vpack.c.bf16 %v1903, %v1902
        %s1920 = scalar_lea.vmem %s1, 12
        %v1921 = vld [vmem:[%s1920] sm:$0x3]
        %v1923 = vsel %vm268, %v1904, 0
        %v1926 = vsel %vm268, %v1905, 0
        %v1929 = vsel %vm268, %v1906, 0
        %v1932 = vsel %vm268, %v1907, 0
        %v1935 = vsel %vm268, %v1908, 0
        %v1938 = vsel %vm268, %v1909, 0
        %v1941 = vsel %vm268, %v1910, 0
        %v1944 = vsel %vm268, %v1911, 0
        %v1947 = vsel %vm268, %v1912, 0
        %v1950 = vsel %vm268, %v1913, 0
        %v1953 = vsel %vm268, %v1914, 0
        %v1956 = vsel %vm268, %v1915, 0
        %v1959 = vsel %vm268, %v1916, 0
        %v1962 = vsel %vm268, %v1917, 0
        %v1965 = vsel %vm268, %v1918, 0
        %v1968 = vsel %vm268, %v1919, 0
        %v1971 = vsel %vm317, %v1921, 0
        %1973 = vmatprep.subr.bf16.mxu0 0
        %1974 = vmatpush1.bf16.msra.mxu0 %v1971
        %1975 = vmatprep.subr.bf16.mxu0 0
        %1976 = vmatpush1.bf16.msra.mxu0 0
        %1977 = vmatprep.subr.bf16.mxu0 0
        %1978 = vmatpush1.bf16.msra.mxu0 0
        %1979 = vmatprep.subr.bf16.mxu0 0
        %1980 = vmatpush1.bf16.msra.mxu0 0
        %1981 = vmatprep.subr.bf16.mxu0 0
        %1982 = vmatpush1.bf16.msra.mxu0 0
        %1983 = vmatprep.subr.bf16.mxu0 0
        %1984 = vmatpush1.bf16.msra.mxu0 0
        %1985 = vmatprep.subr.bf16.mxu0 0
        %1986 = vmatpush1.bf16.msra.mxu0 0
        %1987 = vmatprep.subr.bf16.mxu0 0
        %1988 = vmatpush1.bf16.msra.mxu0 0
        %1989 = vmatprep.subr.bf16.mxu0 0
        %1990 = vmatpush1.bf16.msra.mxu0 0
        %1991 = vmatprep.subr.bf16.mxu0 0
        %1992 = vmatpush1.bf16.msra.mxu0 0
        %1993 = vmatprep.subr.bf16.mxu0 0
        %1994 = vmatpush1.bf16.msra.mxu0 0
        %1995 = vmatprep.subr.bf16.mxu0 0
        %1996 = vmatpush1.bf16.msra.mxu0 0
        %1997 = vmatprep.subr.bf16.mxu0 0
        %1998 = vmatpush1.bf16.msra.mxu0 0
        %1999 = vmatprep.subr.bf16.mxu0 0
        %2000 = vmatpush1.bf16.msra.mxu0 0
        %2001 = vmatprep.subr.bf16.mxu0 0
        %2002 = vmatpush1.bf16.msra.mxu0 0
        %2003 = vmatprep.subr.bf16.mxu0 0
        %2004 = vmatpush1.bf16.msra.mxu0 0
        %2005 = vmatprep.mubr.bf16.mxu0 0
        %2006 = vmatmul.mubr.bf16.gmra.mrb[0].mxu0 %v1923
        %v2007 = vpop.f32.mrb[0].mxu0
        %v2008 = vadd.f32 0.0, %v2007
        %v2009 = vpop.f32.mrb[0].mxu0
        %v2010 = vpop.f32.mrb[0].mxu0
        %v2011 = vadd.f32 0.0, %v2010
        %v2012 = vpop.f32.mrb[0].mxu0
        %2013 = vmatprep.mubr.bf16.mxu0 0
        %2014 = vmatmul.mubr.bf16.gmra.mrb[0].mxu0 %v1926
        %v2015 = vpop.f32.mrb[0].mxu0
        %v2016 = vadd.f32 0.0, %v2015
        %v2017 = vpop.f32.mrb[0].mxu0
        %v2018 = vpop.f32.mrb[0].mxu0
        %v2019 = vadd.f32 0.0, %v2018
        %v2020 = vpop.f32.mrb[0].mxu0
        %2021 = vmatprep.mubr.bf16.mxu0 0
        %2022 = vmatmul.mubr.bf16.gmra.mrb[0].mxu0 %v1929
        %v2023 = vpop.f32.mrb[0].mxu0
        %v2024 = vadd.f32 0.0, %v2023
        %v2025 = vpop.f32.mrb[0].mxu0
        %v2026 = vpop.f32.mrb[0].mxu0
        %v2027 = vadd.f32 0.0, %v2026
        %v2028 = vpop.f32.mrb[0].mxu0
        %2029 = vmatprep.mubr.bf16.mxu0 0
        %2030 = vmatmul.mubr.bf16.gmra.mrb[0].mxu0 %v1932
        %v2031 = vpop.f32.mrb[0].mxu0
        %v2032 = vadd.f32 0.0, %v2031
        %v2033 = vpop.f32.mrb[0].mxu0
        %v2034 = vpop.f32.mrb[0].mxu0
        %v2035 = vadd.f32 0.0, %v2034
        %v2036 = vpop.f32.mrb[0].mxu0
        %2037 = vmatprep.mubr.bf16.mxu0 0
        %2038 = vmatmul.mubr.bf16.gmra.mrb[0].mxu0 %v1935
        %v2039 = vpop.f32.mrb[0].mxu0
        %v2040 = vadd.f32 0.0, %v2039
        %v2041 = vpop.f32.mrb[0].mxu0
        %v2042 = vpop.f32.mrb[0].mxu0
        %v2043 = vadd.f32 0.0, %v2042
        %v2044 = vpop.f32.mrb[0].mxu0
        %2045 = vmatprep.mubr.bf16.mxu0 0
        %2046 = vmatmul.mubr.bf16.gmra.mrb[0].mxu0 %v1938
        %v2047 = vpop.f32.mrb[0].mxu0
        %v2048 = vadd.f32 0.0, %v2047
        %v2049 = vpop.f32.mrb[0].mxu0
        %v2050 = vpop.f32.mrb[0].mxu0
        %v2051 = vadd.f32 0.0, %v2050
        %v2052 = vpop.f32.mrb[0].mxu0
        %2053 = vmatprep.mubr.bf16.mxu0 0
        %2054 = vmatmul.mubr.bf16.gmra.mrb[0].mxu0 %v1941
        %v2055 = vpop.f32.mrb[0].mxu0
        %v2056 = vadd.f32 0.0, %v2055
        %v2057 = vpop.f32.mrb[0].mxu0
        %v2058 = vpop.f32.mrb[0].mxu0
        %v2059 = vadd.f32 0.0, %v2058
        %v2060 = vpop.f32.mrb[0].mxu0
        %2061 = vmatprep.mubr.bf16.mxu0 0
        %2062 = vmatmul.mubr.bf16.gmra.mrb[0].mxu0 %v1944
        %v2063 = vpop.f32.mrb[0].mxu0
        %v2064 = vadd.f32 0.0, %v2063
        %v2065 = vpop.f32.mrb[0].mxu0
        %v2066 = vpop.f32.mrb[0].mxu0
        %v2067 = vadd.f32 0.0, %v2066
        %v2068 = vpop.f32.mrb[0].mxu0
        %2069 = vmatprep.mubr.bf16.mxu0 0
        %2070 = vmatmul.mubr.bf16.gmra.mrb[0].mxu0 %v1947
        %v2071 = vpop.f32.mrb[0].mxu0
        %v2072 = vadd.f32 0.0, %v2071
        %v2073 = vpop.f32.mrb[0].mxu0
        %v2074 = vpop.f32.mrb[0].mxu0
        %v2075 = vadd.f32 0.0, %v2074
        %v2076 = vpop.f32.mrb[0].mxu0
        %2077 = vmatprep.mubr.bf16.mxu0 0
        %2078 = vmatmul.mubr.bf16.gmra.mrb[0].mxu0 %v1950
        %v2079 = vpop.f32.mrb[0].mxu0
        %v2080 = vadd.f32 0.0, %v2079
        %v2081 = vpop.f32.mrb[0].mxu0
        %v2082 = vpop.f32.mrb[0].mxu0
        %v2083 = vadd.f32 0.0, %v2082
        %v2084 = vpop.f32.mrb[0].mxu0
        %2085 = vmatprep.mubr.bf16.mxu0 0
        %2086 = vmatmul.mubr.bf16.gmra.mrb[0].mxu0 %v1953
        %v2087 = vpop.f32.mrb[0].mxu0
        %v2088 = vadd.f32 0.0, %v2087
        %v2089 = vpop.f32.mrb[0].mxu0
        %v2090 = vpop.f32.mrb[0].mxu0
        %v2091 = vadd.f32 0.0, %v2090
        %v2092 = vpop.f32.mrb[0].mxu0
        %2093 = vmatprep.mubr.bf16.mxu0 0
        %2094 = vmatmul.mubr.bf16.gmra.mrb[0].mxu0 %v1956
        %v2095 = vpop.f32.mrb[0].mxu0
        %v2096 = vadd.f32 0.0, %v2095
        %v2097 = vpop.f32.mrb[0].mxu0
        %v2098 = vpop.f32.mrb[0].mxu0
        %v2099 = vadd.f32 0.0, %v2098
        %v2100 = vpop.f32.mrb[0].mxu0
        %2101 = vmatprep.mubr.bf16.mxu0 0
        %2102 = vmatmul.mubr.bf16.gmra.mrb[0].mxu0 %v1959
        %v2103 = vpop.f32.mrb[0].mxu0
        %v2104 = vadd.f32 0.0, %v2103
        %v2105 = vpop.f32.mrb[0].mxu0
        %v2106 = vpop.f32.mrb[0].mxu0
        %v2107 = vadd.f32 0.0, %v2106
        %v2108 = vpop.f32.mrb[0].mxu0
        %2109 = vmatprep.mubr.bf16.mxu0 0
        %2110 = vmatmul.mubr.bf16.gmra.mrb[0].mxu0 %v1962
        %v2111 = vpop.f32.mrb[0].mxu0
        %v2112 = vadd.f32 0.0, %v2111
        %v2113 = vpop.f32.mrb[0].mxu0
        %v2114 = vpop.f32.mrb[0].mxu0
        %v2115 = vadd.f32 0.0, %v2114
        %v2116 = vpop.f32.mrb[0].mxu0
        %2117 = vmatprep.mubr.bf16.mxu0 0
        %2118 = vmatmul.mubr.bf16.gmra.mrb[0].mxu0 %v1965
        %v2119 = vpop.f32.mrb[0].mxu0
        %v2120 = vadd.f32 0.0, %v2119
        %v2121 = vpop.f32.mrb[0].mxu0
        %v2122 = vpop.f32.mrb[0].mxu0
        %v2123 = vadd.f32 0.0, %v2122
        %v2124 = vpop.f32.mrb[0].mxu0
        %2125 = vmatprep.mubr.bf16.mxu0 0
        %2126 = vmatmul.mubr.bf16.gmra.mrb[0].mxu0 %v1968
        %v2127 = vpop.f32.mrb[0].mxu0
        %v2128 = vadd.f32 0.0, %v2127
        %v2129 = vpop.f32.mrb[0].mxu0
        %v2130 = vpop.f32.mrb[0].mxu0
        %v2131 = vadd.f32 0.0, %v2130
        %v2132 = vpop.f32.mrb[0].mxu0
        %2133 = vdwg.mxu0
        %v2134 = vadd.f32 %v1839, %v2008
        %v2135 = vadd.f32 %v1840, %v2011
        %v2136 = vadd.f32 %v1841, %v2016
        %v2137 = vadd.f32 %v1842, %v2019
        %v2138 = vadd.f32 %v1843, %v2024
        %v2139 = vadd.f32 %v1844, %v2027
        %v2140 = vadd.f32 %v1845, %v2032
        %v2141 = vadd.f32 %v1846, %v2035
        %v2142 = vadd.f32 %v1847, %v2040
        %v2143 = vadd.f32 %v1848, %v2043
        %v2144 = vadd.f32 %v1849, %v2048
        %v2145 = vadd.f32 %v1850, %v2051
        %v2146 = vadd.f32 %v1851, %v2056
        %v2147 = vadd.f32 %v1852, %v2059
        %v2148 = vadd.f32 %v1853, %v2064
        %v2149 = vadd.f32 %v1854, %v2067
        %v2150 = vadd.f32 %v1855, %v2072
        %v2151 = vadd.f32 %v1856, %v2075
        %v2152 = vadd.f32 %v1857, %v2080
        %v2153 = vadd.f32 %v1858, %v2083
        %v2154 = vadd.f32 %v1859, %v2088
        %v2155 = vadd.f32 %v1860, %v2091
        %v2156 = vadd.f32 %v1861, %v2096
        %v2157 = vadd.f32 %v1862, %v2099
        %v2158 = vadd.f32 %v1863, %v2104
        %v2159 = vadd.f32 %v1864, %v2107
        %v2160 = vadd.f32 %v1865, %v2112
        %v2161 = vadd.f32 %v1866, %v2115
        %v2162 = vadd.f32 %v1867, %v2120
        %v2163 = vadd.f32 %v1868, %v2123
        %v2164 = vadd.f32 %v1869, %v2128
        %v2165 = vadd.f32 %v1870, %v2131
        %v2166 = vld [vmem:[%s1871 + $0x1] sm:$0xff]
        %v2167 = vld [vmem:[%s1871 + $0x9] sm:$0xff]
        %v2168 = vld [vmem:[%s1871 + $0x19] sm:$0xff]
        %v2169 = vld [vmem:[%s1871 + $0x21] sm:$0xff]
        %v2170 = vld [vmem:[%s1871 + $0x31] sm:$0xff]
        %v2171 = vld [vmem:[%s1871 + $0x39] sm:$0xff]
        %v2172 = vld [vmem:[%s1871 + $0x49] sm:$0xff]
        %v2173 = vld [vmem:[%s1871 + $0x51] sm:$0xff]
        %v2174 = vld [vmem:[%s1871 + $0x61] sm:$0xff]
        %v2175 = vld [vmem:[%s1871 + $0x69] sm:$0xff]
        %v2176 = vld [vmem:[%s1871 + $0x79] sm:$0xff]
        %v2177 = vld [vmem:[%s1871 + $0x81] sm:$0xff]
        %v2178 = vld [vmem:[%s1871 + $0x91] sm:$0xff]
        %v2179 = vld [vmem:[%s1871 + $0x99] sm:$0xff]
        %v2180 = vld [vmem:[%s1871 + $0xa9] sm:$0xff]
        %v2181 = vld [vmem:[%s1871 + $0xb1] sm:$0xff]
        %v2182 = vld [vmem:[%s1871 + $0xc1] sm:$0xff]
        %v2183 = vld [vmem:[%s1871 + $0xc9] sm:$0xff]
        %v2184 = vld [vmem:[%s1871 + $0xd9] sm:$0xff]
        %v2185 = vld [vmem:[%s1871 + $0xe1] sm:$0xff]
        %v2186 = vld [vmem:[%s1871 + $0xf1] sm:$0xff]
        %v2187 = vld [vmem:[%s1871 + $0xf9] sm:$0xff]
        %v2188 = vld [vmem:[%s1871 + $0x109] sm:$0xff]
        %v2189 = vld [vmem:[%s1871 + $0x111] sm:$0xff]
        %v2190 = vld [vmem:[%s1871 + $0x121] sm:$0xff]
        %v2191 = vld [vmem:[%s1871 + $0x129] sm:$0xff]
        %v2192 = vld [vmem:[%s1871 + $0x139] sm:$0xff]
        %v2193 = vld [vmem:[%s1871 + $0x141] sm:$0xff]
        %v2194 = vld [vmem:[%s1871 + $0x151] sm:$0xff]
        %v2195 = vld [vmem:[%s1871 + $0x159] sm:$0xff]
        %v2196 = vld [vmem:[%s1871 + $0x169] sm:$0xff]
        %v2197 = vld [vmem:[%s1871 + $0x171] sm:$0xff]
        %v2198 = vpack.c.bf16 %v2167, %v2166
        %v2199 = vpack.c.bf16 %v2169, %v2168
        %v2200 = vpack.c.bf16 %v2171, %v2170
        %v2201 = vpack.c.bf16 %v2173, %v2172
        %v2202 = vpack.c.bf16 %v2175, %v2174
        %v2203 = vpack.c.bf16 %v2177, %v2176
        %v2204 = vpack.c.bf16 %v2179, %v2178
        %v2205 = vpack.c.bf16 %v2181, %v2180
        %v2206 = vpack.c.bf16 %v2183, %v2182
        %v2207 = vpack.c.bf16 %v2185, %v2184
        %v2208 = vpack.c.bf16 %v2187, %v2186
        %v2209 = vpack.c.bf16 %v2189, %v2188
        %v2210 = vpack.c.bf16 %v2191, %v2190
        %v2211 = vpack.c.bf16 %v2193, %v2192
        %v2212 = vpack.c.bf16 %v2195, %v2194
        %v2213 = vpack.c.bf16 %v2197, %v2196
        %s2214 = scalar_lea.vmem %s1, 14
        %v2215 = vld [vmem:[%s2214] sm:$0x3]
        %v2217 = vsel %vm268, %v2198, 0
        %v2220 = vsel %vm268, %v2199, 0
        %v2223 = vsel %vm268, %v2200, 0
        %v2226 = vsel %vm268, %v2201, 0
        %v2229 = vsel %vm268, %v2202, 0
        %v2232 = vsel %vm268, %v2203, 0
        %v2235 = vsel %vm268, %v2204, 0
        %v2238 = vsel %vm268, %v2205, 0
        %v2241 = vsel %vm268, %v2206, 0
        %v2244 = vsel %vm268, %v2207, 0
        %v2247 = vsel %vm268, %v2208, 0
        %v2250 = vsel %vm268, %v2209, 0
        %v2253 = vsel %vm268, %v2210, 0
        %v2256 = vsel %vm268, %v2211, 0
        %v2259 = vsel %vm268, %v2212, 0
        %v2262 = vsel %vm268, %v2213, 0
        %v2265 = vsel %vm317, %v2215, 0
        %2267 = vmatprep.subr.bf16.mxu0 0
        %2268 = vmatpush1.bf16.msra.mxu0 %v2265
        %2269 = vmatprep.subr.bf16.mxu0 0
        %2270 = vmatpush1.bf16.msra.mxu0 0
        %2271 = vmatprep.subr.bf16.mxu0 0
        %2272 = vmatpush1.bf16.msra.mxu0 0
        %2273 = vmatprep.subr.bf16.mxu0 0
        %2274 = vmatpush1.bf16.msra.mxu0 0
        %2275 = vmatprep.subr.bf16.mxu0 0
        %2276 = vmatpush1.bf16.msra.mxu0 0
        %2277 = vmatprep.subr.bf16.mxu0 0
        %2278 = vmatpush1.bf16.msra.mxu0 0
        %2279 = vmatprep.subr.bf16.mxu0 0
        %2280 = vmatpush1.bf16.msra.mxu0 0
        %2281 = vmatprep.subr.bf16.mxu0 0
        %2282 = vmatpush1.bf16.msra.mxu0 0
        %2283 = vmatprep.subr.bf16.mxu0 0
        %2284 = vmatpush1.bf16.msra.mxu0 0
        %2285 = vmatprep.subr.bf16.mxu0 0
        %2286 = vmatpush1.bf16.msra.mxu0 0
        %2287 = vmatprep.subr.bf16.mxu0 0
        %2288 = vmatpush1.bf16.msra.mxu0 0
        %2289 = vmatprep.subr.bf16.mxu0 0
        %2290 = vmatpush1.bf16.msra.mxu0 0
        %2291 = vmatprep.subr.bf16.mxu0 0
        %2292 = vmatpush1.bf16.msra.mxu0 0
        %2293 = vmatprep.subr.bf16.mxu0 0
        %2294 = vmatpush1.bf16.msra.mxu0 0
        %2295 = vmatprep.subr.bf16.mxu0 0
        %2296 = vmatpush1.bf16.msra.mxu0 0
        %2297 = vmatprep.subr.bf16.mxu0 0
        %2298 = vmatpush1.bf16.msra.mxu0 0
        %2299 = vmatprep.mubr.bf16.mxu0 0
        %2300 = vmatmul.mubr.bf16.gmra.mrb[0].mxu0 %v2217
        %v2301 = vpop.f32.mrb[0].mxu0
        %v2302 = vadd.f32 0.0, %v2301
        %v2303 = vpop.f32.mrb[0].mxu0
        %v2304 = vpop.f32.mrb[0].mxu0
        %v2305 = vadd.f32 0.0, %v2304
        %v2306 = vpop.f32.mrb[0].mxu0
        %2307 = vmatprep.mubr.bf16.mxu0 0
        %2308 = vmatmul.mubr.bf16.gmra.mrb[0].mxu0 %v2220
        %v2309 = vpop.f32.mrb[0].mxu0
        %v2310 = vadd.f32 0.0, %v2309
        %v2311 = vpop.f32.mrb[0].mxu0
        %v2312 = vpop.f32.mrb[0].mxu0
        %v2313 = vadd.f32 0.0, %v2312
        %v2314 = vpop.f32.mrb[0].mxu0
        %2315 = vmatprep.mubr.bf16.mxu0 0
        %2316 = vmatmul.mubr.bf16.gmra.mrb[0].mxu0 %v2223
        %v2317 = vpop.f32.mrb[0].mxu0
        %v2318 = vadd.f32 0.0, %v2317
        %v2319 = vpop.f32.mrb[0].mxu0
        %v2320 = vpop.f32.mrb[0].mxu0
        %v2321 = vadd.f32 0.0, %v2320
        %v2322 = vpop.f32.mrb[0].mxu0
        %2323 = vmatprep.mubr.bf16.mxu0 0
        %2324 = vmatmul.mubr.bf16.gmra.mrb[0].mxu0 %v2226
        %v2325 = vpop.f32.mrb[0].mxu0
        %v2326 = vadd.f32 0.0, %v2325
        %v2327 = vpop.f32.mrb[0].mxu0
        %v2328 = vpop.f32.mrb[0].mxu0
        %v2329 = vadd.f32 0.0, %v2328
        %v2330 = vpop.f32.mrb[0].mxu0
        %2331 = vmatprep.mubr.bf16.mxu0 0
        %2332 = vmatmul.mubr.bf16.gmra.mrb[0].mxu0 %v2229
        %v2333 = vpop.f32.mrb[0].mxu0
        %v2334 = vadd.f32 0.0, %v2333
        %v2335 = vpop.f32.mrb[0].mxu0
        %v2336 = vpop.f32.mrb[0].mxu0
        %v2337 = vadd.f32 0.0, %v2336
        %v2338 = vpop.f32.mrb[0].mxu0
        %2339 = vmatprep.mubr.bf16.mxu0 0
        %2340 = vmatmul.mubr.bf16.gmra.mrb[0].mxu0 %v2232
        %v2341 = vpop.f32.mrb[0].mxu0
        %v2342 = vadd.f32 0.0, %v2341
        %v2343 = vpop.f32.mrb[0].mxu0
        %v2344 = vpop.f32.mrb[0].mxu0
        %v2345 = vadd.f32 0.0, %v2344
        %v2346 = vpop.f32.mrb[0].mxu0
        %2347 = vmatprep.mubr.bf16.mxu0 0
        %2348 = vmatmul.mubr.bf16.gmra.mrb[0].mxu0 %v2235
        %v2349 = vpop.f32.mrb[0].mxu0
        %v2350 = vadd.f32 0.0, %v2349
        %v2351 = vpop.f32.mrb[0].mxu0
        %v2352 = vpop.f32.mrb[0].mxu0
        %v2353 = vadd.f32 0.0, %v2352
        %v2354 = vpop.f32.mrb[0].mxu0
        %2355 = vmatprep.mubr.bf16.mxu0 0
        %2356 = vmatmul.mubr.bf16.gmra.mrb[0].mxu0 %v2238
        %v2357 = vpop.f32.mrb[0].mxu0
        %v2358 = vadd.f32 0.0, %v2357
        %v2359 = vpop.f32.mrb[0].mxu0
        %v2360 = vpop.f32.mrb[0].mxu0
        %v2361 = vadd.f32 0.0, %v2360
        %v2362 = vpop.f32.mrb[0].mxu0
        %2363 = vmatprep.mubr.bf16.mxu0 0
        %2364 = vmatmul.mubr.bf16.gmra.mrb[0].mxu0 %v2241
        %v2365 = vpop.f32.mrb[0].mxu0
        %v2366 = vadd.f32 0.0, %v2365
        %v2367 = vpop.f32.mrb[0].mxu0
        %v2368 = vpop.f32.mrb[0].mxu0
        %v2369 = vadd.f32 0.0, %v2368
        %v2370 = vpop.f32.mrb[0].mxu0
        %2371 = vmatprep.mubr.bf16.mxu0 0
        %2372 = vmatmul.mubr.bf16.gmra.mrb[0].mxu0 %v2244
        %v2373 = vpop.f32.mrb[0].mxu0
        %v2374 = vadd.f32 0.0, %v2373
        %v2375 = vpop.f32.mrb[0].mxu0
        %v2376 = vpop.f32.mrb[0].mxu0
        %v2377 = vadd.f32 0.0, %v2376
        %v2378 = vpop.f32.mrb[0].mxu0
        %2379 = vmatprep.mubr.bf16.mxu0 0
        %2380 = vmatmul.mubr.bf16.gmra.mrb[0].mxu0 %v2247
        %v2381 = vpop.f32.mrb[0].mxu0
        %v2382 = vadd.f32 0.0, %v2381
        %v2383 = vpop.f32.mrb[0].mxu0
        %v2384 = vpop.f32.mrb[0].mxu0
        %v2385 = vadd.f32 0.0, %v2384
        %v2386 = vpop.f32.mrb[0].mxu0
        %2387 = vmatprep.mubr.bf16.mxu0 0
        %2388 = vmatmul.mubr.bf16.gmra.mrb[0].mxu0 %v2250
        %v2389 = vpop.f32.mrb[0].mxu0
        %v2390 = vadd.f32 0.0, %v2389
        %v2391 = vpop.f32.mrb[0].mxu0
        %v2392 = vpop.f32.mrb[0].mxu0
        %v2393 = vadd.f32 0.0, %v2392
        %v2394 = vpop.f32.mrb[0].mxu0
        %2395 = vmatprep.mubr.bf16.mxu0 0
        %2396 = vmatmul.mubr.bf16.gmra.mrb[0].mxu0 %v2253
        %v2397 = vpop.f32.mrb[0].mxu0
        %v2398 = vadd.f32 0.0, %v2397
        %v2399 = vpop.f32.mrb[0].mxu0
        %v2400 = vpop.f32.mrb[0].mxu0
        %v2401 = vadd.f32 0.0, %v2400
        %v2402 = vpop.f32.mrb[0].mxu0
        %2403 = vmatprep.mubr.bf16.mxu0 0
        %2404 = vmatmul.mubr.bf16.gmra.mrb[0].mxu0 %v2256
        %v2405 = vpop.f32.mrb[0].mxu0
        %v2406 = vadd.f32 0.0, %v2405
        %v2407 = vpop.f32.mrb[0].mxu0
        %v2408 = vpop.f32.mrb[0].mxu0
        %v2409 = vadd.f32 0.0, %v2408
        %v2410 = vpop.f32.mrb[0].mxu0
        %2411 = vmatprep.mubr.bf16.mxu0 0
        %2412 = vmatmul.mubr.bf16.gmra.mrb[0].mxu0 %v2259
        %v2413 = vpop.f32.mrb[0].mxu0
        %v2414 = vadd.f32 0.0, %v2413
        %v2415 = vpop.f32.mrb[0].mxu0
        %v2416 = vpop.f32.mrb[0].mxu0
        %v2417 = vadd.f32 0.0, %v2416
        %v2418 = vpop.f32.mrb[0].mxu0
        %2419 = vmatprep.mubr.bf16.mxu0 0
        %2420 = vmatmul.mubr.bf16.gmra.mrb[0].mxu0 %v2262
        %v2421 = vpop.f32.mrb[0].mxu0
        %v2422 = vadd.f32 0.0, %v2421
        %v2423 = vpop.f32.mrb[0].mxu0
        %v2424 = vpop.f32.mrb[0].mxu0
        %v2425 = vadd.f32 0.0, %v2424
        %v2426 = vpop.f32.mrb[0].mxu0
        %2427 = vdwg.mxu0
        %v2428 = vadd.f32 %v2134, %v2302
        %v2429 = vadd.f32 %v2135, %v2305
        %v2430 = vadd.f32 %v2136, %v2310
        %v2431 = vadd.f32 %v2137, %v2313
        %v2432 = vadd.f32 %v2138, %v2318
        %v2433 = vadd.f32 %v2139, %v2321
        %v2434 = vadd.f32 %v2140, %v2326
        %v2435 = vadd.f32 %v2141, %v2329
        %v2436 = vadd.f32 %v2142, %v2334
        %v2437 = vadd.f32 %v2143, %v2337
        %v2438 = vadd.f32 %v2144, %v2342
        %v2439 = vadd.f32 %v2145, %v2345
        %v2440 = vadd.f32 %v2146, %v2350
        %v2441 = vadd.f32 %v2147, %v2353
        %v2442 = vadd.f32 %v2148, %v2358
        %v2443 = vadd.f32 %v2149, %v2361
        %v2444 = vadd.f32 %v2150, %v2366
        %v2445 = vadd.f32 %v2151, %v2369
        %v2446 = vadd.f32 %v2152, %v2374
        %v2447 = vadd.f32 %v2153, %v2377
        %v2448 = vadd.f32 %v2154, %v2382
        %v2449 = vadd.f32 %v2155, %v2385
        %v2450 = vadd.f32 %v2156, %v2390
        %v2451 = vadd.f32 %v2157, %v2393
        %v2452 = vadd.f32 %v2158, %v2398
        %v2453 = vadd.f32 %v2159, %v2401
        %v2454 = vadd.f32 %v2160, %v2406
        %v2455 = vadd.f32 %v2161, %v2409
        %v2456 = vadd.f32 %v2162, %v2414
        %v2457 = vadd.f32 %v2163, %v2417
        %v2458 = vadd.f32 %v2164, %v2422
        %v2459 = vadd.f32 %v2165, %v2425
        %v2460 = vld [vmem:[%s1871 + $0x2] sm:$0xff]
        %v2461 = vld [vmem:[%s1871 + $0xa] sm:$0xff]
        %v2462 = vld [vmem:[%s1871 + $0x1a] sm:$0xff]
        %v2463 = vld [vmem:[%s1871 + $0x22] sm:$0xff]
        %v2464 = vld [vmem:[%s1871 + $0x32] sm:$0xff]
        %v2465 = vld [vmem:[%s1871 + $0x3a] sm:$0xff]
        %v2466 = vld [vmem:[%s1871 + $0x4a] sm:$0xff]
        %v2467 = vld [vmem:[%s1871 + $0x52] sm:$0xff]
        %v2468 = vld [vmem:[%s1871 + $0x62] sm:$0xff]
        %v2469 = vld [vmem:[%s1871 + $0x6a] sm:$0xff]
        %v2470 = vld [vmem:[%s1871 + $0x7a] sm:$0xff]
        %v2471 = vld [vmem:[%s1871 + $0x82] sm:$0xff]
        %v2472 = vld [vmem:[%s1871 + $0x92] sm:$0xff]
        %v2473 = vld [vmem:[%s1871 + $0x9a] sm:$0xff]
        %v2474 = vld [vmem:[%s1871 + $0xaa] sm:$0xff]
        %v2475 = vld [vmem:[%s1871 + $0xb2] sm:$0xff]
        %v2476 = vld [vmem:[%s1871 + $0xc2] sm:$0xff]
        %v2477 = vld [vmem:[%s1871 + $0xca] sm:$0xff]
        %v2478 = vld [vmem:[%s1871 + $0xda] sm:$0xff]
        %v2479 = vld [vmem:[%s1871 + $0xe2] sm:$0xff]
        %v2480 = vld [vmem:[%s1871 + $0xf2] sm:$0xff]
        %v2481 = vld [vmem:[%s1871 + $0xfa] sm:$0xff]
        %v2482 = vld [vmem:[%s1871 + $0x10a] sm:$0xff]
        %v2483 = vld [vmem:[%s1871 + $0x112] sm:$0xff]
        %v2484 = vld [vmem:[%s1871 + $0x122] sm:$0xff]
        %v2485 = vld [vmem:[%s1871 + $0x12a] sm:$0xff]
        %v2486 = vld [vmem:[%s1871 + $0x13a] sm:$0xff]
        %v2487 = vld [vmem:[%s1871 + $0x142] sm:$0xff]
        %v2488 = vld [vmem:[%s1871 + $0x152] sm:$0xff]
        %v2489 = vld [vmem:[%s1871 + $0x15a] sm:$0xff]
        %v2490 = vld [vmem:[%s1871 + $0x16a] sm:$0xff]
        %v2491 = vld [vmem:[%s1871 + $0x172] sm:$0xff]
        %v2492 = vpack.c.bf16 %v2461, %v2460
        %v2493 = vpack.c.bf16 %v2463, %v2462
        %v2494 = vpack.c.bf16 %v2465, %v2464
        %v2495 = vpack.c.bf16 %v2467, %v2466
        %v2496 = vpack.c.bf16 %v2469, %v2468
        %v2497 = vpack.c.bf16 %v2471, %v2470
        %v2498 = vpack.c.bf16 %v2473, %v2472
        %v2499 = vpack.c.bf16 %v2475, %v2474
        %v2500 = vpack.c.bf16 %v2477, %v2476
        %v2501 = vpack.c.bf16 %v2479, %v2478
        %v2502 = vpack.c.bf16 %v2481, %v2480
        %v2503 = vpack.c.bf16 %v2483, %v2482
        %v2504 = vpack.c.bf16 %v2485, %v2484
        %v2505 = vpack.c.bf16 %v2487, %v2486
        %v2506 = vpack.c.bf16 %v2489, %v2488
        %v2507 = vpack.c.bf16 %v2491, %v2490
        %s2508 = scalar_lea.vmem %s1, 16
        %v2509 = vld [vmem:[%s2508] sm:$0x3]
        %v2511 = vsel %vm268, %v2492, 0
        %v2514 = vsel %vm268, %v2493, 0
        %v2517 = vsel %vm268, %v2494, 0
        %v2520 = vsel %vm268, %v2495, 0
        %v2523 = vsel %vm268, %v2496, 0
        %v2526 = vsel %vm268, %v2497, 0
        %v2529 = vsel %vm268, %v2498, 0
        %v2532 = vsel %vm268, %v2499, 0
        %v2535 = vsel %vm268, %v2500, 0
        %v2538 = vsel %vm268, %v2501, 0
        %v2541 = vsel %vm268, %v2502, 0
        %v2544 = vsel %vm268, %v2503, 0
        %v2547 = vsel %vm268, %v2504, 0
        %v2550 = vsel %vm268, %v2505, 0
        %v2553 = vsel %vm268, %v2506, 0
        %v2556 = vsel %vm268, %v2507, 0
        %v2559 = vsel %vm317, %v2509, 0
        %2561 = vmatprep.subr.bf16.mxu0 0
        %2562 = vmatpush1.bf16.msra.mxu0 %v2559
        %2563 = vmatprep.subr.bf16.mxu0 0
        %2564 = vmatpush1.bf16.msra.mxu0 0
        %2565 = vmatprep.subr.bf16.mxu0 0
        %2566 = vmatpush1.bf16.msra.mxu0 0
        %2567 = vmatprep.subr.bf16.mxu0 0
        %2568 = vmatpush1.bf16.msra.mxu0 0
        %2569 = vmatprep.subr.bf16.mxu0 0
        %2570 = vmatpush1.bf16.msra.mxu0 0
        %2571 = vmatprep.subr.bf16.mxu0 0
        %2572 = vmatpush1.bf16.msra.mxu0 0
        %2573 = vmatprep.subr.bf16.mxu0 0
        %2574 = vmatpush1.bf16.msra.mxu0 0
        %2575 = vmatprep.subr.bf16.mxu0 0
        %2576 = vmatpush1.bf16.msra.mxu0 0
        %2577 = vmatprep.subr.bf16.mxu0 0
        %2578 = vmatpush1.bf16.msra.mxu0 0
        %2579 = vmatprep.subr.bf16.mxu0 0
        %2580 = vmatpush1.bf16.msra.mxu0 0
        %2581 = vmatprep.subr.bf16.mxu0 0
        %2582 = vmatpush1.bf16.msra.mxu0 0
        %2583 = vmatprep.subr.bf16.mxu0 0
        %2584 = vmatpush1.bf16.msra.mxu0 0
        %2585 = vmatprep.subr.bf16.mxu0 0
        %2586 = vmatpush1.bf16.msra.mxu0 0
        %2587 = vmatprep.subr.bf16.mxu0 0
        %2588 = vmatpush1.bf16.msra.mxu0 0
        %2589 = vmatprep.subr.bf16.mxu0 0
        %2590 = vmatpush1.bf16.msra.mxu0 0
        %2591 = vmatprep.subr.bf16.mxu0 0
        %2592 = vmatpush1.bf16.msra.mxu0 0
        %2593 = vmatprep.mubr.bf16.mxu0 0
        %2594 = vmatmul.mubr.bf16.gmra.mrb[0].mxu0 %v2511
        %v2595 = vpop.f32.mrb[0].mxu0
        %v2596 = vadd.f32 0.0, %v2595
        %v2597 = vpop.f32.mrb[0].mxu0
        %v2598 = vpop.f32.mrb[0].mxu0
        %v2599 = vadd.f32 0.0, %v2598
        %v2600 = vpop.f32.mrb[0].mxu0
        %2601 = vmatprep.mubr.bf16.mxu0 0
        %2602 = vmatmul.mubr.bf16.gmra.mrb[0].mxu0 %v2514
        %v2603 = vpop.f32.mrb[0].mxu0
        %v2604 = vadd.f32 0.0, %v2603
        %v2605 = vpop.f32.mrb[0].mxu0
        %v2606 = vpop.f32.mrb[0].mxu0
        %v2607 = vadd.f32 0.0, %v2606
        %v2608 = vpop.f32.mrb[0].mxu0
        %2609 = vmatprep.mubr.bf16.mxu0 0
        %2610 = vmatmul.mubr.bf16.gmra.mrb[0].mxu0 %v2517
        %v2611 = vpop.f32.mrb[0].mxu0
        %v2612 = vadd.f32 0.0, %v2611
        %v2613 = vpop.f32.mrb[0].mxu0
        %v2614 = vpop.f32.mrb[0].mxu0
        %v2615 = vadd.f32 0.0, %v2614
        %v2616 = vpop.f32.mrb[0].mxu0
        %2617 = vmatprep.mubr.bf16.mxu0 0
        %2618 = vmatmul.mubr.bf16.gmra.mrb[0].mxu0 %v2520
        %v2619 = vpop.f32.mrb[0].mxu0
        %v2620 = vadd.f32 0.0, %v2619
        %v2621 = vpop.f32.mrb[0].mxu0
        %v2622 = vpop.f32.mrb[0].mxu0
        %v2623 = vadd.f32 0.0, %v2622
        %v2624 = vpop.f32.mrb[0].mxu0
        %2625 = vmatprep.mubr.bf16.mxu0 0
        %2626 = vmatmul.mubr.bf16.gmra.mrb[0].mxu0 %v2523
        %v2627 = vpop.f32.mrb[0].mxu0
        %v2628 = vadd.f32 0.0, %v2627
        %v2629 = vpop.f32.mrb[0].mxu0
        %v2630 = vpop.f32.mrb[0].mxu0
        %v2631 = vadd.f32 0.0, %v2630
        %v2632 = vpop.f32.mrb[0].mxu0
        %2633 = vmatprep.mubr.bf16.mxu0 0
        %2634 = vmatmul.mubr.bf16.gmra.mrb[0].mxu0 %v2526
        %v2635 = vpop.f32.mrb[0].mxu0
        %v2636 = vadd.f32 0.0, %v2635
        %v2637 = vpop.f32.mrb[0].mxu0
        %v2638 = vpop.f32.mrb[0].mxu0
        %v2639 = vadd.f32 0.0, %v2638
        %v2640 = vpop.f32.mrb[0].mxu0
        %2641 = vmatprep.mubr.bf16.mxu0 0
        %2642 = vmatmul.mubr.bf16.gmra.mrb[0].mxu0 %v2529
        %v2643 = vpop.f32.mrb[0].mxu0
        %v2644 = vadd.f32 0.0, %v2643
        %v2645 = vpop.f32.mrb[0].mxu0
        %v2646 = vpop.f32.mrb[0].mxu0
        %v2647 = vadd.f32 0.0, %v2646
        %v2648 = vpop.f32.mrb[0].mxu0
        %2649 = vmatprep.mubr.bf16.mxu0 0
        %2650 = vmatmul.mubr.bf16.gmra.mrb[0].mxu0 %v2532
        %v2651 = vpop.f32.mrb[0].mxu0
        %v2652 = vadd.f32 0.0, %v2651
        %v2653 = vpop.f32.mrb[0].mxu0
        %v2654 = vpop.f32.mrb[0].mxu0
        %v2655 = vadd.f32 0.0, %v2654
        %v2656 = vpop.f32.mrb[0].mxu0
        %2657 = vmatprep.mubr.bf16.mxu0 0
        %2658 = vmatmul.mubr.bf16.gmra.mrb[0].mxu0 %v2535
        %v2659 = vpop.f32.mrb[0].mxu0
        %v2660 = vadd.f32 0.0, %v2659
        %v2661 = vpop.f32.mrb[0].mxu0
        %v2662 = vpop.f32.mrb[0].mxu0
        %v2663 = vadd.f32 0.0, %v2662
        %v2664 = vpop.f32.mrb[0].mxu0
        %2665 = vmatprep.mubr.bf16.mxu0 0
        %2666 = vmatmul.mubr.bf16.gmra.mrb[0].mxu0 %v2538
        %v2667 = vpop.f32.mrb[0].mxu0
        %v2668 = vadd.f32 0.0, %v2667
        %v2669 = vpop.f32.mrb[0].mxu0
        %v2670 = vpop.f32.mrb[0].mxu0
        %v2671 = vadd.f32 0.0, %v2670
        %v2672 = vpop.f32.mrb[0].mxu0
        %2673 = vmatprep.mubr.bf16.mxu0 0
        %2674 = vmatmul.mubr.bf16.gmra.mrb[0].mxu0 %v2541
        %v2675 = vpop.f32.mrb[0].mxu0
        %v2676 = vadd.f32 0.0, %v2675
        %v2677 = vpop.f32.mrb[0].mxu0
        %v2678 = vpop.f32.mrb[0].mxu0
        %v2679 = vadd.f32 0.0, %v2678
        %v2680 = vpop.f32.mrb[0].mxu0
        %2681 = vmatprep.mubr.bf16.mxu0 0
        %2682 = vmatmul.mubr.bf16.gmra.mrb[0].mxu0 %v2544
        %v2683 = vpop.f32.mrb[0].mxu0
        %v2684 = vadd.f32 0.0, %v2683
        %v2685 = vpop.f32.mrb[0].mxu0
        %v2686 = vpop.f32.mrb[0].mxu0
        %v2687 = vadd.f32 0.0, %v2686
        %v2688 = vpop.f32.mrb[0].mxu0
        %2689 = vmatprep.mubr.bf16.mxu0 0
        %2690 = vmatmul.mubr.bf16.gmra.mrb[0].mxu0 %v2547
        %v2691 = vpop.f32.mrb[0].mxu0
        %v2692 = vadd.f32 0.0, %v2691
        %v2693 = vpop.f32.mrb[0].mxu0
        %v2694 = vpop.f32.mrb[0].mxu0
        %v2695 = vadd.f32 0.0, %v2694
        %v2696 = vpop.f32.mrb[0].mxu0
        %2697 = vmatprep.mubr.bf16.mxu0 0
        %2698 = vmatmul.mubr.bf16.gmra.mrb[0].mxu0 %v2550
        %v2699 = vpop.f32.mrb[0].mxu0
        %v2700 = vadd.f32 0.0, %v2699
        %v2701 = vpop.f32.mrb[0].mxu0
        %v2702 = vpop.f32.mrb[0].mxu0
        %v2703 = vadd.f32 0.0, %v2702
        %v2704 = vpop.f32.mrb[0].mxu0
        %2705 = vmatprep.mubr.bf16.mxu0 0
        %2706 = vmatmul.mubr.bf16.gmra.mrb[0].mxu0 %v2553
        %v2707 = vpop.f32.mrb[0].mxu0
        %v2708 = vadd.f32 0.0, %v2707
        %v2709 = vpop.f32.mrb[0].mxu0
        %v2710 = vpop.f32.mrb[0].mxu0
        %v2711 = vadd.f32 0.0, %v2710
        %v2712 = vpop.f32.mrb[0].mxu0
        %2713 = vmatprep.mubr.bf16.mxu0 0
        %2714 = vmatmul.mubr.bf16.gmra.mrb[0].mxu0 %v2556
        %v2715 = vpop.f32.mrb[0].mxu0
        %v2716 = vadd.f32 0.0, %v2715
        %v2717 = vpop.f32.mrb[0].mxu0
        %v2718 = vpop.f32.mrb[0].mxu0
        %v2719 = vadd.f32 0.0, %v2718
        %v2720 = vpop.f32.mrb[0].mxu0
        %2721 = vdwg.mxu0
        %v2722 = vadd.f32 %v2428, %v2596
        %v2723 = vadd.f32 %v2429, %v2599
        %v2724 = vadd.f32 %v2430, %v2604
        %v2725 = vadd.f32 %v2431, %v2607
        %v2726 = vadd.f32 %v2432, %v2612
        %v2727 = vadd.f32 %v2433, %v2615
        %v2728 = vadd.f32 %v2434, %v2620
        %v2729 = vadd.f32 %v2435, %v2623
        %v2730 = vadd.f32 %v2436, %v2628
        %v2731 = vadd.f32 %v2437, %v2631
        %v2732 = vadd.f32 %v2438, %v2636
        %v2733 = vadd.f32 %v2439, %v2639
        %v2734 = vadd.f32 %v2440, %v2644
        %v2735 = vadd.f32 %v2441, %v2647
        %v2736 = vadd.f32 %v2442, %v2652
        %v2737 = vadd.f32 %v2443, %v2655
        %v2738 = vadd.f32 %v2444, %v2660
        %v2739 = vadd.f32 %v2445, %v2663
        %v2740 = vadd.f32 %v2446, %v2668
        %v2741 = vadd.f32 %v2447, %v2671
        %v2742 = vadd.f32 %v2448, %v2676
        %v2743 = vadd.f32 %v2449, %v2679
        %v2744 = vadd.f32 %v2450, %v2684
        %v2745 = vadd.f32 %v2451, %v2687
        %v2746 = vadd.f32 %v2452, %v2692
        %v2747 = vadd.f32 %v2453, %v2695
        %v2748 = vadd.f32 %v2454, %v2700
        %v2749 = vadd.f32 %v2455, %v2703
        %v2750 = vadd.f32 %v2456, %v2708
        %v2751 = vadd.f32 %v2457, %v2711
        %v2752 = vadd.f32 %v2458, %v2716
        %v2753 = vadd.f32 %v2459, %v2719
        %v2754 = vld [vmem:[%s2] sm:$0x1]
        %v2756 = vlaneseq
        %v2757 = vshrl.u32 %v2756, 7
        %v2758 = vsub.s32 0, %v2757
        %v2759 = vrot.slane %v2754, %v2758
        %v2761 = vadd.f32 %v2722, %v2759
        %v2762 = vadd.f32 %v2723, %v2759
        %v2763 = vadd.f32 %v2724, %v2759
        %v2764 = vadd.f32 %v2725, %v2759
        %v2765 = vadd.f32 %v2726, %v2759
        %v2766 = vadd.f32 %v2727, %v2759
        %v2767 = vadd.f32 %v2728, %v2759
        %v2768 = vadd.f32 %v2729, %v2759
        %v2769 = vadd.f32 %v2730, %v2759
        %v2770 = vadd.f32 %v2731, %v2759
        %v2771 = vadd.f32 %v2732, %v2759
        %v2772 = vadd.f32 %v2733, %v2759
        %v2773 = vadd.f32 %v2734, %v2759
        %v2774 = vadd.f32 %v2735, %v2759
        %v2775 = vadd.f32 %v2736, %v2759
        %v2776 = vadd.f32 %v2737, %v2759
        %v2777 = vadd.f32 %v2738, %v2759
        %v2778 = vadd.f32 %v2739, %v2759
        %v2779 = vadd.f32 %v2740, %v2759
        %v2780 = vadd.f32 %v2741, %v2759
        %v2781 = vadd.f32 %v2742, %v2759
        %v2782 = vadd.f32 %v2743, %v2759
        %v2783 = vadd.f32 %v2744, %v2759
        %v2784 = vadd.f32 %v2745, %v2759
        %v2785 = vadd.f32 %v2746, %v2759
        %v2786 = vadd.f32 %v2747, %v2759
        %v2787 = vadd.f32 %v2748, %v2759
        %v2788 = vadd.f32 %v2749, %v2759
        %v2789 = vadd.f32 %v2750, %v2759
        %v2790 = vadd.f32 %v2751, %v2759
        %v2791 = vadd.f32 %v2752, %v2759
        %v2792 = vadd.f32 %v2753, %v2759
        %v2793 = vmax.f32 %v2761, 0.0
        %v2794 = vmax.f32 %v2762, 0.0
        %v2795 = vmax.f32 %v2763, 0.0
        %v2796 = vmax.f32 %v2764, 0.0
        %v2797 = vmax.f32 %v2765, 0.0
        %v2798 = vmax.f32 %v2766, 0.0
        %v2799 = vmax.f32 %v2767, 0.0
        %v2800 = vmax.f32 %v2768, 0.0
        %v2801 = vmax.f32 %v2769, 0.0
        %v2802 = vmax.f32 %v2770, 0.0
        %v2803 = vmax.f32 %v2771, 0.0
        %v2804 = vmax.f32 %v2772, 0.0
        %v2805 = vmax.f32 %v2773, 0.0
        %v2806 = vmax.f32 %v2774, 0.0
        %v2807 = vmax.f32 %v2775, 0.0
        %v2808 = vmax.f32 %v2776, 0.0
        %v2809 = vmax.f32 %v2777, 0.0
        %v2810 = vmax.f32 %v2778, 0.0
        %v2811 = vmax.f32 %v2779, 0.0
        %v2812 = vmax.f32 %v2780, 0.0
        %v2813 = vmax.f32 %v2781, 0.0
        %v2814 = vmax.f32 %v2782, 0.0
        %v2815 = vmax.f32 %v2783, 0.0
        %v2816 = vmax.f32 %v2784, 0.0
        %v2817 = vmax.f32 %v2785, 0.0
        %v2818 = vmax.f32 %v2786, 0.0
        %v2819 = vmax.f32 %v2787, 0.0
        %v2820 = vmax.f32 %v2788, 0.0
        %v2821 = vmax.f32 %v2789, 0.0
        %v2822 = vmax.f32 %v2790, 0.0
        %v2823 = vmax.f32 %v2791, 0.0
        %v2824 = vmax.f32 %v2792, 0.0
        %v2825 = vadd.f32 %v2793, %v2794
        %v2826 = vadd.f32 %v2825, %v2795
        %v2827 = vadd.f32 %v2826, %v2796
        %v2828 = vadd.f32 %v2827, %v2797
        %v2829 = vadd.f32 %v2828, %v2798
        %v2830 = vadd.f32 %v2829, %v2799
        %v2831 = vadd.f32 %v2830, %v2800
        %v2832 = vadd.f32 %v2831, %v2801
        %v2833 = vadd.f32 %v2832, %v2802
        %v2834 = vadd.f32 %v2833, %v2803
        %v2835 = vadd.f32 %v2834, %v2804
        %v2836 = vadd.f32 %v2835, %v2805
        %v2837 = vadd.f32 %v2836, %v2806
        %v2838 = vadd.f32 %v2837, %v2807
        %v2839 = vadd.f32 %v2838, %v2808
        %v2840 = vadd.f32 %v2839, %v2809
        %v2841 = vadd.f32 %v2840, %v2810
        %v2842 = vadd.f32 %v2841, %v2811
        %v2843 = vadd.f32 %v2842, %v2812
        %v2844 = vadd.f32 %v2843, %v2813
        %v2845 = vadd.f32 %v2844, %v2814
        %v2846 = vadd.f32 %v2845, %v2815
        %v2847 = vadd.f32 %v2846, %v2816
        %v2848 = vadd.f32 %v2847, %v2817
        %v2849 = vadd.f32 %v2848, %v2818
        %v2850 = vadd.f32 %v2849, %v2819
        %v2851 = vadd.f32 %v2850, %v2820
        %v2852 = vadd.f32 %v2851, %v2821
        %v2853 = vadd.f32 %v2852, %v2822
        %v2854 = vadd.f32 %v2853, %v2823
        %v2855 = vadd.f32 %v2854, %v2824
        %v2856 = vrot.slane %v2855, 4
        %v2857 = vadd.f32 %v2855, %v2856
        %v2858 = vrot.slane %v2857, 2
        %v2859 = vadd.f32 %v2857, %v2858
        %v2860 = vrot.slane %v2859, 1
        %v2861 = vadd.f32 %v2859, %v2860
        %v2862 = vmul.f32 %v2861, 0.00390625
        %2863 = vst [vmem:[%s162] sm:$0x1] %v2862
        %s2864 = sand.u32 %s93, 1
        %s2865 = scalar_lea.sflag [#allocation3], %s2864
        %s2866 = sand.u32 %s93, 1
        %s2867 = scalar_lea.vmem [#allocation2], %s2866
        // Predicated region
        $region33: #{tpu_custom_call.1} parent=31 // pred_check
          %p2868 = pneg %p103
        $region34: #{tpu_custom_call.1} parent=31 // pred_check_branch
          %2870 = sbr.rel (%p2868) target = $region36
        $region35: #{tpu_custom_call.1} parent=31 // pred_region
          %s2872 = ssub.s32 16, 16
          %2873 = vsyncadd %s2865, %s2872
          %s2874 = smul.addr %s17, 16
          %s2875 = scalar_lea.hbm %s3, %s2874
          %s2877 = sshll.u32 %s2867, 4
          %s2878 = int_to_ptr.vmem [resolvable:$true] %s2877
          %2880 = dma.vmem_to_hbm [thread:$0]  %s2878, 16, %s2875, %s2865
        $region36: #{tpu_custom_call.1} parent=31 // pred_fallthru
          _
      $region32: #{tpu_custom_call.1} parent=5 // pred_fallthru
        _
      %p2881 = scmp.le.s32.totalorder 2, %s12
      // Predicated region
      $region37: #{tpu_custom_call.1} parent=5 // pred_check
        %p2882 = pneg %p2881
      $region38: #{tpu_custom_call.1} parent=5 // pred_check_branch
        %2884 = sbr.rel (%p2882) target = $region40
      $region39: #{tpu_custom_call.1} parent=5 // pred_region
        %s2885 = ssub.s32 %s12, 2
        // Predicated region
        $region41: #{tpu_custom_call.1} parent=39 // pred_check
          %p2886 = pneg %p109
        $region42: #{tpu_custom_call.1} parent=39 // pred_check_branch
          %2888 = sbr.rel (%p2886) target = $region44
        $region43: #{tpu_custom_call.1} parent=39 // pred_region
          %s2889 = sand.u32 %s94, 1
          %s2890 = scalar_lea.sflag [#allocation3], %s2889
          %s2891 = sand.u32 %s94, 1
          %s2892 = scalar_lea.vmem [#allocation2], %s2891
          %2893 = dma.done %s2890, 16
        $region44: #{tpu_custom_call.1} parent=39 // pred_fallthru
          _
      $region40: #{tpu_custom_call.1} parent=5 // pred_fallthru
        _
    $region6: #{tpu_custom_call.1} parent=1 // loop_footer
      %s16 = sadd.s32 1, %s12
    $region7: #{tpu_custom_call.1} parent=1 // loop_footer_branch
      %11 = sbr.rel target = $region3
    $region8: #{tpu_custom_call.1} parent=1 // loop_exit
      _
    %2894 = vsyncpa [#allocation3], 1
    %s2895 = scalar_lea.sflag [#allocation3], 1
    %2896 = vsyncpa %s2895, 1

// kernel: tpu_custom_call.1
$region0: #{tpu_custom_call.1}
  #allocation0 [shape = 'u32[]', space=smem, size = 0x4, offset = 0x4, fixed_abs, tag = 'smem constant byte address 0x4 - core index']
  #allocation1 [shape = 'u32[144,128]{1,0:T(1,128)}', space=vmem, size = 0x12000, scoped, tag = 'internal scratch']
  %s0 = inlined_call_operand.vmem [shape: f32[2,18,18,4], index: 0, kind: input, shape index: {}]
  %s1 = inlined_call_operand.vmem [shape: bf16[9,4,128], index: 1, kind: input, shape index: {}]
  %s2 = inlined_call_operand.vmem [shape: f32[1,128], index: 2, kind: input, shape index: {}]
  %s3 = inlined_call_operand.hbm [shape: f32[2,1,128], index: 3, kind: output, shape index: {}]
  %s4 = sld [smem:[#allocation0]]
  $region45: #{tpu_custom_call.1} parent=0
    _
  %s6 = ssub.s32 1, %s4
  %s7 = scalar_select 0, %s6, %s4
  $region1: #{tpu_custom_call.1} parent=0
    #allocation2 [shape = 'u8[1024]{0}', space=vmem, size = 0x400, scoped, tag = 'output window, operand 0']
    #allocation3 [shape = 's32[2]{0}', space=sflag, size = 0x8, scoped, tag = 'scoped memory for tpu_custom_call.1']
    %8 = vsyncpa [#allocation3], 0
    %s9 = scalar_lea.sflag [#allocation3], 1
    %10 = vsyncpa %s9, 0
    loop: start=0, step=1, limit=4
    $region2: #{tpu_custom_call.1} parent=1 // loop_pre_header
      _
    $region3: #{tpu_custom_call.1} parent=1 // loop_header
      %s12 = sphi 0, %s16
      %p13 = scmp.ge.s32.totalorder %s12, 4
      %s22 = sphi 0, %s24
      %s25 = sphi 0, %s22
      %s26 = sphi 0, %s25
      %s42 = sphi 0, %s26
      %s46 = sphi 0, %s46
      %s48 = sphi 0, %s46
      %s49 = sphi 0, %s48
      %s63 = sphi 0, %s49
      %s67 = sphi 0, %s67
      %s69 = sphi 0, %s67
      %s70 = sphi 0, %s69
      %s84 = sphi 0, %s70
      %s90 = sphi 0, %s92
      %s93 = sphi 0, %s90
      %s94 = sphi 0, %s93
      %s110 = sphi 0, %s94
    $region4: #{tpu_custom_call.1} parent=1 // loop_header_branch
      %15 = sbr.rel (%p13) target = $region8
    $region5: #{tpu_custom_call.1} parent=1 // loop_body
      %s17 = ssub.s32 %s12, 1
      %s18 = ssub.s32 %s12, 2
      %s19 = sadd.s32 %s12, 1
      %s20 = ssub.s32 %s12, %s19
      %p21 = scmp.eq.s32.totalorder %s20, 0
      %s23 = sadd.s32 %s22, 1
      %s24 = scalar_select %p21, %s22, %s23
      %p27 = pneg %p21
      %p28 = scmp.eq.s32.totalorder %s12, 1
      %p29 = por %p27, %p28
      %p30 = scmp.ne.s32.totalorder %s22, %s25
      %p31 = scmp.eq.s32.totalorder %s12, 0
      %p32 = por %p30, %p31
      %p33 = scmp.ne.s32.totalorder %s22, %s25
      %p34 = scmp.eq.s32.totalorder %s17, 1
      %p35 = por %p33, %p34
      %p36 = scmp.ne.s32.totalorder %s25, %s26
      %p37 = scmp.eq.s32.totalorder %s17, 0
      %p38 = por %p36, %p37
      %p39 = scmp.ne.s32.totalorder %s25, %s26
      %p40 = scmp.eq.s32.totalorder %s18, 1
      %p41 = por %p39, %p40
      %p43 = scmp.ne.s32.totalorder %s26, %s42
      %p44 = scmp.eq.s32.totalorder %s18, 0
      %p45 = por %p43, %p44
      %s47 = sadd.s32 %s46, 1
      %p50 = scmp.eq.s32.totalorder %s12, 1
      %p51 = scmp.ne.s32.totalorder %s46, %s48
      %p52 = scmp.eq.s32.totalorder %s12, 0
      %p53 = por %p51, %p52
      %p54 = scmp.ne.s32.totalorder %s46, %s48
      %p55 = scmp.eq.s32.totalorder %s17, 1
      %p56 = por %p54, %p55
      %p57 = scmp.ne.s32.totalorder %s48, %s49
      %p58 = scmp.eq.s32.totalorder %s17, 0
      %p59 = por %p57, %p58
      %p60 = scmp.ne.s32.totalorder %s48, %s49
      %p61 = scmp.eq.s32.totalorder %s18, 1
      %p62 = por %p60, %p61
      %p64 = scmp.ne.s32.totalorder %s49, %s63
      %p65 = scmp.eq.s32.totalorder %s18, 0
      %p66 = por %p64, %p65
      %s68 = sadd.s32 %s67, 1
      %p71 = scmp.eq.s32.totalorder %s12, 1
      %p72 = scmp.ne.s32.totalorder %s67, %s69
      %p73 = scmp.eq.s32.totalorder %s12, 0
      %p74 = por %p72, %p73
      %p75 = scmp.ne.s32.totalorder %s67, %s69
      %p76 = scmp.eq.s32.totalorder %s17, 1
      %p77 = por %p75, %p76
      %p78 = scmp.ne.s32.totalorder %s69, %s70
      %p79 = scmp.eq.s32.totalorder %s17, 0
      %p80 = por %p78, %p79
      %p81 = scmp.ne.s32.totalorder %s69, %s70
      %p82 = scmp.eq.s32.totalorder %s18, 1
      %p83 = por %p81, %p82
      %p85 = scmp.ne.s32.totalorder %s70, %s84
      %p86 = scmp.eq.s32.totalorder %s18, 0
      %p87 = por %p85, %p86
      %s88 = ssub.s32 %s12, %s19
      %p89 = scmp.eq.s32.totalorder %s88, 0
      %s91 = sadd.s32 %s90, 1
      %s92 = scalar_select %p89, %s90, %s91
      %p95 = pneg %p89
      %p96 = scmp.eq.s32.totalorder %s12, 1
      %p97 = por %p95, %p96
      %p98 = scmp.ne.s32.totalorder %s90, %s93
      %p99 = scmp.eq.s32.totalorder %s12, 0
      %p100 = por %p98, %p99
      %p101 = scmp.ne.s32.totalorder %s90, %s93
      %p102 = scmp.eq.s32.totalorder %s17, 1
      %p103 = por %p101, %p102
      %p104 = scmp.ne.s32.totalorder %s93, %s94
      %p105 = scmp.eq.s32.totalorder %s17, 0
      %p106 = por %p104, %p105
      %p107 = scmp.ne.s32.totalorder %s93, %s94
      %p108 = scmp.eq.s32.totalorder %s18, 1
      %p109 = por %p107, %p108
      %p111 = scmp.ne.s32.totalorder %s94, %s110
      %p112 = scmp.eq.s32.totalorder %s18, 0
      %p113 = por %p111, %p112
      %p114 = scmp.le.s32.totalorder 1, %s12
      %p115 = scmp.lt.s32.totalorder %s12, 3
      %p116 = pnand %p114, %p115
      %p117 = pneg %p116
      // Predicated region
      $region9: #{tpu_custom_call.1} parent=5 // pred_check
        _
      $region10: #{tpu_custom_call.1} parent=5 // pred_check_branch
        %119 = sbr.rel (%p116) target = $region12
      $region11: #{tpu_custom_call.1} parent=5 // pred_region
        %s120 = ssub.s32 %s12, 1
        // Predicated region
        $region13: #{tpu_custom_call.1} parent=11 // pred_check
          %p121 = pneg %p59
        $region14: #{tpu_custom_call.1} parent=11 // pred_check_branch
          %123 = sbr.rel (%p121) target = $region16
        $region15: #{tpu_custom_call.1} parent=11 // pred_region
          _
        $region16: #{tpu_custom_call.1} parent=11 // pred_fallthru
          _
        // Predicated region
        $region17: #{tpu_custom_call.1} parent=11 // pred_check
          %p124 = pneg %p80
        $region18: #{tpu_custom_call.1} parent=11 // pred_check_branch
          %126 = sbr.rel (%p124) target = $region20
        $region19: #{tpu_custom_call.1} parent=11 // pred_region
          _
        $region20: #{tpu_custom_call.1} parent=11 // pred_fallthru
          _
      $region12: #{tpu_custom_call.1} parent=5 // pred_fallthru
        _
      %p127 = scmp.lt.s32.totalorder %s12, 2
      // Predicated region
      $region21: #{tpu_custom_call.1} parent=5 // pred_check
        %p128 = pneg %p127
      $region22: #{tpu_custom_call.1} parent=5 // pred_check_branch
        %130 = sbr.rel (%p128) target = $region24
      $region23: #{tpu_custom_call.1} parent=5 // pred_region
        // Predicated region
        $region25: #{tpu_custom_call.1} parent=23 // pred_check
          %p131 = pneg %p32
        $region26: #{tpu_custom_call.1} parent=23 // pred_check_branch
          %133 = sbr.rel (%p131) target = $region28
        $region27: #{tpu_custom_call.1} parent=23 // pred_region
          %p134 = scmp.lt.s32.totalorder %s12, 1
          %s135 = scalar_select %p134, %s12, 1
          %s136 = smul.addr %s135, 54
          %s137 = smul.addr %s136, 8
          %s138 = scalar_lea.vmem %s0, %s137
        $region28: #{tpu_custom_call.1} parent=23 // pred_fallthru
          _
      $region24: #{tpu_custom_call.1} parent=5 // pred_fallthru
        _
      %p139 = scmp.le.s32.totalorder 1, %s12
      %p140 = scmp.lt.s32.totalorder %s12, 3
      %p141 = pnand %p139, %p140
      %p142 = pneg %p141
      // Predicated region
      $region29: #{tpu_custom_call.1} parent=5 // pred_check
        _
      $region30: #{tpu_custom_call.1} parent=5 // pred_check_branch
        %144 = sbr.rel (%p141) target = $region32
      $region31: #{tpu_custom_call.1} parent=5 // pred_region
        %s145 = ssub.s32 %s12, 1
        %p146 = scmp.lt.s32.totalorder %s17, 1
        %s147 = scalar_select %p146, %s17, 1
        %s148 = smul.addr %s147, 54
        %s149 = smul.addr %s148, 8
        %s150 = scalar_lea.vmem %s0, %s149
        %p151 = pneg %p38
        %p152 = pneg %p35
        %p153 = pneg %p59
        %p154 = pneg %p56
        %p155 = pneg %p80
        %p156 = pneg %p77
        %p157 = pneg %p106
        %p158 = pneg %p103
        %s159 = sand.u32 %s93, 1
        %s160 = scalar_lea.sflag [#allocation3], %s159
        %s161 = sand.u32 %s93, 1
        %s162 = scalar_lea.vmem [#allocation2], %s161
        %p163 = scmp.lt.s32.totalorder %s17, 1
        %s164 = scalar_select %p163, %s17, 1
        %s165 = smul.addr %s164, 54
        %s166 = smul.addr %s165, 8
        %s167 = scalar_lea.vmem %s0, %s166
        %v169 = vld [vmem:[%s167] sm:$0xff]
        %v170 = vld [vmem:[%s167 + $0x8] sm:$0xff]
        %v171 = vld [vmem:[%s167 + $0x18] sm:$0xff]
        %v172 = vld [vmem:[%s167 + $0x20] sm:$0xff]
        %v173 = vld [vmem:[%s167 + $0x30] sm:$0xff]
        %v174 = vld [vmem:[%s167 + $0x38] sm:$0xff]
        %v175 = vld [vmem:[%s167 + $0x48] sm:$0xff]
        %v176 = vld [vmem:[%s167 + $0x50] sm:$0xff]
        %v177 = vld [vmem:[%s167 + $0x60] sm:$0xff]
        %v178 = vld [vmem:[%s167 + $0x68] sm:$0xff]
        %v179 = vld [vmem:[%s167 + $0x78] sm:$0xff]
        %v180 = vld [vmem:[%s167 + $0x80] sm:$0xff]
        %v181 = vld [vmem:[%s167 + $0x90] sm:$0xff]
        %v182 = vld [vmem:[%s167 + $0x98] sm:$0xff]
        %v183 = vld [vmem:[%s167 + $0xa8] sm:$0xff]
        %v184 = vld [vmem:[%s167 + $0xb0] sm:$0xff]
        %v185 = vld [vmem:[%s167 + $0xc0] sm:$0xff]
        %v186 = vld [vmem:[%s167 + $0xc8] sm:$0xff]
        %v187 = vld [vmem:[%s167 + $0xd8] sm:$0xff]
        %v188 = vld [vmem:[%s167 + $0xe0] sm:$0xff]
        %v189 = vld [vmem:[%s167 + $0xf0] sm:$0xff]
        %v190 = vld [vmem:[%s167 + $0xf8] sm:$0xff]
        %v191 = vld [vmem:[%s167 + $0x108] sm:$0xff]
        %v192 = vld [vmem:[%s167 + $0x110] sm:$0xff]
        %v193 = vld [vmem:[%s167 + $0x120] sm:$0xff]
        %v194 = vld [vmem:[%s167 + $0x128] sm:$0xff]
        %v195 = vld [vmem:[%s167 + $0x138] sm:$0xff]
        %v196 = vld [vmem:[%s167 + $0x140] sm:$0xff]
        %v197 = vld [vmem:[%s167 + $0x150] sm:$0xff]
        %v198 = vld [vmem:[%s167 + $0x158] sm:$0xff]
        %v199 = vld [vmem:[%s167 + $0x168] sm:$0xff]
        %v200 = vld [vmem:[%s167 + $0x170] sm:$0xff]
        %v201 = vpack.c.bf16 %v170, %v169
        %v202 = vpack.c.bf16 %v172, %v171
        %v203 = vpack.c.bf16 %v174, %v173
        %v204 = vpack.c.bf16 %v176, %v175
        %v205 = vpack.c.bf16 %v178, %v177
        %v206 = vpack.c.bf16 %v180, %v179
        %v207 = vpack.c.bf16 %v182, %v181
        %v208 = vpack.c.bf16 %v184, %v183
        %v209 = vpack.c.bf16 %v186, %v185
        %v210 = vpack.c.bf16 %v188, %v187
        %v211 = vpack.c.bf16 %v190, %v189
        %v212 = vpack.c.bf16 %v192, %v191
        %v213 = vpack.c.bf16 %v194, %v193
        %v214 = vpack.c.bf16 %v196, %v195
        %v215 = vpack.c.bf16 %v198, %v197
        %v216 = vpack.c.bf16 %v200, %v199
        %v217 = vld [vmem:[%s1] sm:$0x3]
        %v218 = vld [vmem:[%s167 + $0x1] sm:$0xff]
        %v219 = vld [vmem:[%s167 + $0x9] sm:$0xff]
        %v220 = vld [vmem:[%s167 + $0x19] sm:$0xff]
        %v221 = vld [vmem:[%s167 + $0x21] sm:$0xff]
        %v222 = vld [vmem:[%s167 + $0x31] sm:$0xff]
        %v223 = vld [vmem:[%s167 + $0x39] sm:$0xff]
        %v224 = vld [vmem:[%s167 + $0x49] sm:$0xff]
        %v225 = vld [vmem:[%s167 + $0x51] sm:$0xff]
        %v226 = vld [vmem:[%s167 + $0x61] sm:$0xff]
        %v227 = vld [vmem:[%s167 + $0x69] sm:$0xff]
        %v228 = vld [vmem:[%s167 + $0x79] sm:$0xff]
        %v229 = vld [vmem:[%s167 + $0x81] sm:$0xff]
        %v230 = vld [vmem:[%s167 + $0x91] sm:$0xff]
        %v231 = vld [vmem:[%s167 + $0x99] sm:$0xff]
        %v232 = vld [vmem:[%s167 + $0xa9] sm:$0xff]
        %v233 = vld [vmem:[%s167 + $0xb1] sm:$0xff]
        %v234 = vld [vmem:[%s167 + $0xc1] sm:$0xff]
        %v235 = vld [vmem:[%s167 + $0xc9] sm:$0xff]
        %v236 = vld [vmem:[%s167 + $0xd9] sm:$0xff]
        %v237 = vld [vmem:[%s167 + $0xe1] sm:$0xff]
        %v238 = vld [vmem:[%s167 + $0xf1] sm:$0xff]
        %v239 = vld [vmem:[%s167 + $0xf9] sm:$0xff]
        %v240 = vld [vmem:[%s167 + $0x109] sm:$0xff]
        %v241 = vld [vmem:[%s167 + $0x111] sm:$0xff]
        %v242 = vld [vmem:[%s167 + $0x121] sm:$0xff]
        %v243 = vld [vmem:[%s167 + $0x129] sm:$0xff]
        %v244 = vld [vmem:[%s167 + $0x139] sm:$0xff]
        %v245 = vld [vmem:[%s167 + $0x141] sm:$0xff]
        %v246 = vld [vmem:[%s167 + $0x151] sm:$0xff]
        %v247 = vld [vmem:[%s167 + $0x159] sm:$0xff]
        %v248 = vld [vmem:[%s167 + $0x169] sm:$0xff]
        %v249 = vld [vmem:[%s167 + $0x171] sm:$0xff]
        %v250 = vpack.c.bf16 %v219, %v218
        %v251 = vpack.c.bf16 %v221, %v220
        %v252 = vpack.c.bf16 %v223, %v222
        %v253 = vpack.c.bf16 %v225, %v224
        %v254 = vpack.c.bf16 %v227, %v226
        %v255 = vpack.c.bf16 %v229, %v228
        %v256 = vpack.c.bf16 %v231, %v230
        %v257 = vpack.c.bf16 %v233, %v232
        %v258 = vpack.c.bf16 %v235, %v234
        %v259 = vpack.c.bf16 %v237, %v236
        %v260 = vpack.c.bf16 %v239, %v238
        %v261 = vpack.c.bf16 %v241, %v240
        %v262 = vpack.c.bf16 %v243, %v242
        %v263 = vpack.c.bf16 %v245, %v244
        %v264 = vpack.c.bf16 %v247, %v246
        %v265 = vpack.c.bf16 %v249, %v248
        %s266 = scalar_lea.vmem %s1, 2
        %v267 = vld [vmem:[%s266] sm:$0x3]
        %vm268 = vcmask 31744
        %v270 = vsel %vm268, %v250, 0
        %v273 = vsel %vm268, %v251, 0
        %v276 = vsel %vm268, %v252, 0
        %v279 = vsel %vm268, %v253, 0
        %v282 = vsel %vm268, %v254, 0
        %v285 = vsel %vm268, %v255, 0
        %v288 = vsel %vm268, %v256, 0
        %v291 = vsel %vm268, %v257, 0
        %v294 = vsel %vm268, %v258, 0
        %v297 = vsel %vm268, %v259, 0
        %v300 = vsel %vm268, %v260, 0
        %v303 = vsel %vm268, %v261, 0
        %v306 = vsel %vm268, %v262, 0
        %v309 = vsel %vm268, %v263, 0
        %v312 = vsel %vm268, %v264, 0
        %v315 = vsel %vm268, %v265, 0
        %vm317 = vcmask 1041408
        %v319 = vsel %vm317, %v267, 0
        %321 = vmatprep.subr.bf16.mxu0 0
        %322 = vmatpush1.bf16.msra.mxu0 %v319
        %323 = vmatprep.subr.bf16.mxu0 0
        %324 = vmatpush1.bf16.msra.mxu0 0
        %325 = vmatprep.subr.bf16.mxu0 0
        %326 = vmatpush1.bf16.msra.mxu0 0
        %327 = vmatprep.subr.bf16.mxu0 0
        %328 = vmatpush1.bf16.msra.mxu0 0
        %329 = vmatprep.subr.bf16.mxu0 0
        %330 = vmatpush1.bf16.msra.mxu0 0
        %331 = vmatprep.subr.bf16.mxu0 0
        %332 = vmatpush1.bf16.msra.mxu0 0
        %333 = vmatprep.subr.bf16.mxu0 0
        %334 = vmatpush1.bf16.msra.mxu0 0
        %335 = vmatprep.subr.bf16.mxu0 0
        %336 = vmatpush1.bf16.msra.mxu0 0
        %337 = vmatprep.subr.bf16.mxu0 0
        %338 = vmatpush1.bf16.msra.mxu0 0
        %339 = vmatprep.subr.bf16.mxu0 0
        %340 = vmatpush1.bf16.msra.mxu0 0
        %341 = vmatprep.subr.bf16.mxu0 0
        %342 = vmatpush1.bf16.msra.mxu0 0
        %343 = vmatprep.subr.bf16.mxu0 0
        %344 = vmatpush1.bf16.msra.mxu0 0
        %345 = vmatprep.subr.bf16.mxu0 0
        %346 = vmatpush1.bf16.msra.mxu0 0
        %347 = vmatprep.subr.bf16.mxu0 0
        %348 = vmatpush1.bf16.msra.mxu0 0
        %349 = vmatprep.subr.bf16.mxu0 0
        %350 = vmatpush1.bf16.msra.mxu0 0
        %351 = vmatprep.subr.bf16.mxu0 0
        %352 = vmatpush1.bf16.msra.mxu0 0
        %353 = vmatprep.mubr.bf16.mxu0 0
        %354 = vmatmul.mubr.bf16.gmra.mrb[0].mxu0 %v270
        %v355 = vpop.f32.mrb[0].mxu0
        %v356 = vadd.f32 0.0, %v355
        %v357 = vpop.f32.mrb[0].mxu0
        %v358 = vpop.f32.mrb[0].mxu0
        %v359 = vadd.f32 0.0, %v358
        %v360 = vpop.f32.mrb[0].mxu0
        %361 = vmatprep.mubr.bf16.mxu0 0
        %362 = vmatmul.mubr.bf16.gmra.mrb[0].mxu0 %v273
        %v363 = vpop.f32.mrb[0].mxu0
        %v364 = vadd.f32 0.0, %v363
        %v365 = vpop.f32.mrb[0].mxu0
        %v366 = vpop.f32.mrb[0].mxu0
        %v367 = vadd.f32 0.0, %v366
        %v368 = vpop.f32.mrb[0].mxu0
        %369 = vmatprep.mubr.bf16.mxu0 0
        %370 = vmatmul.mubr.bf16.gmra.mrb[0].mxu0 %v276
        %v371 = vpop.f32.mrb[0].mxu0
        %v372 = vadd.f32 0.0, %v371
        %v373 = vpop.f32.mrb[0].mxu0
        %v374 = vpop.f32.mrb[0].mxu0
        %v375 = vadd.f32 0.0, %v374
        %v376 = vpop.f32.mrb[0].mxu0
        %377 = vmatprep.mubr.bf16.mxu0 0
        %378 = vmatmul.mubr.bf16.gmra.mrb[0].mxu0 %v279
        %v379 = vpop.f32.mrb[0].mxu0
        %v380 = vadd.f32 0.0, %v379
        %v381 = vpop.f32.mrb[0].mxu0
        %v382 = vpop.f32.mrb[0].mxu0
        %v383 = vadd.f32 0.0, %v382
        %v384 = vpop.f32.mrb[0].mxu0
        %385 = vmatprep.mubr.bf16.mxu0 0
        %386 = vmatmul.mubr.bf16.gmra.mrb[0].mxu0 %v282
        %v387 = vpop.f32.mrb[0].mxu0
        %v388 = vadd.f32 0.0, %v387
        %v389 = vpop.f32.mrb[0].mxu0
        %v390 = vpop.f32.mrb[0].mxu0
        %v391 = vadd.f32 0.0, %v390
        %v392 = vpop.f32.mrb[0].mxu0
        %393 = vmatprep.mubr.bf16.mxu0 0
        %394 = vmatmul.mubr.bf16.gmra.mrb[0].mxu0 %v285
        %v395 = vpop.f32.mrb[0].mxu0
        %v396 = vadd.f32 0.0, %v395
        %v397 = vpop.f32.mrb[0].mxu0
        %v398 = vpop.f32.mrb[0].mxu0
        %v399 = vadd.f32 0.0, %v398
        %v400 = vpop.f32.mrb[0].mxu0
        %401 = vmatprep.mubr.bf16.mxu0 0
        %402 = vmatmul.mubr.bf16.gmra.mrb[0].mxu0 %v288
        %v403 = vpop.f32.mrb[0].mxu0
        %v404 = vadd.f32 0.0, %v403
        %v405 = vpop.f32.mrb[0].mxu0
        %v406 = vpop.f32.mrb[0].mxu0
        %v407 = vadd.f32 0.0, %v406
        %v408 = vpop.f32.mrb[0].mxu0
        %409 = vmatprep.mubr.bf16.mxu0 0
        %410 = vmatmul.mubr.bf16.gmra.mrb[0].mxu0 %v291
        %v411 = vpop.f32.mrb[0].mxu0
        %v412 = vadd.f32 0.0, %v411
        %v413 = vpop.f32.mrb[0].mxu0
        %v414 = vpop.f32.mrb[0].mxu0
        %v415 = vadd.f32 0.0, %v414
        %v416 = vpop.f32.mrb[0].mxu0
        %417 = vmatprep.mubr.bf16.mxu0 0
        %418 = vmatmul.mubr.bf16.gmra.mrb[0].mxu0 %v294
        %v419 = vpop.f32.mrb[0].mxu0
        %v420 = vadd.f32 0.0, %v419
        %v421 = vpop.f32.mrb[0].mxu0
        %v422 = vpop.f32.mrb[0].mxu0
        %v423 = vadd.f32 0.0, %v422
        %v424 = vpop.f32.mrb[0].mxu0
        %425 = vmatprep.mubr.bf16.mxu0 0
        %426 = vmatmul.mubr.bf16.gmra.mrb[0].mxu0 %v297
        %v427 = vpop.f32.mrb[0].mxu0
        %v428 = vadd.f32 0.0, %v427
        %v429 = vpop.f32.mrb[0].mxu0
        %v430 = vpop.f32.mrb[0].mxu0
        %v431 = vadd.f32 0.0, %v430
        %v432 = vpop.f32.mrb[0].mxu0
        %433 = vmatprep.mubr.bf16.mxu0 0
        %434 = vmatmul.mubr.bf16.gmra.mrb[0].mxu0 %v300
        %v435 = vpop.f32.mrb[0].mxu0
        %v436 = vadd.f32 0.0, %v435
        %v437 = vpop.f32.mrb[0].mxu0
        %v438 = vpop.f32.mrb[0].mxu0
        %v439 = vadd.f32 0.0, %v438
        %v440 = vpop.f32.mrb[0].mxu0
        %441 = vmatprep.mubr.bf16.mxu0 0
        %442 = vmatmul.mubr.bf16.gmra.mrb[0].mxu0 %v303
        %v443 = vpop.f32.mrb[0].mxu0
        %v444 = vadd.f32 0.0, %v443
        %v445 = vpop.f32.mrb[0].mxu0
        %v446 = vpop.f32.mrb[0].mxu0
        %v447 = vadd.f32 0.0, %v446
        %v448 = vpop.f32.mrb[0].mxu0
        %449 = vmatprep.mubr.bf16.mxu0 0
        %450 = vmatmul.mubr.bf16.gmra.mrb[0].mxu0 %v306
        %v451 = vpop.f32.mrb[0].mxu0
        %v452 = vadd.f32 0.0, %v451
        %v453 = vpop.f32.mrb[0].mxu0
        %v454 = vpop.f32.mrb[0].mxu0
        %v455 = vadd.f32 0.0, %v454
        %v456 = vpop.f32.mrb[0].mxu0
        %457 = vmatprep.mubr.bf16.mxu0 0
        %458 = vmatmul.mubr.bf16.gmra.mrb[0].mxu0 %v309
        %v459 = vpop.f32.mrb[0].mxu0
        %v460 = vadd.f32 0.0, %v459
        %v461 = vpop.f32.mrb[0].mxu0
        %v462 = vpop.f32.mrb[0].mxu0
        %v463 = vadd.f32 0.0, %v462
        %v464 = vpop.f32.mrb[0].mxu0
        %465 = vmatprep.mubr.bf16.mxu0 0
        %466 = vmatmul.mubr.bf16.gmra.mrb[0].mxu0 %v312
        %v467 = vpop.f32.mrb[0].mxu0
        %v468 = vadd.f32 0.0, %v467
        %v469 = vpop.f32.mrb[0].mxu0
        %v470 = vpop.f32.mrb[0].mxu0
        %v471 = vadd.f32 0.0, %v470
        %v472 = vpop.f32.mrb[0].mxu0
        %473 = vmatprep.mubr.bf16.mxu0 0
        %474 = vmatmul.mubr.bf16.gmra.mrb[0].mxu0 %v315
        %v475 = vpop.f32.mrb[0].mxu0
        %v476 = vadd.f32 0.0, %v475
        %v477 = vpop.f32.mrb[0].mxu0
        %v478 = vpop.f32.mrb[0].mxu0
        %v479 = vadd.f32 0.0, %v478
        %v480 = vpop.f32.mrb[0].mxu0
        %481 = vdwg.mxu0
        %v483 = vsel %vm268, %v201, 0
        %v486 = vsel %vm268, %v202, 0
        %v489 = vsel %vm268, %v203, 0
        %v492 = vsel %vm268, %v204, 0
        %v495 = vsel %vm268, %v205, 0
        %v498 = vsel %vm268, %v206, 0
        %v501 = vsel %vm268, %v207, 0
        %v504 = vsel %vm268, %v208, 0
        %v507 = vsel %vm268, %v209, 0
        %v510 = vsel %vm268, %v210, 0
        %v513 = vsel %vm268, %v211, 0
        %v516 = vsel %vm268, %v212, 0
        %v519 = vsel %vm268, %v213, 0
        %v522 = vsel %vm268, %v214, 0
        %v525 = vsel %vm268, %v215, 0
        %v528 = vsel %vm268, %v216, 0
        %v531 = vsel %vm317, %v217, 0
        %533 = vmatprep.subr.bf16.mxu0 0
        %534 = vmatpush1.bf16.msra.mxu0 %v531
        %535 = vmatprep.subr.bf16.mxu0 0
        %536 = vmatpush1.bf16.msra.mxu0 0
        %537 = vmatprep.subr.bf16.mxu0 0
        %538 = vmatpush1.bf16.msra.mxu0 0
        %539 = vmatprep.subr.bf16.mxu0 0
        %540 = vmatpush1.bf16.msra.mxu0 0
        %541 = vmatprep.subr.bf16.mxu0 0
        %542 = vmatpush1.bf16.msra.mxu0 0
        %543 = vmatprep.subr.bf16.mxu0 0
        %544 = vmatpush1.bf16.msra.mxu0 0
        %545 = vmatprep.subr.bf16.mxu0 0
        %546 = vmatpush1.bf16.msra.mxu0 0
        %547 = vmatprep.subr.bf16.mxu0 0
        %548 = vmatpush1.bf16.msra.mxu0 0
        %549 = vmatprep.subr.bf16.mxu0 0
        %550 = vmatpush1.bf16.msra.mxu0 0
        %551 = vmatprep.subr.bf16.mxu0 0
        %552 = vmatpush1.bf16.msra.mxu0 0
        %553 = vmatprep.subr.bf16.mxu0 0
        %554 = vmatpush1.bf16.msra.mxu0 0
        %555 = vmatprep.subr.bf16.mxu0 0
        %556 = vmatpush1.bf16.msra.mxu0 0
        %557 = vmatprep.subr.bf16.mxu0 0
        %558 = vmatpush1.bf16.msra.mxu0 0
        %559 = vmatprep.subr.bf16.mxu0 0
        %560 = vmatpush1.bf16.msra.mxu0 0
        %561 = vmatprep.subr.bf16.mxu0 0
        %562 = vmatpush1.bf16.msra.mxu0 0
        %563 = vmatprep.subr.bf16.mxu0 0
        %564 = vmatpush1.bf16.msra.mxu0 0
        %565 = vmatprep.mubr.bf16.mxu0 0
        %566 = vmatmul.mubr.bf16.gmra.mrb[0].mxu0 %v483
        %v567 = vpop.f32.mrb[0].mxu0
        %v568 = vadd.f32 %v356, %v567
        %v569 = vpop.f32.mrb[0].mxu0
        %v570 = vpop.f32.mrb[0].mxu0
        %v571 = vadd.f32 %v359, %v570
        %v572 = vpop.f32.mrb[0].mxu0
        %573 = vmatprep.mubr.bf16.mxu0 0
        %574 = vmatmul.mubr.bf16.gmra.mrb[0].mxu0 %v486
        %v575 = vpop.f32.mrb[0].mxu0
        %v576 = vadd.f32 %v364, %v575
        %v577 = vpop.f32.mrb[0].mxu0
        %v578 = vpop.f32.mrb[0].mxu0
        %v579 = vadd.f32 %v367, %v578
        %v580 = vpop.f32.mrb[0].mxu0
        %581 = vmatprep.mubr.bf16.mxu0 0
        %582 = vmatmul.mubr.bf16.gmra.mrb[0].mxu0 %v489
        %v583 = vpop.f32.mrb[0].mxu0
        %v584 = vadd.f32 %v372, %v583
        %v585 = vpop.f32.mrb[0].mxu0
        %v586 = vpop.f32.mrb[0].mxu0
        %v587 = vadd.f32 %v375, %v586
        %v588 = vpop.f32.mrb[0].mxu0
        %589 = vmatprep.mubr.bf16.mxu0 0
        %590 = vmatmul.mubr.bf16.gmra.mrb[0].mxu0 %v492
        %v591 = vpop.f32.mrb[0].mxu0
        %v592 = vadd.f32 %v380, %v591
        %v593 = vpop.f32.mrb[0].mxu0
        %v594 = vpop.f32.mrb[0].mxu0
        %v595 = vadd.f32 %v383, %v594
        %v596 = vpop.f32.mrb[0].mxu0
        %597 = vmatprep.mubr.bf16.mxu0 0
        %598 = vmatmul.mubr.bf16.gmra.mrb[0].mxu0 %v495
        %v599 = vpop.f32.mrb[0].mxu0
        %v600 = vadd.f32 %v388, %v599
        %v601 = vpop.f32.mrb[0].mxu0
        %v602 = vpop.f32.mrb[0].mxu0
        %v603 = vadd.f32 %v391, %v602
        %v604 = vpop.f32.mrb[0].mxu0
        %605 = vmatprep.mubr.bf16.mxu0 0
        %606 = vmatmul.mubr.bf16.gmra.mrb[0].mxu0 %v498
        %v607 = vpop.f32.mrb[0].mxu0
        %v608 = vadd.f32 %v396, %v607
        %v609 = vpop.f32.mrb[0].mxu0
        %v610 = vpop.f32.mrb[0].mxu0
        %v611 = vadd.f32 %v399, %v610
        %v612 = vpop.f32.mrb[0].mxu0
        %613 = vmatprep.mubr.bf16.mxu0 0
        %614 = vmatmul.mubr.bf16.gmra.mrb[0].mxu0 %v501
        %v615 = vpop.f32.mrb[0].mxu0
        %v616 = vadd.f32 %v404, %v615
        %v617 = vpop.f32.mrb[0].mxu0
        %v618 = vpop.f32.mrb[0].mxu0
        %v619 = vadd.f32 %v407, %v618
        %v620 = vpop.f32.mrb[0].mxu0
        %621 = vmatprep.mubr.bf16.mxu0 0
        %622 = vmatmul.mubr.bf16.gmra.mrb[0].mxu0 %v504
        %v623 = vpop.f32.mrb[0].mxu0
        %v624 = vadd.f32 %v412, %v623
        %v625 = vpop.f32.mrb[0].mxu0
        %v626 = vpop.f32.mrb[0].mxu0
        %v627 = vadd.f32 %v415, %v626
        %v628 = vpop.f32.mrb[0].mxu0
        %629 = vmatprep.mubr.bf16.mxu0 0
        %630 = vmatmul.mubr.bf16.gmra.mrb[0].mxu0 %v507
        %v631 = vpop.f32.mrb[0].mxu0
        %v632 = vadd.f32 %v420, %v631
        %v633 = vpop.f32.mrb[0].mxu0
        %v634 = vpop.f32.mrb[0].mxu0
        %v635 = vadd.f32 %v423, %v634
        %v636 = vpop.f32.mrb[0].mxu0
        %637 = vmatprep.mubr.bf16.mxu0 0
        %638 = vmatmul.mubr.bf16.gmra.mrb[0].mxu0 %v510
        %v639 = vpop.f32.mrb[0].mxu0
        %v640 = vadd.f32 %v428, %v639
        %v641 = vpop.f32.mrb[0].mxu0
        %v642 = vpop.f32.mrb[0].mxu0
        %v643 = vadd.f32 %v431, %v642
        %v644 = vpop.f32.mrb[0].mxu0
        %645 = vmatprep.mubr.bf16.mxu0 0
        %646 = vmatmul.mubr.bf16.gmra.mrb[0].mxu0 %v513
        %v647 = vpop.f32.mrb[0].mxu0
        %v648 = vadd.f32 %v436, %v647
        %v649 = vpop.f32.mrb[0].mxu0
        %v650 = vpop.f32.mrb[0].mxu0
        %v651 = vadd.f32 %v439, %v650
        %v652 = vpop.f32.mrb[0].mxu0
        %653 = vmatprep.mubr.bf16.mxu0 0
        %654 = vmatmul.mubr.bf16.gmra.mrb[0].mxu0 %v516
        %v655 = vpop.f32.mrb[0].mxu0
        %v656 = vadd.f32 %v444, %v655
        %v657 = vpop.f32.mrb[0].mxu0
        %v658 = vpop.f32.mrb[0].mxu0
        %v659 = vadd.f32 %v447, %v658
        %v660 = vpop.f32.mrb[0].mxu0
        %661 = vmatprep.mubr.bf16.mxu0 0
        %662 = vmatmul.mubr.bf16.gmra.mrb[0].mxu0 %v519
        %v663 = vpop.f32.mrb[0].mxu0
        %v664 = vadd.f32 %v452, %v663
        %v665 = vpop.f32.mrb[0].mxu0
        %v666 = vpop.f32.mrb[0].mxu0
        %v667 = vadd.f32 %v455, %v666
        %v668 = vpop.f32.mrb[0].mxu0
        %669 = vmatprep.mubr.bf16.mxu0 0
        %670 = vmatmul.mubr.bf16.gmra.mrb[0].mxu0 %v522
        %v671 = vpop.f32.mrb[0].mxu0
        %v672 = vadd.f32 %v460, %v671
        %v673 = vpop.f32.mrb[0].mxu0
        %v674 = vpop.f32.mrb[0].mxu0
        %v675 = vadd.f32 %v463, %v674
        %v676 = vpop.f32.mrb[0].mxu0
        %677 = vmatprep.mubr.bf16.mxu0 0
        %678 = vmatmul.mubr.bf16.gmra.mrb[0].mxu0 %v525
        %v679 = vpop.f32.mrb[0].mxu0
        %v680 = vadd.f32 %v468, %v679
        %v681 = vpop.f32.mrb[0].mxu0
        %v682 = vpop.f32.mrb[0].mxu0
        %v683 = vadd.f32 %v471, %v682
        %v684 = vpop.f32.mrb[0].mxu0
        %685 = vmatprep.mubr.bf16.mxu0 0
        %686 = vmatmul.mubr.bf16.gmra.mrb[0].mxu0 %v528
        %v687 = vpop.f32.mrb[0].mxu0
        %v688 = vadd.f32 %v476, %v687
        %v689 = vpop.f32.mrb[0].mxu0
        %v690 = vpop.f32.mrb[0].mxu0
        %v691 = vadd.f32 %v479, %v690
        %v692 = vpop.f32.mrb[0].mxu0
        %693 = vdwg.mxu0
        %v694 = vld [vmem:[%s167 + $0x2] sm:$0xff]
        %v695 = vld [vmem:[%s167 + $0xa] sm:$0xff]
        %v696 = vld [vmem:[%s167 + $0x1a] sm:$0xff]
        %v697 = vld [vmem:[%s167 + $0x22] sm:$0xff]
        %v698 = vld [vmem:[%s167 + $0x32] sm:$0xff]
        %v699 = vld [vmem:[%s167 + $0x3a] sm:$0xff]
        %v700 = vld [vmem:[%s167 + $0x4a] sm:$0xff]
        %v701 = vld [vmem:[%s167 + $0x52] sm:$0xff]
        %v702 = vld [vmem:[%s167 + $0x62] sm:$0xff]
        %v703 = vld [vmem:[%s167 + $0x6a] sm:$0xff]
        %v704 = vld [vmem:[%s167 + $0x7a] sm:$0xff]
        %v705 = vld [vmem:[%s167 + $0x82] sm:$0xff]
        %v706 = vld [vmem:[%s167 + $0x92] sm:$0xff]
        %v707 = vld [vmem:[%s167 + $0x9a] sm:$0xff]
        %v708 = vld [vmem:[%s167 + $0xaa] sm:$0xff]
        %v709 = vld [vmem:[%s167 + $0xb2] sm:$0xff]
        %v710 = vld [vmem:[%s167 + $0xc2] sm:$0xff]
        %v711 = vld [vmem:[%s167 + $0xca] sm:$0xff]
        %v712 = vld [vmem:[%s167 + $0xda] sm:$0xff]
        %v713 = vld [vmem:[%s167 + $0xe2] sm:$0xff]
        %v714 = vld [vmem:[%s167 + $0xf2] sm:$0xff]
        %v715 = vld [vmem:[%s167 + $0xfa] sm:$0xff]
        %v716 = vld [vmem:[%s167 + $0x10a] sm:$0xff]
        %v717 = vld [vmem:[%s167 + $0x112] sm:$0xff]
        %v718 = vld [vmem:[%s167 + $0x122] sm:$0xff]
        %v719 = vld [vmem:[%s167 + $0x12a] sm:$0xff]
        %v720 = vld [vmem:[%s167 + $0x13a] sm:$0xff]
        %v721 = vld [vmem:[%s167 + $0x142] sm:$0xff]
        %v722 = vld [vmem:[%s167 + $0x152] sm:$0xff]
        %v723 = vld [vmem:[%s167 + $0x15a] sm:$0xff]
        %v724 = vld [vmem:[%s167 + $0x16a] sm:$0xff]
        %v725 = vld [vmem:[%s167 + $0x172] sm:$0xff]
        %v726 = vpack.c.bf16 %v695, %v694
        %v727 = vpack.c.bf16 %v697, %v696
        %v728 = vpack.c.bf16 %v699, %v698
        %v729 = vpack.c.bf16 %v701, %v700
        %v730 = vpack.c.bf16 %v703, %v702
        %v731 = vpack.c.bf16 %v705, %v704
        %v732 = vpack.c.bf16 %v707, %v706
        %v733 = vpack.c.bf16 %v709, %v708
        %v734 = vpack.c.bf16 %v711, %v710
        %v735 = vpack.c.bf16 %v713, %v712
        %v736 = vpack.c.bf16 %v715, %v714
        %v737 = vpack.c.bf16 %v717, %v716
        %v738 = vpack.c.bf16 %v719, %v718
        %v739 = vpack.c.bf16 %v721, %v720
        %v740 = vpack.c.bf16 %v723, %v722
        %v741 = vpack.c.bf16 %v725, %v724
        %s742 = scalar_lea.vmem %s1, 4
        %v743 = vld [vmem:[%s742] sm:$0x3]
        %v745 = vsel %vm268, %v726, 0
        %v748 = vsel %vm268, %v727, 0
        %v751 = vsel %vm268, %v728, 0
        %v754 = vsel %vm268, %v729, 0
        %v757 = vsel %vm268, %v730, 0
        %v760 = vsel %vm268, %v731, 0
        %v763 = vsel %vm268, %v732, 0
        %v766 = vsel %vm268, %v733, 0
        %v769 = vsel %vm268, %v734, 0
        %v772 = vsel %vm268, %v735, 0
        %v775 = vsel %vm268, %v736, 0
        %v778 = vsel %vm268, %v737, 0
        %v781 = vsel %vm268, %v738, 0
        %v784 = vsel %vm268, %v739, 0
        %v787 = vsel %vm268, %v740, 0
        %v790 = vsel %vm268, %v741, 0
        %v793 = vsel %vm317, %v743, 0
        %795 = vmatprep.subr.bf16.mxu0 0
        %796 = vmatpush1.bf16.msra.mxu0 %v793
        %797 = vmatprep.subr.bf16.mxu0 0
        %798 = vmatpush1.bf16.msra.mxu0 0
        %799 = vmatprep.subr.bf16.mxu0 0
        %800 = vmatpush1.bf16.msra.mxu0 0
        %801 = vmatprep.subr.bf16.mxu0 0
        %802 = vmatpush1.bf16.msra.mxu0 0
        %803 = vmatprep.subr.bf16.mxu0 0
        %804 = vmatpush1.bf16.msra.mxu0 0
        %805 = vmatprep.subr.bf16.mxu0 0
        %806 = vmatpush1.bf16.msra.mxu0 0
        %807 = vmatprep.subr.bf16.mxu0 0
        %808 = vmatpush1.bf16.msra.mxu0 0
        %809 = vmatprep.subr.bf16.mxu0 0
        %810 = vmatpush1.bf16.msra.mxu0 0
        %811 = vmatprep.subr.bf16.mxu0 0
        %812 = vmatpush1.bf16.msra.mxu0 0
        %813 = vmatprep.subr.bf16.mxu0 0
        %814 = vmatpush1.bf16.msra.mxu0 0
        %815 = vmatprep.subr.bf16.mxu0 0
        %816 = vmatpush1.bf16.msra.mxu0 0
        %817 = vmatprep.subr.bf16.mxu0 0
        %818 = vmatpush1.bf16.msra.mxu0 0
        %819 = vmatprep.subr.bf16.mxu0 0
        %820 = vmatpush1.bf16.msra.mxu0 0
        %821 = vmatprep.subr.bf16.mxu0 0
        %822 = vmatpush1.bf16.msra.mxu0 0
        %823 = vmatprep.subr.bf16.mxu0 0
        %824 = vmatpush1.bf16.msra.mxu0 0
        %825 = vmatprep.subr.bf16.mxu0 0
        %826 = vmatpush1.bf16.msra.mxu0 0
        %827 = vmatprep.mubr.bf16.mxu0 0
        %828 = vmatmul.mubr.bf16.gmra.mrb[0].mxu0 %v745
        %v829 = vpop.f32.mrb[0].mxu0
        %v830 = vadd.f32 0.0, %v829
        %v831 = vpop.f32.mrb[0].mxu0
        %v832 = vpop.f32.mrb[0].mxu0
        %v833 = vadd.f32 0.0, %v832
        %v834 = vpop.f32.mrb[0].mxu0
        %835 = vmatprep.mubr.bf16.mxu0 0
        %836 = vmatmul.mubr.bf16.gmra.mrb[0].mxu0 %v748
        %v837 = vpop.f32.mrb[0].mxu0
        %v838 = vadd.f32 0.0, %v837
        %v839 = vpop.f32.mrb[0].mxu0
        %v840 = vpop.f32.mrb[0].mxu0
        %v841 = vadd.f32 0.0, %v840
        %v842 = vpop.f32.mrb[0].mxu0
        %843 = vmatprep.mubr.bf16.mxu0 0
        %844 = vmatmul.mubr.bf16.gmra.mrb[0].mxu0 %v751
        %v845 = vpop.f32.mrb[0].mxu0
        %v846 = vadd.f32 0.0, %v845
        %v847 = vpop.f32.mrb[0].mxu0
        %v848 = vpop.f32.mrb[0].mxu0
        %v849 = vadd.f32 0.0, %v848
        %v850 = vpop.f32.mrb[0].mxu0
        %851 = vmatprep.mubr.bf16.mxu0 0
        %852 = vmatmul.mubr.bf16.gmra.mrb[0].mxu0 %v754
        %v853 = vpop.f32.mrb[0].mxu0
        %v854 = vadd.f32 0.0, %v853
        %v855 = vpop.f32.mrb[0].mxu0
        %v856 = vpop.f32.mrb[0].mxu0
        %v857 = vadd.f32 0.0, %v856
        %v858 = vpop.f32.mrb[0].mxu0
        %859 = vmatprep.mubr.bf16.mxu0 0
        %860 = vmatmul.mubr.bf16.gmra.mrb[0].mxu0 %v757
        %v861 = vpop.f32.mrb[0].mxu0
        %v862 = vadd.f32 0.0, %v861
        %v863 = vpop.f32.mrb[0].mxu0
        %v864 = vpop.f32.mrb[0].mxu0
        %v865 = vadd.f32 0.0, %v864
        %v866 = vpop.f32.mrb[0].mxu0
        %867 = vmatprep.mubr.bf16.mxu0 0
        %868 = vmatmul.mubr.bf16.gmra.mrb[0].mxu0 %v760
        %v869 = vpop.f32.mrb[0].mxu0
        %v870 = vadd.f32 0.0, %v869
        %v871 = vpop.f32.mrb[0].mxu0
        %v872 = vpop.f32.mrb[0].mxu0
        %v873 = vadd.f32 0.0, %v872
        %v874 = vpop.f32.mrb[0].mxu0
        %875 = vmatprep.mubr.bf16.mxu0 0
        %876 = vmatmul.mubr.bf16.gmra.mrb[0].mxu0 %v763
        %v877 = vpop.f32.mrb[0].mxu0
        %v878 = vadd.f32 0.0, %v877
        %v879 = vpop.f32.mrb[0].mxu0
        %v880 = vpop.f32.mrb[0].mxu0
        %v881 = vadd.f32 0.0, %v880
        %v882 = vpop.f32.mrb[0].mxu0
        %883 = vmatprep.mubr.bf16.mxu0 0
        %884 = vmatmul.mubr.bf16.gmra.mrb[0].mxu0 %v766
        %v885 = vpop.f32.mrb[0].mxu0
        %v886 = vadd.f32 0.0, %v885
        %v887 = vpop.f32.mrb[0].mxu0
        %v888 = vpop.f32.mrb[0].mxu0
        %v889 = vadd.f32 0.0, %v888
        %v890 = vpop.f32.mrb[0].mxu0
        %891 = vmatprep.mubr.bf16.mxu0 0
        %892 = vmatmul.mubr.bf16.gmra.mrb[0].mxu0 %v769
        %v893 = vpop.f32.mrb[0].mxu0
        %v894 = vadd.f32 0.0, %v893
        %v895 = vpop.f32.mrb[0].mxu0
        %v896 = vpop.f32.mrb[0].mxu0
        %v897 = vadd.f32 0.0, %v896
        %v898 = vpop.f32.mrb[0].mxu0
        %899 = vmatprep.mubr.bf16.mxu0 0
        %900 = vmatmul.mubr.bf16.gmra.mrb[0].mxu0 %v772
        %v901 = vpop.f32.mrb[0].mxu0
        %v902 = vadd.f32 0.0, %v901
        %v903 = vpop.f32.mrb[0].mxu0
        %v904 = vpop.f32.mrb[0].mxu0
        %v905 = vadd.f32 0.0, %v904
        %v906 = vpop.f32.mrb[0].mxu0
        %907 = vmatprep.mubr.bf16.mxu0 0
        %908 = vmatmul.mubr.bf16.gmra.mrb[0].mxu0 %v775
        %v909 = vpop.f32.mrb[0].mxu0
        %v910 = vadd.f32 0.0, %v909
        %v911 = vpop.f32.mrb[0].mxu0
        %v912 = vpop.f32.mrb[0].mxu0
        %v913 = vadd.f32 0.0, %v912
        %v914 = vpop.f32.mrb[0].mxu0
        %915 = vmatprep.mubr.bf16.mxu0 0
        %916 = vmatmul.mubr.bf16.gmra.mrb[0].mxu0 %v778
        %v917 = vpop.f32.mrb[0].mxu0
        %v918 = vadd.f32 0.0, %v917
        %v919 = vpop.f32.mrb[0].mxu0
        %v920 = vpop.f32.mrb[0].mxu0
        %v921 = vadd.f32 0.0, %v920
        %v922 = vpop.f32.mrb[0].mxu0
        %923 = vmatprep.mubr.bf16.mxu0 0
        %924 = vmatmul.mubr.bf16.gmra.mrb[0].mxu0 %v781
        %v925 = vpop.f32.mrb[0].mxu0
        %v926 = vadd.f32 0.0, %v925
        %v927 = vpop.f32.mrb[0].mxu0
        %v928 = vpop.f32.mrb[0].mxu0
        %v929 = vadd.f32 0.0, %v928
        %v930 = vpop.f32.mrb[0].mxu0
        %931 = vmatprep.mubr.bf16.mxu0 0
        %932 = vmatmul.mubr.bf16.gmra.mrb[0].mxu0 %v784
        %v933 = vpop.f32.mrb[0].mxu0
        %v934 = vadd.f32 0.0, %v933
        %v935 = vpop.f32.mrb[0].mxu0
        %v936 = vpop.f32.mrb[0].mxu0
        %v937 = vadd.f32 0.0, %v936
        %v938 = vpop.f32.mrb[0].mxu0
        %939 = vmatprep.mubr.bf16.mxu0 0
        %940 = vmatmul.mubr.bf16.gmra.mrb[0].mxu0 %v787
        %v941 = vpop.f32.mrb[0].mxu0
        %v942 = vadd.f32 0.0, %v941
        %v943 = vpop.f32.mrb[0].mxu0
        %v944 = vpop.f32.mrb[0].mxu0
        %v945 = vadd.f32 0.0, %v944
        %v946 = vpop.f32.mrb[0].mxu0
        %947 = vmatprep.mubr.bf16.mxu0 0
        %948 = vmatmul.mubr.bf16.gmra.mrb[0].mxu0 %v790
        %v949 = vpop.f32.mrb[0].mxu0
        %v950 = vadd.f32 0.0, %v949
        %v951 = vpop.f32.mrb[0].mxu0
        %v952 = vpop.f32.mrb[0].mxu0
        %v953 = vadd.f32 0.0, %v952
        %v954 = vpop.f32.mrb[0].mxu0
        %955 = vdwg.mxu0
        %v956 = vadd.f32 %v568, %v830
        %v957 = vadd.f32 %v571, %v833
        %v958 = vadd.f32 %v576, %v838
        %v959 = vadd.f32 %v579, %v841
        %v960 = vadd.f32 %v584, %v846
        %v961 = vadd.f32 %v587, %v849
        %v962 = vadd.f32 %v592, %v854
        %v963 = vadd.f32 %v595, %v857
        %v964 = vadd.f32 %v600, %v862
        %v965 = vadd.f32 %v603, %v865
        %v966 = vadd.f32 %v608, %v870
        %v967 = vadd.f32 %v611, %v873
        %v968 = vadd.f32 %v616, %v878
        %v969 = vadd.f32 %v619, %v881
        %v970 = vadd.f32 %v624, %v886
        %v971 = vadd.f32 %v627, %v889
        %v972 = vadd.f32 %v632, %v894
        %v973 = vadd.f32 %v635, %v897
        %v974 = vadd.f32 %v640, %v902
        %v975 = vadd.f32 %v643, %v905
        %v976 = vadd.f32 %v648, %v910
        %v977 = vadd.f32 %v651, %v913
        %v978 = vadd.f32 %v656, %v918
        %v979 = vadd.f32 %v659, %v921
        %v980 = vadd.f32 %v664, %v926
        %v981 = vadd.f32 %v667, %v929
        %v982 = vadd.f32 %v672, %v934
        %v983 = vadd.f32 %v675, %v937
        %v984 = vadd.f32 %v680, %v942
        %v985 = vadd.f32 %v683, %v945
        %v986 = vadd.f32 %v688, %v950
        %v987 = vadd.f32 %v691, %v953
        %s988 = scalar_lea.vmem %s167, 24
        %v989 = vld [vmem:[%s988] sm:$0xff]
        %v990 = vld [vmem:[%s988 + $0x8] sm:$0xff]
        %v991 = vld [vmem:[%s988 + $0x18] sm:$0xff]
        %v992 = vld [vmem:[%s988 + $0x20] sm:$0xff]
        %v993 = vld [vmem:[%s988 + $0x30] sm:$0xff]
        %v994 = vld [vmem:[%s988 + $0x38] sm:$0xff]
        %v995 = vld [vmem:[%s988 + $0x48] sm:$0xff]
        %v996 = vld [vmem:[%s988 + $0x50] sm:$0xff]
        %v997 = vld [vmem:[%s988 + $0x60] sm:$0xff]
        %v998 = vld [vmem:[%s988 + $0x68] sm:$0xff]
        %v999 = vld [vmem:[%s988 + $0x78] sm:$0xff]
        %v1000 = vld [vmem:[%s988 + $0x80] sm:$0xff]
        %v1001 = vld [vmem:[%s988 + $0x90] sm:$0xff]
        %v1002 = vld [vmem:[%s988 + $0x98] sm:$0xff]
        %v1003 = vld [vmem:[%s988 + $0xa8] sm:$0xff]
        %v1004 = vld [vmem:[%s988 + $0xb0] sm:$0xff]
        %v1005 = vld [vmem:[%s988 + $0xc0] sm:$0xff]
        %v1006 = vld [vmem:[%s988 + $0xc8] sm:$0xff]
        %v1007 = vld [vmem:[%s988 + $0xd8] sm:$0xff]
        %v1008 = vld [vmem:[%s988 + $0xe0] sm:$0xff]
        %v1009 = vld [vmem:[%s988 + $0xf0] sm:$0xff]
        %v1010 = vld [vmem:[%s988 + $0xf8] sm:$0xff]
        %v1011 = vld [vmem:[%s988 + $0x108] sm:$0xff]
        %v1012 = vld [vmem:[%s988 + $0x110] sm:$0xff]
        %v1013 = vld [vmem:[%s988 + $0x120] sm:$0xff]
        %v1014 = vld [vmem:[%s988 + $0x128] sm:$0xff]
        %v1015 = vld [vmem:[%s988 + $0x138] sm:$0xff]
        %v1016 = vld [vmem:[%s988 + $0x140] sm:$0xff]
        %v1017 = vld [vmem:[%s988 + $0x150] sm:$0xff]
        %v1018 = vld [vmem:[%s988 + $0x158] sm:$0xff]
        %v1019 = vld [vmem:[%s988 + $0x168] sm:$0xff]
        %v1020 = vld [vmem:[%s988 + $0x170] sm:$0xff]
        %v1021 = vpack.c.bf16 %v990, %v989
        %v1022 = vpack.c.bf16 %v992, %v991
        %v1023 = vpack.c.bf16 %v994, %v993
        %v1024 = vpack.c.bf16 %v996, %v995
        %v1025 = vpack.c.bf16 %v998, %v997
        %v1026 = vpack.c.bf16 %v1000, %v999
        %v1027 = vpack.c.bf16 %v1002, %v1001
        %v1028 = vpack.c.bf16 %v1004, %v1003
        %v1029 = vpack.c.bf16 %v1006, %v1005
        %v1030 = vpack.c.bf16 %v1008, %v1007
        %v1031 = vpack.c.bf16 %v1010, %v1009
        %v1032 = vpack.c.bf16 %v1012, %v1011
        %v1033 = vpack.c.bf16 %v1014, %v1013
        %v1034 = vpack.c.bf16 %v1016, %v1015
        %v1035 = vpack.c.bf16 %v1018, %v1017
        %v1036 = vpack.c.bf16 %v1020, %v1019
        %s1037 = scalar_lea.vmem %s1, 6
        %v1038 = vld [vmem:[%s1037] sm:$0x3]
        %v1040 = vsel %vm268, %v1021, 0
        %v1043 = vsel %vm268, %v1022, 0
        %v1046 = vsel %vm268, %v1023, 0
        %v1049 = vsel %vm268, %v1024, 0
        %v1052 = vsel %vm268, %v1025, 0
        %v1055 = vsel %vm268, %v1026, 0
        %v1058 = vsel %vm268, %v1027, 0
        %v1061 = vsel %vm268, %v1028, 0
        %v1064 = vsel %vm268, %v1029, 0
        %v1067 = vsel %vm268, %v1030, 0
        %v1070 = vsel %vm268, %v1031, 0
        %v1073 = vsel %vm268, %v1032, 0
        %v1076 = vsel %vm268, %v1033, 0
        %v1079 = vsel %vm268, %v1034, 0
        %v1082 = vsel %vm268, %v1035, 0
        %v1085 = vsel %vm268, %v1036, 0
        %v1088 = vsel %vm317, %v1038, 0
        %1090 = vmatprep.subr.bf16.mxu0 0
        %1091 = vmatpush1.bf16.msra.mxu0 %v1088
        %1092 = vmatprep.subr.bf16.mxu0 0
        %1093 = vmatpush1.bf16.msra.mxu0 0
        %1094 = vmatprep.subr.bf16.mxu0 0
        %1095 = vmatpush1.bf16.msra.mxu0 0
        %1096 = vmatprep.subr.bf16.mxu0 0
        %1097 = vmatpush1.bf16.msra.mxu0 0
        %1098 = vmatprep.subr.bf16.mxu0 0
        %1099 = vmatpush1.bf16.msra.mxu0 0
        %1100 = vmatprep.subr.bf16.mxu0 0
        %1101 = vmatpush1.bf16.msra.mxu0 0
        %1102 = vmatprep.subr.bf16.mxu0 0
        %1103 = vmatpush1.bf16.msra.mxu0 0
        %1104 = vmatprep.subr.bf16.mxu0 0
        %1105 = vmatpush1.bf16.msra.mxu0 0
        %1106 = vmatprep.subr.bf16.mxu0 0
        %1107 = vmatpush1.bf16.msra.mxu0 0
        %1108 = vmatprep.subr.bf16.mxu0 0
        %1109 = vmatpush1.bf16.msra.mxu0 0
        %1110 = vmatprep.subr.bf16.mxu0 0
        %1111 = vmatpush1.bf16.msra.mxu0 0
        %1112 = vmatprep.subr.bf16.mxu0 0
        %1113 = vmatpush1.bf16.msra.mxu0 0
        %1114 = vmatprep.subr.bf16.mxu0 0
        %1115 = vmatpush1.bf16.msra.mxu0 0
        %1116 = vmatprep.subr.bf16.mxu0 0
        %1117 = vmatpush1.bf16.msra.mxu0 0
        %1118 = vmatprep.subr.bf16.mxu0 0
        %1119 = vmatpush1.bf16.msra.mxu0 0
        %1120 = vmatprep.subr.bf16.mxu0 0
        %1121 = vmatpush1.bf16.msra.mxu0 0
        %1122 = vmatprep.mubr.bf16.mxu0 0
        %1123 = vmatmul.mubr.bf16.gmra.mrb[0].mxu0 %v1040
        %v1124 = vpop.f32.mrb[0].mxu0
        %v1125 = vadd.f32 0.0, %v1124
        %v1126 = vpop.f32.mrb[0].mxu0
        %v1127 = vpop.f32.mrb[0].mxu0
        %v1128 = vadd.f32 0.0, %v1127
        %v1129 = vpop.f32.mrb[0].mxu0
        %1130 = vmatprep.mubr.bf16.mxu0 0
        %1131 = vmatmul.mubr.bf16.gmra.mrb[0].mxu0 %v1043
        %v1132 = vpop.f32.mrb[0].mxu0
        %v1133 = vadd.f32 0.0, %v1132
        %v1134 = vpop.f32.mrb[0].mxu0
        %v1135 = vpop.f32.mrb[0].mxu0
        %v1136 = vadd.f32 0.0, %v1135
        %v1137 = vpop.f32.mrb[0].mxu0
        %1138 = vmatprep.mubr.bf16.mxu0 0
        %1139 = vmatmul.mubr.bf16.gmra.mrb[0].mxu0 %v1046
        %v1140 = vpop.f32.mrb[0].mxu0
        %v1141 = vadd.f32 0.0, %v1140
        %v1142 = vpop.f32.mrb[0].mxu0
        %v1143 = vpop.f32.mrb[0].mxu0
        %v1144 = vadd.f32 0.0, %v1143
        %v1145 = vpop.f32.mrb[0].mxu0
        %1146 = vmatprep.mubr.bf16.mxu0 0
        %1147 = vmatmul.mubr.bf16.gmra.mrb[0].mxu0 %v1049
        %v1148 = vpop.f32.mrb[0].mxu0
        %v1149 = vadd.f32 0.0, %v1148
        %v1150 = vpop.f32.mrb[0].mxu0
        %v1151 = vpop.f32.mrb[0].mxu0
        %v1152 = vadd.f32 0.0, %v1151
        %v1153 = vpop.f32.mrb[0].mxu0
        %1154 = vmatprep.mubr.bf16.mxu0 0
        %1155 = vmatmul.mubr.bf16.gmra.mrb[0].mxu0 %v1052
        %v1156 = vpop.f32.mrb[0].mxu0
        %v1157 = vadd.f32 0.0, %v1156
        %v1158 = vpop.f32.mrb[0].mxu0
        %v1159 = vpop.f32.mrb[0].mxu0
        %v1160 = vadd.f32 0.0, %v1159
        %v1161 = vpop.f32.mrb[0].mxu0
        %1162 = vmatprep.mubr.bf16.mxu0 0
        %1163 = vmatmul.mubr.bf16.gmra.mrb[0].mxu0 %v1055
        %v1164 = vpop.f32.mrb[0].mxu0
        %v1165 = vadd.f32 0.0, %v1164
        %v1166 = vpop.f32.mrb[0].mxu0
        %v1167 = vpop.f32.mrb[0].mxu0
        %v1168 = vadd.f32 0.0, %v1167
        %v1169 = vpop.f32.mrb[0].mxu0
        %1170 = vmatprep.mubr.bf16.mxu0 0
        %1171 = vmatmul.mubr.bf16.gmra.mrb[0].mxu0 %v1058
        %v1172 = vpop.f32.mrb[0].mxu0
        %v1173 = vadd.f32 0.0, %v1172
        %v1174 = vpop.f32.mrb[0].mxu0
        %v1175 = vpop.f32.mrb[0].mxu0
        %v1176 = vadd.f32 0.0, %v1175
        %v1177 = vpop.f32.mrb[0].mxu0
        %1178 = vmatprep.mubr.bf16.mxu0 0
        %1179 = vmatmul.mubr.bf16.gmra.mrb[0].mxu0 %v1061
        %v1180 = vpop.f32.mrb[0].mxu0
        %v1181 = vadd.f32 0.0, %v1180
        %v1182 = vpop.f32.mrb[0].mxu0
        %v1183 = vpop.f32.mrb[0].mxu0
        %v1184 = vadd.f32 0.0, %v1183
        %v1185 = vpop.f32.mrb[0].mxu0
        %1186 = vmatprep.mubr.bf16.mxu0 0
        %1187 = vmatmul.mubr.bf16.gmra.mrb[0].mxu0 %v1064
        %v1188 = vpop.f32.mrb[0].mxu0
        %v1189 = vadd.f32 0.0, %v1188
        %v1190 = vpop.f32.mrb[0].mxu0
        %v1191 = vpop.f32.mrb[0].mxu0
        %v1192 = vadd.f32 0.0, %v1191
        %v1193 = vpop.f32.mrb[0].mxu0
        %1194 = vmatprep.mubr.bf16.mxu0 0
        %1195 = vmatmul.mubr.bf16.gmra.mrb[0].mxu0 %v1067
        %v1196 = vpop.f32.mrb[0].mxu0
        %v1197 = vadd.f32 0.0, %v1196
        %v1198 = vpop.f32.mrb[0].mxu0
        %v1199 = vpop.f32.mrb[0].mxu0
        %v1200 = vadd.f32 0.0, %v1199
        %v1201 = vpop.f32.mrb[0].mxu0
        %1202 = vmatprep.mubr.bf16.mxu0 0
        %1203 = vmatmul.mubr.bf16.gmra.mrb[0].mxu0 %v1070
        %v1204 = vpop.f32.mrb[0].mxu0
        %v1205 = vadd.f32 0.0, %v1204
        %v1206 = vpop.f32.mrb[0].mxu0
        %v1207 = vpop.f32.mrb[0].mxu0
        %v1208 = vadd.f32 0.0, %v1207
        %v1209 = vpop.f32.mrb[0].mxu0
        %1210 = vmatprep.mubr.bf16.mxu0 0
        %1211 = vmatmul.mubr.bf16.gmra.mrb[0].mxu0 %v1073
        %v1212 = vpop.f32.mrb[0].mxu0
        %v1213 = vadd.f32 0.0, %v1212
        %v1214 = vpop.f32.mrb[0].mxu0
        %v1215 = vpop.f32.mrb[0].mxu0
        %v1216 = vadd.f32 0.0, %v1215
        %v1217 = vpop.f32.mrb[0].mxu0
        %1218 = vmatprep.mubr.bf16.mxu0 0
        %1219 = vmatmul.mubr.bf16.gmra.mrb[0].mxu0 %v1076
        %v1220 = vpop.f32.mrb[0].mxu0
        %v1221 = vadd.f32 0.0, %v1220
        %v1222 = vpop.f32.mrb[0].mxu0
        %v1223 = vpop.f32.mrb[0].mxu0
        %v1224 = vadd.f32 0.0, %v1223
        %v1225 = vpop.f32.mrb[0].mxu0
        %1226 = vmatprep.mubr.bf16.mxu0 0
        %1227 = vmatmul.mubr.bf16.gmra.mrb[0].mxu0 %v1079
        %v1228 = vpop.f32.mrb[0].mxu0
        %v1229 = vadd.f32 0.0, %v1228
        %v1230 = vpop.f32.mrb[0].mxu0
        %v1231 = vpop.f32.mrb[0].mxu0
        %v1232 = vadd.f32 0.0, %v1231
        %v1233 = vpop.f32.mrb[0].mxu0
        %1234 = vmatprep.mubr.bf16.mxu0 0
        %1235 = vmatmul.mubr.bf16.gmra.mrb[0].mxu0 %v1082
        %v1236 = vpop.f32.mrb[0].mxu0
        %v1237 = vadd.f32 0.0, %v1236
        %v1238 = vpop.f32.mrb[0].mxu0
        %v1239 = vpop.f32.mrb[0].mxu0
        %v1240 = vadd.f32 0.0, %v1239
        %v1241 = vpop.f32.mrb[0].mxu0
        %1242 = vmatprep.mubr.bf16.mxu0 0
        %1243 = vmatmul.mubr.bf16.gmra.mrb[0].mxu0 %v1085
        %v1244 = vpop.f32.mrb[0].mxu0
        %v1245 = vadd.f32 0.0, %v1244
        %v1246 = vpop.f32.mrb[0].mxu0
        %v1247 = vpop.f32.mrb[0].mxu0
        %v1248 = vadd.f32 0.0, %v1247
        %v1249 = vpop.f32.mrb[0].mxu0
        %1250 = vdwg.mxu0
        %v1251 = vadd.f32 %v956, %v1125
        %v1252 = vadd.f32 %v957, %v1128
        %v1253 = vadd.f32 %v958, %v1133
        %v1254 = vadd.f32 %v959, %v1136
        %v1255 = vadd.f32 %v960, %v1141
        %v1256 = vadd.f32 %v961, %v1144
        %v1257 = vadd.f32 %v962, %v1149
        %v1258 = vadd.f32 %v963, %v1152
        %v1259 = vadd.f32 %v964, %v1157
        %v1260 = vadd.f32 %v965, %v1160
        %v1261 = vadd.f32 %v966, %v1165
        %v1262 = vadd.f32 %v967, %v1168
        %v1263 = vadd.f32 %v968, %v1173
        %v1264 = vadd.f32 %v969, %v1176
        %v1265 = vadd.f32 %v970, %v1181
        %v1266 = vadd.f32 %v971, %v1184
        %v1267 = vadd.f32 %v972, %v1189
        %v1268 = vadd.f32 %v973, %v1192
        %v1269 = vadd.f32 %v974, %v1197
        %v1270 = vadd.f32 %v975, %v1200
        %v1271 = vadd.f32 %v976, %v1205
        %v1272 = vadd.f32 %v977, %v1208
        %v1273 = vadd.f32 %v978, %v1213
        %v1274 = vadd.f32 %v979, %v1216
        %v1275 = vadd.f32 %v980, %v1221
        %v1276 = vadd.f32 %v981, %v1224
        %v1277 = vadd.f32 %v982, %v1229
        %v1278 = vadd.f32 %v983, %v1232
        %v1279 = vadd.f32 %v984, %v1237
        %v1280 = vadd.f32 %v985, %v1240
        %v1281 = vadd.f32 %v986, %v1245
        %v1282 = vadd.f32 %v987, %v1248
        %v1283 = vld [vmem:[%s988 + $0x1] sm:$0xff]
        %v1284 = vld [vmem:[%s988 + $0x9] sm:$0xff]
        %v1285 = vld [vmem:[%s988 + $0x19] sm:$0xff]
        %v1286 = vld [vmem:[%s988 + $0x21] sm:$0xff]
        %v1287 = vld [vmem:[%s988 + $0x31] sm:$0xff]
        %v1288 = vld [vmem:[%s988 + $0x39] sm:$0xff]
        %v1289 = vld [vmem:[%s988 + $0x49] sm:$0xff]
        %v1290 = vld [vmem:[%s988 + $0x51] sm:$0xff]
        %v1291 = vld [vmem:[%s988 + $0x61] sm:$0xff]
        %v1292 = vld [vmem:[%s988 + $0x69] sm:$0xff]
        %v1293 = vld [vmem:[%s988 + $0x79] sm:$0xff]
        %v1294 = vld [vmem:[%s988 + $0x81] sm:$0xff]
        %v1295 = vld [vmem:[%s988 + $0x91] sm:$0xff]
        %v1296 = vld [vmem:[%s988 + $0x99] sm:$0xff]
        %v1297 = vld [vmem:[%s988 + $0xa9] sm:$0xff]
        %v1298 = vld [vmem:[%s988 + $0xb1] sm:$0xff]
        %v1299 = vld [vmem:[%s988 + $0xc1] sm:$0xff]
        %v1300 = vld [vmem:[%s988 + $0xc9] sm:$0xff]
        %v1301 = vld [vmem:[%s988 + $0xd9] sm:$0xff]
        %v1302 = vld [vmem:[%s988 + $0xe1] sm:$0xff]
        %v1303 = vld [vmem:[%s988 + $0xf1] sm:$0xff]
        %v1304 = vld [vmem:[%s988 + $0xf9] sm:$0xff]
        %v1305 = vld [vmem:[%s988 + $0x109] sm:$0xff]
        %v1306 = vld [vmem:[%s988 + $0x111] sm:$0xff]
        %v1307 = vld [vmem:[%s988 + $0x121] sm:$0xff]
        %v1308 = vld [vmem:[%s988 + $0x129] sm:$0xff]
        %v1309 = vld [vmem:[%s988 + $0x139] sm:$0xff]
        %v1310 = vld [vmem:[%s988 + $0x141] sm:$0xff]
        %v1311 = vld [vmem:[%s988 + $0x151] sm:$0xff]
        %v1312 = vld [vmem:[%s988 + $0x159] sm:$0xff]
        %v1313 = vld [vmem:[%s988 + $0x169] sm:$0xff]
        %v1314 = vld [vmem:[%s988 + $0x171] sm:$0xff]
        %v1315 = vpack.c.bf16 %v1284, %v1283
        %v1316 = vpack.c.bf16 %v1286, %v1285
        %v1317 = vpack.c.bf16 %v1288, %v1287
        %v1318 = vpack.c.bf16 %v1290, %v1289
        %v1319 = vpack.c.bf16 %v1292, %v1291
        %v1320 = vpack.c.bf16 %v1294, %v1293
        %v1321 = vpack.c.bf16 %v1296, %v1295
        %v1322 = vpack.c.bf16 %v1298, %v1297
        %v1323 = vpack.c.bf16 %v1300, %v1299
        %v1324 = vpack.c.bf16 %v1302, %v1301
        %v1325 = vpack.c.bf16 %v1304, %v1303
        %v1326 = vpack.c.bf16 %v1306, %v1305
        %v1327 = vpack.c.bf16 %v1308, %v1307
        %v1328 = vpack.c.bf16 %v1310, %v1309
        %v1329 = vpack.c.bf16 %v1312, %v1311
        %v1330 = vpack.c.bf16 %v1314, %v1313
        %s1331 = scalar_lea.vmem %s1, 8
        %v1332 = vld [vmem:[%s1331] sm:$0x3]
        %v1334 = vsel %vm268, %v1315, 0
        %v1337 = vsel %vm268, %v1316, 0
        %v1340 = vsel %vm268, %v1317, 0
        %v1343 = vsel %vm268, %v1318, 0
        %v1346 = vsel %vm268, %v1319, 0
        %v1349 = vsel %vm268, %v1320, 0
        %v1352 = vsel %vm268, %v1321, 0
        %v1355 = vsel %vm268, %v1322, 0
        %v1358 = vsel %vm268, %v1323, 0
        %v1361 = vsel %vm268, %v1324, 0
        %v1364 = vsel %vm268, %v1325, 0
        %v1367 = vsel %vm268, %v1326, 0
        %v1370 = vsel %vm268, %v1327, 0
        %v1373 = vsel %vm268, %v1328, 0
        %v1376 = vsel %vm268, %v1329, 0
        %v1379 = vsel %vm268, %v1330, 0
        %v1382 = vsel %vm317, %v1332, 0
        %1384 = vmatprep.subr.bf16.mxu0 0
        %1385 = vmatpush1.bf16.msra.mxu0 %v1382
        %1386 = vmatprep.subr.bf16.mxu0 0
        %1387 = vmatpush1.bf16.msra.mxu0 0
        %1388 = vmatprep.subr.bf16.mxu0 0
        %1389 = vmatpush1.bf16.msra.mxu0 0
        %1390 = vmatprep.subr.bf16.mxu0 0
        %1391 = vmatpush1.bf16.msra.mxu0 0
        %1392 = vmatprep.subr.bf16.mxu0 0
        %1393 = vmatpush1.bf16.msra.mxu0 0
        %1394 = vmatprep.subr.bf16.mxu0 0
        %1395 = vmatpush1.bf16.msra.mxu0 0
        %1396 = vmatprep.subr.bf16.mxu0 0
        %1397 = vmatpush1.bf16.msra.mxu0 0
        %1398 = vmatprep.subr.bf16.mxu0 0
        %1399 = vmatpush1.bf16.msra.mxu0 0
        %1400 = vmatprep.subr.bf16.mxu0 0
        %1401 = vmatpush1.bf16.msra.mxu0 0
        %1402 = vmatprep.subr.bf16.mxu0 0
        %1403 = vmatpush1.bf16.msra.mxu0 0
        %1404 = vmatprep.subr.bf16.mxu0 0
        %1405 = vmatpush1.bf16.msra.mxu0 0
        %1406 = vmatprep.subr.bf16.mxu0 0
        %1407 = vmatpush1.bf16.msra.mxu0 0
        %1408 = vmatprep.subr.bf16.mxu0 0
        %1409 = vmatpush1.bf16.msra.mxu0 0
        %1410 = vmatprep.subr.bf16.mxu0 0
        %1411 = vmatpush1.bf16.msra.mxu0 0
        %1412 = vmatprep.subr.bf16.mxu0 0
        %1413 = vmatpush1.bf16.msra.mxu0 0
        %1414 = vmatprep.subr.bf16.mxu0 0
        %1415 = vmatpush1.bf16.msra.mxu0 0
        %1416 = vmatprep.mubr.bf16.mxu0 0
        %1417 = vmatmul.mubr.bf16.gmra.mrb[0].mxu0 %v1334
        %v1418 = vpop.f32.mrb[0].mxu0
        %v1419 = vadd.f32 0.0, %v1418
        %v1420 = vpop.f32.mrb[0].mxu0
        %v1421 = vpop.f32.mrb[0].mxu0
        %v1422 = vadd.f32 0.0, %v1421
        %v1423 = vpop.f32.mrb[0].mxu0
        %1424 = vmatprep.mubr.bf16.mxu0 0
        %1425 = vmatmul.mubr.bf16.gmra.mrb[0].mxu0 %v1337
        %v1426 = vpop.f32.mrb[0].mxu0
        %v1427 = vadd.f32 0.0, %v1426
        %v1428 = vpop.f32.mrb[0].mxu0
        %v1429 = vpop.f32.mrb[0].mxu0
        %v1430 = vadd.f32 0.0, %v1429
        %v1431 = vpop.f32.mrb[0].mxu0
        %1432 = vmatprep.mubr.bf16.mxu0 0
        %1433 = vmatmul.mubr.bf16.gmra.mrb[0].mxu0 %v1340
        %v1434 = vpop.f32.mrb[0].mxu0
        %v1435 = vadd.f32 0.0, %v1434
        %v1436 = vpop.f32.mrb[0].mxu0
        %v1437 = vpop.f32.mrb[0].mxu0
        %v1438 = vadd.f32 0.0, %v1437
        %v1439 = vpop.f32.mrb[0].mxu0
        %1440 = vmatprep.mubr.bf16.mxu0 0
        %1441 = vmatmul.mubr.bf16.gmra.mrb[0].mxu0 %v1343
        %v1442 = vpop.f32.mrb[0].mxu0
        %v1443 = vadd.f32 0.0, %v1442
        %v1444 = vpop.f32.mrb[0].mxu0
        %v1445 = vpop.f32.mrb[0].mxu0
        %v1446 = vadd.f32 0.0, %v1445
        %v1447 = vpop.f32.mrb[0].mxu0
        %1448 = vmatprep.mubr.bf16.mxu0 0
        %1449 = vmatmul.mubr.bf16.gmra.mrb[0].mxu0 %v1346
        %v1450 = vpop.f32.mrb[0].mxu0
        %v1451 = vadd.f32 0.0, %v1450
        %v1452 = vpop.f32.mrb[0].mxu0
        %v1453 = vpop.f32.mrb[0].mxu0
        %v1454 = vadd.f32 0.0, %v1453
        %v1455 = vpop.f32.mrb[0].mxu0
        %1456 = vmatprep.mubr.bf16.mxu0 0
        %1457 = vmatmul.mubr.bf16.gmra.mrb[0].mxu0 %v1349
        %v1458 = vpop.f32.mrb[0].mxu0
        %v1459 = vadd.f32 0.0, %v1458
        %v1460 = vpop.f32.mrb[0].mxu0
        %v1461 = vpop.f32.mrb[0].mxu0
        %v1462 = vadd.f32 0.0, %v1461
        %v1463 = vpop.f32.mrb[0].mxu0
        %1464 = vmatprep.mubr.bf16.mxu0 0
        %1465 = vmatmul.mubr.bf16.gmra.mrb[0].mxu0 %v1352
        %v1466 = vpop.f32.mrb[0].mxu0
        %v1467 = vadd.f32 0.0, %v1466
        %v1468 = vpop.f32.mrb[0].mxu0
        %v1469 = vpop.f32.mrb[0].mxu0
        %v1470 = vadd.f32 0.0, %v1469
        %v1471 = vpop.f32.mrb[0].mxu0
        %1472 = vmatprep.mubr.bf16.mxu0 0
        %1473 = vmatmul.mubr.bf16.gmra.mrb[0].mxu0 %v1355
        %v1474 = vpop.f32.mrb[0].mxu0
        %v1475 = vadd.f32 0.0, %v1474
        %v1476 = vpop.f32.mrb[0].mxu0
        %v1477 = vpop.f32.mrb[0].mxu0
        %v1478 = vadd.f32 0.0, %v1477
        %v1479 = vpop.f32.mrb[0].mxu0
        %1480 = vmatprep.mubr.bf16.mxu0 0
        %1481 = vmatmul.mubr.bf16.gmra.mrb[0].mxu0 %v1358
        %v1482 = vpop.f32.mrb[0].mxu0
        %v1483 = vadd.f32 0.0, %v1482
        %v1484 = vpop.f32.mrb[0].mxu0
        %v1485 = vpop.f32.mrb[0].mxu0
        %v1486 = vadd.f32 0.0, %v1485
        %v1487 = vpop.f32.mrb[0].mxu0
        %1488 = vmatprep.mubr.bf16.mxu0 0
        %1489 = vmatmul.mubr.bf16.gmra.mrb[0].mxu0 %v1361
        %v1490 = vpop.f32.mrb[0].mxu0
        %v1491 = vadd.f32 0.0, %v1490
        %v1492 = vpop.f32.mrb[0].mxu0
        %v1493 = vpop.f32.mrb[0].mxu0
        %v1494 = vadd.f32 0.0, %v1493
        %v1495 = vpop.f32.mrb[0].mxu0
        %1496 = vmatprep.mubr.bf16.mxu0 0
        %1497 = vmatmul.mubr.bf16.gmra.mrb[0].mxu0 %v1364
        %v1498 = vpop.f32.mrb[0].mxu0
        %v1499 = vadd.f32 0.0, %v1498
        %v1500 = vpop.f32.mrb[0].mxu0
        %v1501 = vpop.f32.mrb[0].mxu0
        %v1502 = vadd.f32 0.0, %v1501
        %v1503 = vpop.f32.mrb[0].mxu0
        %1504 = vmatprep.mubr.bf16.mxu0 0
        %1505 = vmatmul.mubr.bf16.gmra.mrb[0].mxu0 %v1367
        %v1506 = vpop.f32.mrb[0].mxu0
        %v1507 = vadd.f32 0.0, %v1506
        %v1508 = vpop.f32.mrb[0].mxu0
        %v1509 = vpop.f32.mrb[0].mxu0
        %v1510 = vadd.f32 0.0, %v1509
        %v1511 = vpop.f32.mrb[0].mxu0
        %1512 = vmatprep.mubr.bf16.mxu0 0
        %1513 = vmatmul.mubr.bf16.gmra.mrb[0].mxu0 %v1370
        %v1514 = vpop.f32.mrb[0].mxu0
        %v1515 = vadd.f32 0.0, %v1514
        %v1516 = vpop.f32.mrb[0].mxu0
        %v1517 = vpop.f32.mrb[0].mxu0
        %v1518 = vadd.f32 0.0, %v1517
        %v1519 = vpop.f32.mrb[0].mxu0
        %1520 = vmatprep.mubr.bf16.mxu0 0
        %1521 = vmatmul.mubr.bf16.gmra.mrb[0].mxu0 %v1373
        %v1522 = vpop.f32.mrb[0].mxu0
        %v1523 = vadd.f32 0.0, %v1522
        %v1524 = vpop.f32.mrb[0].mxu0
        %v1525 = vpop.f32.mrb[0].mxu0
        %v1526 = vadd.f32 0.0, %v1525
        %v1527 = vpop.f32.mrb[0].mxu0
        %1528 = vmatprep.mubr.bf16.mxu0 0
        %1529 = vmatmul.mubr.bf16.gmra.mrb[0].mxu0 %v1376
        %v1530 = vpop.f32.mrb[0].mxu0
        %v1531 = vadd.f32 0.0, %v1530
        %v1532 = vpop.f32.mrb[0].mxu0
        %v1533 = vpop.f32.mrb[0].mxu0
        %v1534 = vadd.f32 0.0, %v1533
        %v1535 = vpop.f32.mrb[0].mxu0
        %1536 = vmatprep.mubr.bf16.mxu0 0
        %1537 = vmatmul.mubr.bf16.gmra.mrb[0].mxu0 %v1379
        %v1538 = vpop.f32.mrb[0].mxu0
        %v1539 = vadd.f32 0.0, %v1538
        %v1540 = vpop.f32.mrb[0].mxu0
        %v1541 = vpop.f32.mrb[0].mxu0
        %v1542 = vadd.f32 0.0, %v1541
        %v1543 = vpop.f32.mrb[0].mxu0
        %1544 = vdwg.mxu0
        %v1545 = vadd.f32 %v1251, %v1419
        %v1546 = vadd.f32 %v1252, %v1422
        %v1547 = vadd.f32 %v1253, %v1427
        %v1548 = vadd.f32 %v1254, %v1430
        %v1549 = vadd.f32 %v1255, %v1435
        %v1550 = vadd.f32 %v1256, %v1438
        %v1551 = vadd.f32 %v1257, %v1443
        %v1552 = vadd.f32 %v1258, %v1446
        %v1553 = vadd.f32 %v1259, %v1451
        %v1554 = vadd.f32 %v1260, %v1454
        %v1555 = vadd.f32 %v1261, %v1459
        %v1556 = vadd.f32 %v1262, %v1462
        %v1557 = vadd.f32 %v1263, %v1467
        %v1558 = vadd.f32 %v1264, %v1470
        %v1559 = vadd.f32 %v1265, %v1475
        %v1560 = vadd.f32 %v1266, %v1478
        %v1561 = vadd.f32 %v1267, %v1483
        %v1562 = vadd.f32 %v1268, %v1486
        %v1563 = vadd.f32 %v1269, %v1491
        %v1564 = vadd.f32 %v1270, %v1494
        %v1565 = vadd.f32 %v1271, %v1499
        %v1566 = vadd.f32 %v1272, %v1502
        %v1567 = vadd.f32 %v1273, %v1507
        %v1568 = vadd.f32 %v1274, %v1510
        %v1569 = vadd.f32 %v1275, %v1515
        %v1570 = vadd.f32 %v1276, %v1518
        %v1571 = vadd.f32 %v1277, %v1523
        %v1572 = vadd.f32 %v1278, %v1526
        %v1573 = vadd.f32 %v1279, %v1531
        %v1574 = vadd.f32 %v1280, %v1534
        %v1575 = vadd.f32 %v1281, %v1539
        %v1576 = vadd.f32 %v1282, %v1542
        %v1577 = vld [vmem:[%s988 + $0x2] sm:$0xff]
        %v1578 = vld [vmem:[%s988 + $0xa] sm:$0xff]
        %v1579 = vld [vmem:[%s988 + $0x1a] sm:$0xff]
        %v1580 = vld [vmem:[%s988 + $0x22] sm:$0xff]
        %v1581 = vld [vmem:[%s988 + $0x32] sm:$0xff]
        %v1582 = vld [vmem:[%s988 + $0x3a] sm:$0xff]
        %v1583 = vld [vmem:[%s988 + $0x4a] sm:$0xff]
        %v1584 = vld [vmem:[%s988 + $0x52] sm:$0xff]
        %v1585 = vld [vmem:[%s988 + $0x62] sm:$0xff]
        %v1586 = vld [vmem:[%s988 + $0x6a] sm:$0xff]
        %v1587 = vld [vmem:[%s988 + $0x7a] sm:$0xff]
        %v1588 = vld [vmem:[%s988 + $0x82] sm:$0xff]
        %v1589 = vld [vmem:[%s988 + $0x92] sm:$0xff]
        %v1590 = vld [vmem:[%s988 + $0x9a] sm:$0xff]
        %v1591 = vld [vmem:[%s988 + $0xaa] sm:$0xff]
        %v1592 = vld [vmem:[%s988 + $0xb2] sm:$0xff]
        %v1593 = vld [vmem:[%s988 + $0xc2] sm:$0xff]
        %v1594 = vld [vmem:[%s988 + $0xca] sm:$0xff]
        %v1595 = vld [vmem:[%s988 + $0xda] sm:$0xff]
        %v1596 = vld [vmem:[%s988 + $0xe2] sm:$0xff]
        %v1597 = vld [vmem:[%s988 + $0xf2] sm:$0xff]
        %v1598 = vld [vmem:[%s988 + $0xfa] sm:$0xff]
        %v1599 = vld [vmem:[%s988 + $0x10a] sm:$0xff]
        %v1600 = vld [vmem:[%s988 + $0x112] sm:$0xff]
        %v1601 = vld [vmem:[%s988 + $0x122] sm:$0xff]
        %v1602 = vld [vmem:[%s988 + $0x12a] sm:$0xff]
        %v1603 = vld [vmem:[%s988 + $0x13a] sm:$0xff]
        %v1604 = vld [vmem:[%s988 + $0x142] sm:$0xff]
        %v1605 = vld [vmem:[%s988 + $0x152] sm:$0xff]
        %v1606 = vld [vmem:[%s988 + $0x15a] sm:$0xff]
        %v1607 = vld [vmem:[%s988 + $0x16a] sm:$0xff]
        %v1608 = vld [vmem:[%s988 + $0x172] sm:$0xff]
        %v1609 = vpack.c.bf16 %v1578, %v1577
        %v1610 = vpack.c.bf16 %v1580, %v1579
        %v1611 = vpack.c.bf16 %v1582, %v1581
        %v1612 = vpack.c.bf16 %v1584, %v1583
        %v1613 = vpack.c.bf16 %v1586, %v1585
        %v1614 = vpack.c.bf16 %v1588, %v1587
        %v1615 = vpack.c.bf16 %v1590, %v1589
        %v1616 = vpack.c.bf16 %v1592, %v1591
        %v1617 = vpack.c.bf16 %v1594, %v1593
        %v1618 = vpack.c.bf16 %v1596, %v1595
        %v1619 = vpack.c.bf16 %v1598, %v1597
        %v1620 = vpack.c.bf16 %v1600, %v1599
        %v1621 = vpack.c.bf16 %v1602, %v1601
        %v1622 = vpack.c.bf16 %v1604, %v1603
        %v1623 = vpack.c.bf16 %v1606, %v1605
        %v1624 = vpack.c.bf16 %v1608, %v1607
        %s1625 = scalar_lea.vmem %s1, 10
        %v1626 = vld [vmem:[%s1625] sm:$0x3]
        %v1628 = vsel %vm268, %v1609, 0
        %v1631 = vsel %vm268, %v1610, 0
        %v1634 = vsel %vm268, %v1611, 0
        %v1637 = vsel %vm268, %v1612, 0
        %v1640 = vsel %vm268, %v1613, 0
        %v1643 = vsel %vm268, %v1614, 0
        %v1646 = vsel %vm268, %v1615, 0
        %v1649 = vsel %vm268, %v1616, 0
        %v1652 = vsel %vm268, %v1617, 0
        %v1655 = vsel %vm268, %v1618, 0
        %v1658 = vsel %vm268, %v1619, 0
        %v1661 = vsel %vm268, %v1620, 0
        %v1664 = vsel %vm268, %v1621, 0
        %v1667 = vsel %vm268, %v1622, 0
        %v1670 = vsel %vm268, %v1623, 0
        %v1673 = vsel %vm268, %v1624, 0
        %v1676 = vsel %vm317, %v1626, 0
        %1678 = vmatprep.subr.bf16.mxu0 0
        %1679 = vmatpush1.bf16.msra.mxu0 %v1676
        %1680 = vmatprep.subr.bf16.mxu0 0
        %1681 = vmatpush1.bf16.msra.mxu0 0
        %1682 = vmatprep.subr.bf16.mxu0 0
        %1683 = vmatpush1.bf16.msra.mxu0 0
        %1684 = vmatprep.subr.bf16.mxu0 0
        %1685 = vmatpush1.bf16.msra.mxu0 0
        %1686 = vmatprep.subr.bf16.mxu0 0
        %1687 = vmatpush1.bf16.msra.mxu0 0
        %1688 = vmatprep.subr.bf16.mxu0 0
        %1689 = vmatpush1.bf16.msra.mxu0 0
        %1690 = vmatprep.subr.bf16.mxu0 0
        %1691 = vmatpush1.bf16.msra.mxu0 0
        %1692 = vmatprep.subr.bf16.mxu0 0
        %1693 = vmatpush1.bf16.msra.mxu0 0
        %1694 = vmatprep.subr.bf16.mxu0 0
        %1695 = vmatpush1.bf16.msra.mxu0 0
        %1696 = vmatprep.subr.bf16.mxu0 0
        %1697 = vmatpush1.bf16.msra.mxu0 0
        %1698 = vmatprep.subr.bf16.mxu0 0
        %1699 = vmatpush1.bf16.msra.mxu0 0
        %1700 = vmatprep.subr.bf16.mxu0 0
        %1701 = vmatpush1.bf16.msra.mxu0 0
        %1702 = vmatprep.subr.bf16.mxu0 0
        %1703 = vmatpush1.bf16.msra.mxu0 0
        %1704 = vmatprep.subr.bf16.mxu0 0
        %1705 = vmatpush1.bf16.msra.mxu0 0
        %1706 = vmatprep.subr.bf16.mxu0 0
        %1707 = vmatpush1.bf16.msra.mxu0 0
        %1708 = vmatprep.subr.bf16.mxu0 0
        %1709 = vmatpush1.bf16.msra.mxu0 0
        %1710 = vmatprep.mubr.bf16.mxu0 0
        %1711 = vmatmul.mubr.bf16.gmra.mrb[0].mxu0 %v1628
        %v1712 = vpop.f32.mrb[0].mxu0
        %v1713 = vadd.f32 0.0, %v1712
        %v1714 = vpop.f32.mrb[0].mxu0
        %v1715 = vpop.f32.mrb[0].mxu0
        %v1716 = vadd.f32 0.0, %v1715
        %v1717 = vpop.f32.mrb[0].mxu0
        %1718 = vmatprep.mubr.bf16.mxu0 0
        %1719 = vmatmul.mubr.bf16.gmra.mrb[0].mxu0 %v1631
        %v1720 = vpop.f32.mrb[0].mxu0
        %v1721 = vadd.f32 0.0, %v1720
        %v1722 = vpop.f32.mrb[0].mxu0
        %v1723 = vpop.f32.mrb[0].mxu0
        %v1724 = vadd.f32 0.0, %v1723
        %v1725 = vpop.f32.mrb[0].mxu0
        %1726 = vmatprep.mubr.bf16.mxu0 0
        %1727 = vmatmul.mubr.bf16.gmra.mrb[0].mxu0 %v1634
        %v1728 = vpop.f32.mrb[0].mxu0
        %v1729 = vadd.f32 0.0, %v1728
        %v1730 = vpop.f32.mrb[0].mxu0
        %v1731 = vpop.f32.mrb[0].mxu0
        %v1732 = vadd.f32 0.0, %v1731
        %v1733 = vpop.f32.mrb[0].mxu0
        %1734 = vmatprep.mubr.bf16.mxu0 0
        %1735 = vmatmul.mubr.bf16.gmra.mrb[0].mxu0 %v1637
        %v1736 = vpop.f32.mrb[0].mxu0
        %v1737 = vadd.f32 0.0, %v1736
        %v1738 = vpop.f32.mrb[0].mxu0
        %v1739 = vpop.f32.mrb[0].mxu0
        %v1740 = vadd.f32 0.0, %v1739
        %v1741 = vpop.f32.mrb[0].mxu0
        %1742 = vmatprep.mubr.bf16.mxu0 0
        %1743 = vmatmul.mubr.bf16.gmra.mrb[0].mxu0 %v1640
        %v1744 = vpop.f32.mrb[0].mxu0
        %v1745 = vadd.f32 0.0, %v1744
        %v1746 = vpop.f32.mrb[0].mxu0
        %v1747 = vpop.f32.mrb[0].mxu0
        %v1748 = vadd.f32 0.0, %v1747
        %v1749 = vpop.f32.mrb[0].mxu0
        %1750 = vmatprep.mubr.bf16.mxu0 0
        %1751 = vmatmul.mubr.bf16.gmra.mrb[0].mxu0 %v1643
        %v1752 = vpop.f32.mrb[0].mxu0
        %v1753 = vadd.f32 0.0, %v1752
        %v1754 = vpop.f32.mrb[0].mxu0
        %v1755 = vpop.f32.mrb[0].mxu0
        %v1756 = vadd.f32 0.0, %v1755
        %v1757 = vpop.f32.mrb[0].mxu0
        %1758 = vmatprep.mubr.bf16.mxu0 0
        %1759 = vmatmul.mubr.bf16.gmra.mrb[0].mxu0 %v1646
        %v1760 = vpop.f32.mrb[0].mxu0
        %v1761 = vadd.f32 0.0, %v1760
        %v1762 = vpop.f32.mrb[0].mxu0
        %v1763 = vpop.f32.mrb[0].mxu0
        %v1764 = vadd.f32 0.0, %v1763
        %v1765 = vpop.f32.mrb[0].mxu0
        %1766 = vmatprep.mubr.bf16.mxu0 0
        %1767 = vmatmul.mubr.bf16.gmra.mrb[0].mxu0 %v1649
        %v1768 = vpop.f32.mrb[0].mxu0
        %v1769 = vadd.f32 0.0, %v1768
        %v1770 = vpop.f32.mrb[0].mxu0
        %v1771 = vpop.f32.mrb[0].mxu0
        %v1772 = vadd.f32 0.0, %v1771
        %v1773 = vpop.f32.mrb[0].mxu0
        %1774 = vmatprep.mubr.bf16.mxu0 0
        %1775 = vmatmul.mubr.bf16.gmra.mrb[0].mxu0 %v1652
        %v1776 = vpop.f32.mrb[0].mxu0
        %v1777 = vadd.f32 0.0, %v1776
        %v1778 = vpop.f32.mrb[0].mxu0
        %v1779 = vpop.f32.mrb[0].mxu0
        %v1780 = vadd.f32 0.0, %v1779
        %v1781 = vpop.f32.mrb[0].mxu0
        %1782 = vmatprep.mubr.bf16.mxu0 0
        %1783 = vmatmul.mubr.bf16.gmra.mrb[0].mxu0 %v1655
        %v1784 = vpop.f32.mrb[0].mxu0
        %v1785 = vadd.f32 0.0, %v1784
        %v1786 = vpop.f32.mrb[0].mxu0
        %v1787 = vpop.f32.mrb[0].mxu0
        %v1788 = vadd.f32 0.0, %v1787
        %v1789 = vpop.f32.mrb[0].mxu0
        %1790 = vmatprep.mubr.bf16.mxu0 0
        %1791 = vmatmul.mubr.bf16.gmra.mrb[0].mxu0 %v1658
        %v1792 = vpop.f32.mrb[0].mxu0
        %v1793 = vadd.f32 0.0, %v1792
        %v1794 = vpop.f32.mrb[0].mxu0
        %v1795 = vpop.f32.mrb[0].mxu0
        %v1796 = vadd.f32 0.0, %v1795
        %v1797 = vpop.f32.mrb[0].mxu0
        %1798 = vmatprep.mubr.bf16.mxu0 0
        %1799 = vmatmul.mubr.bf16.gmra.mrb[0].mxu0 %v1661
        %v1800 = vpop.f32.mrb[0].mxu0
        %v1801 = vadd.f32 0.0, %v1800
        %v1802 = vpop.f32.mrb[0].mxu0
        %v1803 = vpop.f32.mrb[0].mxu0
        %v1804 = vadd.f32 0.0, %v1803
        %v1805 = vpop.f32.mrb[0].mxu0
        %1806 = vmatprep.mubr.bf16.mxu0 0
        %1807 = vmatmul.mubr.bf16.gmra.mrb[0].mxu0 %v1664
        %v1808 = vpop.f32.mrb[0].mxu0
        %v1809 = vadd.f32 0.0, %v1808
        %v1810 = vpop.f32.mrb[0].mxu0
        %v1811 = vpop.f32.mrb[0].mxu0
        %v1812 = vadd.f32 0.0, %v1811
        %v1813 = vpop.f32.mrb[0].mxu0
        %1814 = vmatprep.mubr.bf16.mxu0 0
        %1815 = vmatmul.mubr.bf16.gmra.mrb[0].mxu0 %v1667
        %v1816 = vpop.f32.mrb[0].mxu0
        %v1817 = vadd.f32 0.0, %v1816
        %v1818 = vpop.f32.mrb[0].mxu0
        %v1819 = vpop.f32.mrb[0].mxu0
        %v1820 = vadd.f32 0.0, %v1819
        %v1821 = vpop.f32.mrb[0].mxu0
        %1822 = vmatprep.mubr.bf16.mxu0 0
        %1823 = vmatmul.mubr.bf16.gmra.mrb[0].mxu0 %v1670
        %v1824 = vpop.f32.mrb[0].mxu0
        %v1825 = vadd.f32 0.0, %v1824
        %v1826 = vpop.f32.mrb[0].mxu0
        %v1827 = vpop.f32.mrb[0].mxu0
        %v1828 = vadd.f32 0.0, %v1827
        %v1829 = vpop.f32.mrb[0].mxu0
        %1830 = vmatprep.mubr.bf16.mxu0 0
        %1831 = vmatmul.mubr.bf16.gmra.mrb[0].mxu0 %v1673
        %v1832 = vpop.f32.mrb[0].mxu0
        %v1833 = vadd.f32 0.0, %v1832
        %v1834 = vpop.f32.mrb[0].mxu0
        %v1835 = vpop.f32.mrb[0].mxu0
        %v1836 = vadd.f32 0.0, %v1835
        %v1837 = vpop.f32.mrb[0].mxu0
        %1838 = vdwg.mxu0
        %v1839 = vadd.f32 %v1545, %v1713
        %v1840 = vadd.f32 %v1546, %v1716
        %v1841 = vadd.f32 %v1547, %v1721
        %v1842 = vadd.f32 %v1548, %v1724
        %v1843 = vadd.f32 %v1549, %v1729
        %v1844 = vadd.f32 %v1550, %v1732
        %v1845 = vadd.f32 %v1551, %v1737
        %v1846 = vadd.f32 %v1552, %v1740
        %v1847 = vadd.f32 %v1553, %v1745
        %v1848 = vadd.f32 %v1554, %v1748
        %v1849 = vadd.f32 %v1555, %v1753
        %v1850 = vadd.f32 %v1556, %v1756
        %v1851 = vadd.f32 %v1557, %v1761
        %v1852 = vadd.f32 %v1558, %v1764
        %v1853 = vadd.f32 %v1559, %v1769
        %v1854 = vadd.f32 %v1560, %v1772
        %v1855 = vadd.f32 %v1561, %v1777
        %v1856 = vadd.f32 %v1562, %v1780
        %v1857 = vadd.f32 %v1563, %v1785
        %v1858 = vadd.f32 %v1564, %v1788
        %v1859 = vadd.f32 %v1565, %v1793
        %v1860 = vadd.f32 %v1566, %v1796
        %v1861 = vadd.f32 %v1567, %v1801
        %v1862 = vadd.f32 %v1568, %v1804
        %v1863 = vadd.f32 %v1569, %v1809
        %v1864 = vadd.f32 %v1570, %v1812
        %v1865 = vadd.f32 %v1571, %v1817
        %v1866 = vadd.f32 %v1572, %v1820
        %v1867 = vadd.f32 %v1573, %v1825
        %v1868 = vadd.f32 %v1574, %v1828
        %v1869 = vadd.f32 %v1575, %v1833
        %v1870 = vadd.f32 %v1576, %v1836
        %s1871 = scalar_lea.vmem %s167, 48
        %v1872 = vld [vmem:[%s1871] sm:$0xff]
        %v1873 = vld [vmem:[%s1871 + $0x8] sm:$0xff]
        %v1874 = vld [vmem:[%s1871 + $0x18] sm:$0xff]
        %v1875 = vld [vmem:[%s1871 + $0x20] sm:$0xff]
        %v1876 = vld [vmem:[%s1871 + $0x30] sm:$0xff]
        %v1877 = vld [vmem:[%s1871 + $0x38] sm:$0xff]
        %v1878 = vld [vmem:[%s1871 + $0x48] sm:$0xff]
        %v1879 = vld [vmem:[%s1871 + $0x50] sm:$0xff]
        %v1880 = vld [vmem:[%s1871 + $0x60] sm:$0xff]
        %v1881 = vld [vmem:[%s1871 + $0x68] sm:$0xff]
        %v1882 = vld [vmem:[%s1871 + $0x78] sm:$0xff]
        %v1883 = vld [vmem:[%s1871 + $0x80] sm:$0xff]
        %v1884 = vld [vmem:[%s1871 + $0x90] sm:$0xff]
        %v1885 = vld [vmem:[%s1871 + $0x98] sm:$0xff]
        %v1886 = vld [vmem:[%s1871 + $0xa8] sm:$0xff]
        %v1887 = vld [vmem:[%s1871 + $0xb0] sm:$0xff]
        %v1888 = vld [vmem:[%s1871 + $0xc0] sm:$0xff]
        %v1889 = vld [vmem:[%s1871 + $0xc8] sm:$0xff]
        %v1890 = vld [vmem:[%s1871 + $0xd8] sm:$0xff]
        %v1891 = vld [vmem:[%s1871 + $0xe0] sm:$0xff]
        %v1892 = vld [vmem:[%s1871 + $0xf0] sm:$0xff]
        %v1893 = vld [vmem:[%s1871 + $0xf8] sm:$0xff]
        %v1894 = vld [vmem:[%s1871 + $0x108] sm:$0xff]
        %v1895 = vld [vmem:[%s1871 + $0x110] sm:$0xff]
        %v1896 = vld [vmem:[%s1871 + $0x120] sm:$0xff]
        %v1897 = vld [vmem:[%s1871 + $0x128] sm:$0xff]
        %v1898 = vld [vmem:[%s1871 + $0x138] sm:$0xff]
        %v1899 = vld [vmem:[%s1871 + $0x140] sm:$0xff]
        %v1900 = vld [vmem:[%s1871 + $0x150] sm:$0xff]
        %v1901 = vld [vmem:[%s1871 + $0x158] sm:$0xff]
        %v1902 = vld [vmem:[%s1871 + $0x168] sm:$0xff]
        %v1903 = vld [vmem:[%s1871 + $0x170] sm:$0xff]
        %v1904 = vpack.c.bf16 %v1873, %v1872
        %v1905 = vpack.c.bf16 %v1875, %v1874
        %v1906 = vpack.c.bf16 %v1877, %v1876
        %v1907 = vpack.c.bf16 %v1879, %v1878
        %v1908 = vpack.c.bf16 %v1881, %v1880
        %v1909 = vpack.c.bf16 %v1883, %v1882
        %v1910 = vpack.c.bf16 %v1885, %v1884
        %v1911 = vpack.c.bf16 %v1887, %v1886
        %v1912 = vpack.c.bf16 %v1889, %v1888
        %v1913 = vpack.c.bf16 %v1891, %v1890
        %v1914 = vpack.c.bf16 %v1893, %v1892
        %v1915 = vpack.c.bf16 %v1895, %v1894
        %v1916 = vpack.c.bf16 %v1897, %v1896
        %v1917 = vpack.c.bf16 %v1899, %v1898
        %v1918 = vpack.c.bf16 %v1901, %v1900
        %v1919 = vpack.c.bf16 %v1903, %v1902
        %s1920 = scalar_lea.vmem %s1, 12
        %v1921 = vld [vmem:[%s1920] sm:$0x3]
        %v1923 = vsel %vm268, %v1904, 0
        %v1926 = vsel %vm268, %v1905, 0
        %v1929 = vsel %vm268, %v1906, 0
        %v1932 = vsel %vm268, %v1907, 0
        %v1935 = vsel %vm268, %v1908, 0
        %v1938 = vsel %vm268, %v1909, 0
        %v1941 = vsel %vm268, %v1910, 0
        %v1944 = vsel %vm268, %v1911, 0
        %v1947 = vsel %vm268, %v1912, 0
        %v1950 = vsel %vm268, %v1913, 0
        %v1953 = vsel %vm268, %v1914, 0
        %v1956 = vsel %vm268, %v1915, 0
        %v1959 = vsel %vm268, %v1916, 0
        %v1962 = vsel %vm268, %v1917, 0
        %v1965 = vsel %vm268, %v1918, 0
        %v1968 = vsel %vm268, %v1919, 0
        %v1971 = vsel %vm317, %v1921, 0
        %1973 = vmatprep.subr.bf16.mxu0 0
        %1974 = vmatpush1.bf16.msra.mxu0 %v1971
        %1975 = vmatprep.subr.bf16.mxu0 0
        %1976 = vmatpush1.bf16.msra.mxu0 0
        %1977 = vmatprep.subr.bf16.mxu0 0
        %1978 = vmatpush1.bf16.msra.mxu0 0
        %1979 = vmatprep.subr.bf16.mxu0 0
        %1980 = vmatpush1.bf16.msra.mxu0 0
        %1981 = vmatprep.subr.bf16.mxu0 0
        %1982 = vmatpush1.bf16.msra.mxu0 0
        %1983 = vmatprep.subr.bf16.mxu0 0
        %1984 = vmatpush1.bf16.msra.mxu0 0
        %1985 = vmatprep.subr.bf16.mxu0 0
        %1986 = vmatpush1.bf16.msra.mxu0 0
        %1987 = vmatprep.subr.bf16.mxu0 0
        %1988 = vmatpush1.bf16.msra.mxu0 0
        %1989 = vmatprep.subr.bf16.mxu0 0
        %1990 = vmatpush1.bf16.msra.mxu0 0
        %1991 = vmatprep.subr.bf16.mxu0 0
        %1992 = vmatpush1.bf16.msra.mxu0 0
        %1993 = vmatprep.subr.bf16.mxu0 0
        %1994 = vmatpush1.bf16.msra.mxu0 0
        %1995 = vmatprep.subr.bf16.mxu0 0
        %1996 = vmatpush1.bf16.msra.mxu0 0
        %1997 = vmatprep.subr.bf16.mxu0 0
        %1998 = vmatpush1.bf16.msra.mxu0 0
        %1999 = vmatprep.subr.bf16.mxu0 0
        %2000 = vmatpush1.bf16.msra.mxu0 0
        %2001 = vmatprep.subr.bf16.mxu0 0
        %2002 = vmatpush1.bf16.msra.mxu0 0
        %2003 = vmatprep.subr.bf16.mxu0 0
        %2004 = vmatpush1.bf16.msra.mxu0 0
        %2005 = vmatprep.mubr.bf16.mxu0 0
        %2006 = vmatmul.mubr.bf16.gmra.mrb[0].mxu0 %v1923
        %v2007 = vpop.f32.mrb[0].mxu0
        %v2008 = vadd.f32 0.0, %v2007
        %v2009 = vpop.f32.mrb[0].mxu0
        %v2010 = vpop.f32.mrb[0].mxu0
        %v2011 = vadd.f32 0.0, %v2010
        %v2012 = vpop.f32.mrb[0].mxu0
        %2013 = vmatprep.mubr.bf16.mxu0 0
        %2014 = vmatmul.mubr.bf16.gmra.mrb[0].mxu0 %v1926
        %v2015 = vpop.f32.mrb[0].mxu0
        %v2016 = vadd.f32 0.0, %v2015
        %v2017 = vpop.f32.mrb[0].mxu0
        %v2018 = vpop.f32.mrb[0].mxu0
        %v2019 = vadd.f32 0.0, %v2018
        %v2020 = vpop.f32.mrb[0].mxu0
        %2021 = vmatprep.mubr.bf16.mxu0 0
        %2022 = vmatmul.mubr.bf16.gmra.mrb[0].mxu0 %v1929
        %v2023 = vpop.f32.mrb[0].mxu0
        %v2024 = vadd.f32 0.0, %v2023
        %v2025 = vpop.f32.mrb[0].mxu0
        %v2026 = vpop.f32.mrb[0].mxu0
        %v2027 = vadd.f32 0.0, %v2026
        %v2028 = vpop.f32.mrb[0].mxu0
        %2029 = vmatprep.mubr.bf16.mxu0 0
        %2030 = vmatmul.mubr.bf16.gmra.mrb[0].mxu0 %v1932
        %v2031 = vpop.f32.mrb[0].mxu0
        %v2032 = vadd.f32 0.0, %v2031
        %v2033 = vpop.f32.mrb[0].mxu0
        %v2034 = vpop.f32.mrb[0].mxu0
        %v2035 = vadd.f32 0.0, %v2034
        %v2036 = vpop.f32.mrb[0].mxu0
        %2037 = vmatprep.mubr.bf16.mxu0 0
        %2038 = vmatmul.mubr.bf16.gmra.mrb[0].mxu0 %v1935
        %v2039 = vpop.f32.mrb[0].mxu0
        %v2040 = vadd.f32 0.0, %v2039
        %v2041 = vpop.f32.mrb[0].mxu0
        %v2042 = vpop.f32.mrb[0].mxu0
        %v2043 = vadd.f32 0.0, %v2042
        %v2044 = vpop.f32.mrb[0].mxu0
        %2045 = vmatprep.mubr.bf16.mxu0 0
        %2046 = vmatmul.mubr.bf16.gmra.mrb[0].mxu0 %v1938
        %v2047 = vpop.f32.mrb[0].mxu0
        %v2048 = vadd.f32 0.0, %v2047
        %v2049 = vpop.f32.mrb[0].mxu0
        %v2050 = vpop.f32.mrb[0].mxu0
        %v2051 = vadd.f32 0.0, %v2050
        %v2052 = vpop.f32.mrb[0].mxu0
        %2053 = vmatprep.mubr.bf16.mxu0 0
        %2054 = vmatmul.mubr.bf16.gmra.mrb[0].mxu0 %v1941
        %v2055 = vpop.f32.mrb[0].mxu0
        %v2056 = vadd.f32 0.0, %v2055
        %v2057 = vpop.f32.mrb[0].mxu0
        %v2058 = vpop.f32.mrb[0].mxu0
        %v2059 = vadd.f32 0.0, %v2058
        %v2060 = vpop.f32.mrb[0].mxu0
        %2061 = vmatprep.mubr.bf16.mxu0 0
        %2062 = vmatmul.mubr.bf16.gmra.mrb[0].mxu0 %v1944
        %v2063 = vpop.f32.mrb[0].mxu0
        %v2064 = vadd.f32 0.0, %v2063
        %v2065 = vpop.f32.mrb[0].mxu0
        %v2066 = vpop.f32.mrb[0].mxu0
        %v2067 = vadd.f32 0.0, %v2066
        %v2068 = vpop.f32.mrb[0].mxu0
        %2069 = vmatprep.mubr.bf16.mxu0 0
        %2070 = vmatmul.mubr.bf16.gmra.mrb[0].mxu0 %v1947
        %v2071 = vpop.f32.mrb[0].mxu0
        %v2072 = vadd.f32 0.0, %v2071
        %v2073 = vpop.f32.mrb[0].mxu0
        %v2074 = vpop.f32.mrb[0].mxu0
        %v2075 = vadd.f32 0.0, %v2074
        %v2076 = vpop.f32.mrb[0].mxu0
        %2077 = vmatprep.mubr.bf16.mxu0 0
        %2078 = vmatmul.mubr.bf16.gmra.mrb[0].mxu0 %v1950
        %v2079 = vpop.f32.mrb[0].mxu0
        %v2080 = vadd.f32 0.0, %v2079
        %v2081 = vpop.f32.mrb[0].mxu0
        %v2082 = vpop.f32.mrb[0].mxu0
        %v2083 = vadd.f32 0.0, %v2082
        %v2084 = vpop.f32.mrb[0].mxu0
        %2085 = vmatprep.mubr.bf16.mxu0 0
        %2086 = vmatmul.mubr.bf16.gmra.mrb[0].mxu0 %v1953
        %v2087 = vpop.f32.mrb[0].mxu0
        %v2088 = vadd.f32 0.0, %v2087
        %v2089 = vpop.f32.mrb[0].mxu0
        %v2090 = vpop.f32.mrb[0].mxu0
        %v2091 = vadd.f32 0.0, %v2090
        %v2092 = vpop.f32.mrb[0].mxu0
        %2093 = vmatprep.mubr.bf16.mxu0 0
        %2094 = vmatmul.mubr.bf16.gmra.mrb[0].mxu0 %v1956
        %v2095 = vpop.f32.mrb[0].mxu0
        %v2096 = vadd.f32 0.0, %v2095
        %v2097 = vpop.f32.mrb[0].mxu0
        %v2098 = vpop.f32.mrb[0].mxu0
        %v2099 = vadd.f32 0.0, %v2098
        %v2100 = vpop.f32.mrb[0].mxu0
        %2101 = vmatprep.mubr.bf16.mxu0 0
        %2102 = vmatmul.mubr.bf16.gmra.mrb[0].mxu0 %v1959
        %v2103 = vpop.f32.mrb[0].mxu0
        %v2104 = vadd.f32 0.0, %v2103
        %v2105 = vpop.f32.mrb[0].mxu0
        %v2106 = vpop.f32.mrb[0].mxu0
        %v2107 = vadd.f32 0.0, %v2106
        %v2108 = vpop.f32.mrb[0].mxu0
        %2109 = vmatprep.mubr.bf16.mxu0 0
        %2110 = vmatmul.mubr.bf16.gmra.mrb[0].mxu0 %v1962
        %v2111 = vpop.f32.mrb[0].mxu0
        %v2112 = vadd.f32 0.0, %v2111
        %v2113 = vpop.f32.mrb[0].mxu0
        %v2114 = vpop.f32.mrb[0].mxu0
        %v2115 = vadd.f32 0.0, %v2114
        %v2116 = vpop.f32.mrb[0].mxu0
        %2117 = vmatprep.mubr.bf16.mxu0 0
        %2118 = vmatmul.mubr.bf16.gmra.mrb[0].mxu0 %v1965
        %v2119 = vpop.f32.mrb[0].mxu0
        %v2120 = vadd.f32 0.0, %v2119
        %v2121 = vpop.f32.mrb[0].mxu0
        %v2122 = vpop.f32.mrb[0].mxu0
        %v2123 = vadd.f32 0.0, %v2122
        %v2124 = vpop.f32.mrb[0].mxu0
        %2125 = vmatprep.mubr.bf16.mxu0 0
        %2126 = vmatmul.mubr.bf16.gmra.mrb[0].mxu0 %v1968
        %v2127 = vpop.f32.mrb[0].mxu0
        %v2128 = vadd.f32 0.0, %v2127
        %v2129 = vpop.f32.mrb[0].mxu0
        %v2130 = vpop.f32.mrb[0].mxu0
        %v2131 = vadd.f32 0.0, %v2130
        %v2132 = vpop.f32.mrb[0].mxu0
        %2133 = vdwg.mxu0
        %v2134 = vadd.f32 %v1839, %v2008
        %v2135 = vadd.f32 %v1840, %v2011
        %v2136 = vadd.f32 %v1841, %v2016
        %v2137 = vadd.f32 %v1842, %v2019
        %v2138 = vadd.f32 %v1843, %v2024
        %v2139 = vadd.f32 %v1844, %v2027
        %v2140 = vadd.f32 %v1845, %v2032
        %v2141 = vadd.f32 %v1846, %v2035
        %v2142 = vadd.f32 %v1847, %v2040
        %v2143 = vadd.f32 %v1848, %v2043
        %v2144 = vadd.f32 %v1849, %v2048
        %v2145 = vadd.f32 %v1850, %v2051
        %v2146 = vadd.f32 %v1851, %v2056
        %v2147 = vadd.f32 %v1852, %v2059
        %v2148 = vadd.f32 %v1853, %v2064
        %v2149 = vadd.f32 %v1854, %v2067
        %v2150 = vadd.f32 %v1855, %v2072
        %v2151 = vadd.f32 %v1856, %v2075
        %v2152 = vadd.f32 %v1857, %v2080
        %v2153 = vadd.f32 %v1858, %v2083
        %v2154 = vadd.f32 %v1859, %v2088
        %v2155 = vadd.f32 %v1860, %v2091
        %v2156 = vadd.f32 %v1861, %v2096
        %v2157 = vadd.f32 %v1862, %v2099
        %v2158 = vadd.f32 %v1863, %v2104
        %v2159 = vadd.f32 %v1864, %v2107
        %v2160 = vadd.f32 %v1865, %v2112
        %v2161 = vadd.f32 %v1866, %v2115
        %v2162 = vadd.f32 %v1867, %v2120
        %v2163 = vadd.f32 %v1868, %v2123
        %v2164 = vadd.f32 %v1869, %v2128
        %v2165 = vadd.f32 %v1870, %v2131
        %v2166 = vld [vmem:[%s1871 + $0x1] sm:$0xff]
        %v2167 = vld [vmem:[%s1871 + $0x9] sm:$0xff]
        %v2168 = vld [vmem:[%s1871 + $0x19] sm:$0xff]
        %v2169 = vld [vmem:[%s1871 + $0x21] sm:$0xff]
        %v2170 = vld [vmem:[%s1871 + $0x31] sm:$0xff]
        %v2171 = vld [vmem:[%s1871 + $0x39] sm:$0xff]
        %v2172 = vld [vmem:[%s1871 + $0x49] sm:$0xff]
        %v2173 = vld [vmem:[%s1871 + $0x51] sm:$0xff]
        %v2174 = vld [vmem:[%s1871 + $0x61] sm:$0xff]
        %v2175 = vld [vmem:[%s1871 + $0x69] sm:$0xff]
        %v2176 = vld [vmem:[%s1871 + $0x79] sm:$0xff]
        %v2177 = vld [vmem:[%s1871 + $0x81] sm:$0xff]
        %v2178 = vld [vmem:[%s1871 + $0x91] sm:$0xff]
        %v2179 = vld [vmem:[%s1871 + $0x99] sm:$0xff]
        %v2180 = vld [vmem:[%s1871 + $0xa9] sm:$0xff]
        %v2181 = vld [vmem:[%s1871 + $0xb1] sm:$0xff]
        %v2182 = vld [vmem:[%s1871 + $0xc1] sm:$0xff]
        %v2183 = vld [vmem:[%s1871 + $0xc9] sm:$0xff]
        %v2184 = vld [vmem:[%s1871 + $0xd9] sm:$0xff]
        %v2185 = vld [vmem:[%s1871 + $0xe1] sm:$0xff]
        %v2186 = vld [vmem:[%s1871 + $0xf1] sm:$0xff]
        %v2187 = vld [vmem:[%s1871 + $0xf9] sm:$0xff]
        %v2188 = vld [vmem:[%s1871 + $0x109] sm:$0xff]
        %v2189 = vld [vmem:[%s1871 + $0x111] sm:$0xff]
        %v2190 = vld [vmem:[%s1871 + $0x121] sm:$0xff]
        %v2191 = vld [vmem:[%s1871 + $0x129] sm:$0xff]
        %v2192 = vld [vmem:[%s1871 + $0x139] sm:$0xff]
        %v2193 = vld [vmem:[%s1871 + $0x141] sm:$0xff]
        %v2194 = vld [vmem:[%s1871 + $0x151] sm:$0xff]
        %v2195 = vld [vmem:[%s1871 + $0x159] sm:$0xff]
        %v2196 = vld [vmem:[%s1871 + $0x169] sm:$0xff]
        %v2197 = vld [vmem:[%s1871 + $0x171] sm:$0xff]
        %v2198 = vpack.c.bf16 %v2167, %v2166
        %v2199 = vpack.c.bf16 %v2169, %v2168
        %v2200 = vpack.c.bf16 %v2171, %v2170
        %v2201 = vpack.c.bf16 %v2173, %v2172
        %v2202 = vpack.c.bf16 %v2175, %v2174
        %v2203 = vpack.c.bf16 %v2177, %v2176
        %v2204 = vpack.c.bf16 %v2179, %v2178
        %v2205 = vpack.c.bf16 %v2181, %v2180
        %v2206 = vpack.c.bf16 %v2183, %v2182
        %v2207 = vpack.c.bf16 %v2185, %v2184
        %v2208 = vpack.c.bf16 %v2187, %v2186
        %v2209 = vpack.c.bf16 %v2189, %v2188
        %v2210 = vpack.c.bf16 %v2191, %v2190
        %v2211 = vpack.c.bf16 %v2193, %v2192
        %v2212 = vpack.c.bf16 %v2195, %v2194
        %v2213 = vpack.c.bf16 %v2197, %v2196
        %s2214 = scalar_lea.vmem %s1, 14
        %v2215 = vld [vmem:[%s2214] sm:$0x3]
        %v2217 = vsel %vm268, %v2198, 0
        %v2220 = vsel %vm268, %v2199, 0
        %v2223 = vsel %vm268, %v2200, 0
        %v2226 = vsel %vm268, %v2201, 0
        %v2229 = vsel %vm268, %v2202, 0
        %v2232 = vsel %vm268, %v2203, 0
        %v2235 = vsel %vm268, %v2204, 0
        %v2238 = vsel %vm268, %v2205, 0
        %v2241 = vsel %vm268, %v2206, 0
        %v2244 = vsel %vm268, %v2207, 0
        %v2247 = vsel %vm268, %v2208, 0
        %v2250 = vsel %vm268, %v2209, 0
        %v2253 = vsel %vm268, %v2210, 0
        %v2256 = vsel %vm268, %v2211, 0
        %v2259 = vsel %vm268, %v2212, 0
        %v2262 = vsel %vm268, %v2213, 0
        %v2265 = vsel %vm317, %v2215, 0
        %2267 = vmatprep.subr.bf16.mxu0 0
        %2268 = vmatpush1.bf16.msra.mxu0 %v2265
        %2269 = vmatprep.subr.bf16.mxu0 0
        %2270 = vmatpush1.bf16.msra.mxu0 0
        %2271 = vmatprep.subr.bf16.mxu0 0
        %2272 = vmatpush1.bf16.msra.mxu0 0
        %2273 = vmatprep.subr.bf16.mxu0 0
        %2274 = vmatpush1.bf16.msra.mxu0 0
        %2275 = vmatprep.subr.bf16.mxu0 0
        %2276 = vmatpush1.bf16.msra.mxu0 0
        %2277 = vmatprep.subr.bf16.mxu0 0
        %2278 = vmatpush1.bf16.msra.mxu0 0
        %2279 = vmatprep.subr.bf16.mxu0 0
        %2280 = vmatpush1.bf16.msra.mxu0 0
        %2281 = vmatprep.subr.bf16.mxu0 0
        %2282 = vmatpush1.bf16.msra.mxu0 0
        %2283 = vmatprep.subr.bf16.mxu0 0
        %2284 = vmatpush1.bf16.msra.mxu0 0
        %2285 = vmatprep.subr.bf16.mxu0 0
        %2286 = vmatpush1.bf16.msra.mxu0 0
        %2287 = vmatprep.subr.bf16.mxu0 0
        %2288 = vmatpush1.bf16.msra.mxu0 0
        %2289 = vmatprep.subr.bf16.mxu0 0
        %2290 = vmatpush1.bf16.msra.mxu0 0
        %2291 = vmatprep.subr.bf16.mxu0 0
        %2292 = vmatpush1.bf16.msra.mxu0 0
        %2293 = vmatprep.subr.bf16.mxu0 0
        %2294 = vmatpush1.bf16.msra.mxu0 0
        %2295 = vmatprep.subr.bf16.mxu0 0
        %2296 = vmatpush1.bf16.msra.mxu0 0
        %2297 = vmatprep.subr.bf16.mxu0 0
        %2298 = vmatpush1.bf16.msra.mxu0 0
        %2299 = vmatprep.mubr.bf16.mxu0 0
        %2300 = vmatmul.mubr.bf16.gmra.mrb[0].mxu0 %v2217
        %v2301 = vpop.f32.mrb[0].mxu0
        %v2302 = vadd.f32 0.0, %v2301
        %v2303 = vpop.f32.mrb[0].mxu0
        %v2304 = vpop.f32.mrb[0].mxu0
        %v2305 = vadd.f32 0.0, %v2304
        %v2306 = vpop.f32.mrb[0].mxu0
        %2307 = vmatprep.mubr.bf16.mxu0 0
        %2308 = vmatmul.mubr.bf16.gmra.mrb[0].mxu0 %v2220
        %v2309 = vpop.f32.mrb[0].mxu0
        %v2310 = vadd.f32 0.0, %v2309
        %v2311 = vpop.f32.mrb[0].mxu0
        %v2312 = vpop.f32.mrb[0].mxu0
        %v2313 = vadd.f32 0.0, %v2312
        %v2314 = vpop.f32.mrb[0].mxu0
        %2315 = vmatprep.mubr.bf16.mxu0 0
        %2316 = vmatmul.mubr.bf16.gmra.mrb[0].mxu0 %v2223
        %v2317 = vpop.f32.mrb[0].mxu0
        %v2318 = vadd.f32 0.0, %v2317
        %v2319 = vpop.f32.mrb[0].mxu0
        %v2320 = vpop.f32.mrb[0].mxu0
        %v2321 = vadd.f32 0.0, %v2320
        %v2322 = vpop.f32.mrb[0].mxu0
        %2323 = vmatprep.mubr.bf16.mxu0 0
        %2324 = vmatmul.mubr.bf16.gmra.mrb[0].mxu0 %v2226
        %v2325 = vpop.f32.mrb[0].mxu0
        %v2326 = vadd.f32 0.0, %v2325
        %v2327 = vpop.f32.mrb[0].mxu0
        %v2328 = vpop.f32.mrb[0].mxu0
        %v2329 = vadd.f32 0.0, %v2328
        %v2330 = vpop.f32.mrb[0].mxu0
        %2331 = vmatprep.mubr.bf16.mxu0 0
        %2332 = vmatmul.mubr.bf16.gmra.mrb[0].mxu0 %v2229
        %v2333 = vpop.f32.mrb[0].mxu0
        %v2334 = vadd.f32 0.0, %v2333
        %v2335 = vpop.f32.mrb[0].mxu0
        %v2336 = vpop.f32.mrb[0].mxu0
        %v2337 = vadd.f32 0.0, %v2336
        %v2338 = vpop.f32.mrb[0].mxu0
        %2339 = vmatprep.mubr.bf16.mxu0 0
        %2340 = vmatmul.mubr.bf16.gmra.mrb[0].mxu0 %v2232
        %v2341 = vpop.f32.mrb[0].mxu0
        %v2342 = vadd.f32 0.0, %v2341
        %v2343 = vpop.f32.mrb[0].mxu0
        %v2344 = vpop.f32.mrb[0].mxu0
        %v2345 = vadd.f32 0.0, %v2344
        %v2346 = vpop.f32.mrb[0].mxu0
        %2347 = vmatprep.mubr.bf16.mxu0 0
        %2348 = vmatmul.mubr.bf16.gmra.mrb[0].mxu0 %v2235
        %v2349 = vpop.f32.mrb[0].mxu0
        %v2350 = vadd.f32 0.0, %v2349
        %v2351 = vpop.f32.mrb[0].mxu0
        %v2352 = vpop.f32.mrb[0].mxu0
        %v2353 = vadd.f32 0.0, %v2352
        %v2354 = vpop.f32.mrb[0].mxu0
        %2355 = vmatprep.mubr.bf16.mxu0 0
        %2356 = vmatmul.mubr.bf16.gmra.mrb[0].mxu0 %v2238
        %v2357 = vpop.f32.mrb[0].mxu0
        %v2358 = vadd.f32 0.0, %v2357
        %v2359 = vpop.f32.mrb[0].mxu0
        %v2360 = vpop.f32.mrb[0].mxu0
        %v2361 = vadd.f32 0.0, %v2360
        %v2362 = vpop.f32.mrb[0].mxu0
        %2363 = vmatprep.mubr.bf16.mxu0 0
        %2364 = vmatmul.mubr.bf16.gmra.mrb[0].mxu0 %v2241
        %v2365 = vpop.f32.mrb[0].mxu0
        %v2366 = vadd.f32 0.0, %v2365
        %v2367 = vpop.f32.mrb[0].mxu0
        %v2368 = vpop.f32.mrb[0].mxu0
        %v2369 = vadd.f32 0.0, %v2368
        %v2370 = vpop.f32.mrb[0].mxu0
        %2371 = vmatprep.mubr.bf16.mxu0 0
        %2372 = vmatmul.mubr.bf16.gmra.mrb[0].mxu0 %v2244
        %v2373 = vpop.f32.mrb[0].mxu0
        %v2374 = vadd.f32 0.0, %v2373
        %v2375 = vpop.f32.mrb[0].mxu0
        %v2376 = vpop.f32.mrb[0].mxu0
        %v2377 = vadd.f32 0.0, %v2376
        %v2378 = vpop.f32.mrb[0].mxu0
        %2379 = vmatprep.mubr.bf16.mxu0 0
        %2380 = vmatmul.mubr.bf16.gmra.mrb[0].mxu0 %v2247
        %v2381 = vpop.f32.mrb[0].mxu0
        %v2382 = vadd.f32 0.0, %v2381
        %v2383 = vpop.f32.mrb[0].mxu0
        %v2384 = vpop.f32.mrb[0].mxu0
        %v2385 = vadd.f32 0.0, %v2384
        %v2386 = vpop.f32.mrb[0].mxu0
        %2387 = vmatprep.mubr.bf16.mxu0 0
        %2388 = vmatmul.mubr.bf16.gmra.mrb[0].mxu0 %v2250
        %v2389 = vpop.f32.mrb[0].mxu0
        %v2390 = vadd.f32 0.0, %v2389
        %v2391 = vpop.f32.mrb[0].mxu0
        %v2392 = vpop.f32.mrb[0].mxu0
        %v2393 = vadd.f32 0.0, %v2392
        %v2394 = vpop.f32.mrb[0].mxu0
        %2395 = vmatprep.mubr.bf16.mxu0 0
        %2396 = vmatmul.mubr.bf16.gmra.mrb[0].mxu0 %v2253
        %v2397 = vpop.f32.mrb[0].mxu0
        %v2398 = vadd.f32 0.0, %v2397
        %v2399 = vpop.f32.mrb[0].mxu0
        %v2400 = vpop.f32.mrb[0].mxu0
        %v2401 = vadd.f32 0.0, %v2400
        %v2402 = vpop.f32.mrb[0].mxu0
        %2403 = vmatprep.mubr.bf16.mxu0 0
        %2404 = vmatmul.mubr.bf16.gmra.mrb[0].mxu0 %v2256
        %v2405 = vpop.f32.mrb[0].mxu0
        %v2406 = vadd.f32 0.0, %v2405
        %v2407 = vpop.f32.mrb[0].mxu0
        %v2408 = vpop.f32.mrb[0].mxu0
        %v2409 = vadd.f32 0.0, %v2408
        %v2410 = vpop.f32.mrb[0].mxu0
        %2411 = vmatprep.mubr.bf16.mxu0 0
        %2412 = vmatmul.mubr.bf16.gmra.mrb[0].mxu0 %v2259
        %v2413 = vpop.f32.mrb[0].mxu0
        %v2414 = vadd.f32 0.0, %v2413
        %v2415 = vpop.f32.mrb[0].mxu0
        %v2416 = vpop.f32.mrb[0].mxu0
        %v2417 = vadd.f32 0.0, %v2416
        %v2418 = vpop.f32.mrb[0].mxu0
        %2419 = vmatprep.mubr.bf16.mxu0 0
        %2420 = vmatmul.mubr.bf16.gmra.mrb[0].mxu0 %v2262
        %v2421 = vpop.f32.mrb[0].mxu0
        %v2422 = vadd.f32 0.0, %v2421
        %v2423 = vpop.f32.mrb[0].mxu0
        %v2424 = vpop.f32.mrb[0].mxu0
        %v2425 = vadd.f32 0.0, %v2424
        %v2426 = vpop.f32.mrb[0].mxu0
        %2427 = vdwg.mxu0
        %v2428 = vadd.f32 %v2134, %v2302
        %v2429 = vadd.f32 %v2135, %v2305
        %v2430 = vadd.f32 %v2136, %v2310
        %v2431 = vadd.f32 %v2137, %v2313
        %v2432 = vadd.f32 %v2138, %v2318
        %v2433 = vadd.f32 %v2139, %v2321
        %v2434 = vadd.f32 %v2140, %v2326
        %v2435 = vadd.f32 %v2141, %v2329
        %v2436 = vadd.f32 %v2142, %v2334
        %v2437 = vadd.f32 %v2143, %v2337
        %v2438 = vadd.f32 %v2144, %v2342
        %v2439 = vadd.f32 %v2145, %v2345
        %v2440 = vadd.f32 %v2146, %v2350
        %v2441 = vadd.f32 %v2147, %v2353
        %v2442 = vadd.f32 %v2148, %v2358
        %v2443 = vadd.f32 %v2149, %v2361
        %v2444 = vadd.f32 %v2150, %v2366
        %v2445 = vadd.f32 %v2151, %v2369
        %v2446 = vadd.f32 %v2152, %v2374
        %v2447 = vadd.f32 %v2153, %v2377
        %v2448 = vadd.f32 %v2154, %v2382
        %v2449 = vadd.f32 %v2155, %v2385
        %v2450 = vadd.f32 %v2156, %v2390
        %v2451 = vadd.f32 %v2157, %v2393
        %v2452 = vadd.f32 %v2158, %v2398
        %v2453 = vadd.f32 %v2159, %v2401
        %v2454 = vadd.f32 %v2160, %v2406
        %v2455 = vadd.f32 %v2161, %v2409
        %v2456 = vadd.f32 %v2162, %v2414
        %v2457 = vadd.f32 %v2163, %v2417
        %v2458 = vadd.f32 %v2164, %v2422
        %v2459 = vadd.f32 %v2165, %v2425
        %v2460 = vld [vmem:[%s1871 + $0x2] sm:$0xff]
        %v2461 = vld [vmem:[%s1871 + $0xa] sm:$0xff]
        %v2462 = vld [vmem:[%s1871 + $0x1a] sm:$0xff]
        %v2463 = vld [vmem:[%s1871 + $0x22] sm:$0xff]
        %v2464 = vld [vmem:[%s1871 + $0x32] sm:$0xff]
        %v2465 = vld [vmem:[%s1871 + $0x3a] sm:$0xff]
        %v2466 = vld [vmem:[%s1871 + $0x4a] sm:$0xff]
        %v2467 = vld [vmem:[%s1871 + $0x52] sm:$0xff]
        %v2468 = vld [vmem:[%s1871 + $0x62] sm:$0xff]
        %v2469 = vld [vmem:[%s1871 + $0x6a] sm:$0xff]
        %v2470 = vld [vmem:[%s1871 + $0x7a] sm:$0xff]
        %v2471 = vld [vmem:[%s1871 + $0x82] sm:$0xff]
        %v2472 = vld [vmem:[%s1871 + $0x92] sm:$0xff]
        %v2473 = vld [vmem:[%s1871 + $0x9a] sm:$0xff]
        %v2474 = vld [vmem:[%s1871 + $0xaa] sm:$0xff]
        %v2475 = vld [vmem:[%s1871 + $0xb2] sm:$0xff]
        %v2476 = vld [vmem:[%s1871 + $0xc2] sm:$0xff]
        %v2477 = vld [vmem:[%s1871 + $0xca] sm:$0xff]
        %v2478 = vld [vmem:[%s1871 + $0xda] sm:$0xff]
        %v2479 = vld [vmem:[%s1871 + $0xe2] sm:$0xff]
        %v2480 = vld [vmem:[%s1871 + $0xf2] sm:$0xff]
        %v2481 = vld [vmem:[%s1871 + $0xfa] sm:$0xff]
        %v2482 = vld [vmem:[%s1871 + $0x10a] sm:$0xff]
        %v2483 = vld [vmem:[%s1871 + $0x112] sm:$0xff]
        %v2484 = vld [vmem:[%s1871 + $0x122] sm:$0xff]
        %v2485 = vld [vmem:[%s1871 + $0x12a] sm:$0xff]
        %v2486 = vld [vmem:[%s1871 + $0x13a] sm:$0xff]
        %v2487 = vld [vmem:[%s1871 + $0x142] sm:$0xff]
        %v2488 = vld [vmem:[%s1871 + $0x152] sm:$0xff]
        %v2489 = vld [vmem:[%s1871 + $0x15a] sm:$0xff]
        %v2490 = vld [vmem:[%s1871 + $0x16a] sm:$0xff]
        %v2491 = vld [vmem:[%s1871 + $0x172] sm:$0xff]
        %v2492 = vpack.c.bf16 %v2461, %v2460
        %v2493 = vpack.c.bf16 %v2463, %v2462
        %v2494 = vpack.c.bf16 %v2465, %v2464
        %v2495 = vpack.c.bf16 %v2467, %v2466
        %v2496 = vpack.c.bf16 %v2469, %v2468
        %v2497 = vpack.c.bf16 %v2471, %v2470
        %v2498 = vpack.c.bf16 %v2473, %v2472
        %v2499 = vpack.c.bf16 %v2475, %v2474
        %v2500 = vpack.c.bf16 %v2477, %v2476
        %v2501 = vpack.c.bf16 %v2479, %v2478
        %v2502 = vpack.c.bf16 %v2481, %v2480
        %v2503 = vpack.c.bf16 %v2483, %v2482
        %v2504 = vpack.c.bf16 %v2485, %v2484
        %v2505 = vpack.c.bf16 %v2487, %v2486
        %v2506 = vpack.c.bf16 %v2489, %v2488
        %v2507 = vpack.c.bf16 %v2491, %v2490
        %s2508 = scalar_lea.vmem %s1, 16
        %v2509 = vld [vmem:[%s2508] sm:$0x3]
        %v2511 = vsel %vm268, %v2492, 0
        %v2514 = vsel %vm268, %v2493, 0
        %v2517 = vsel %vm268, %v2494, 0
        %v2520 = vsel %vm268, %v2495, 0
        %v2523 = vsel %vm268, %v2496, 0
        %v2526 = vsel %vm268, %v2497, 0
        %v2529 = vsel %vm268, %v2498, 0
        %v2532 = vsel %vm268, %v2499, 0
        %v2535 = vsel %vm268, %v2500, 0
        %v2538 = vsel %vm268, %v2501, 0
        %v2541 = vsel %vm268, %v2502, 0
        %v2544 = vsel %vm268, %v2503, 0
        %v2547 = vsel %vm268, %v2504, 0
        %v2550 = vsel %vm268, %v2505, 0
        %v2553 = vsel %vm268, %v2506, 0
        %v2556 = vsel %vm268, %v2507, 0
        %v2559 = vsel %vm317, %v2509, 0
        %2561 = vmatprep.subr.bf16.mxu0 0
        %2562 = vmatpush1.bf16.msra.mxu0 %v2559
        %2563 = vmatprep.subr.bf16.mxu0 0
        %2564 = vmatpush1.bf16.msra.mxu0 0
        %2565 = vmatprep.subr.bf16.mxu0 0
        %2566 = vmatpush1.bf16.msra.mxu0 0
        %2567 = vmatprep.subr.bf16.mxu0 0
        %2568 = vmatpush1.bf16.msra.mxu0 0
        %2569 = vmatprep.subr.bf16.mxu0 0
        %2570 = vmatpush1.bf16.msra.mxu0 0
        %2571 = vmatprep.subr.bf16.mxu0 0
        %2572 = vmatpush1.bf16.msra.mxu0 0
        %2573 = vmatprep.subr.bf16.mxu0 0
        %2574 = vmatpush1.bf16.msra.mxu0 0
        %2575 = vmatprep.subr.bf16.mxu0 0
        %2576 = vmatpush1.bf16.msra.mxu0 0
        %2577 = vmatprep.subr.bf16.mxu0 0
        %2578 = vmatpush1.bf16.msra.mxu0 0
        %2579 = vmatprep.subr.bf16.mxu0 0
        %2580 = vmatpush1.bf16.msra.mxu0 0
        %2581 = vmatprep.subr.bf16.mxu0 0
        %2582 = vmatpush1.bf16.msra.mxu0 0
        %2583 = vmatprep.subr.bf16.mxu0 0
        %2584 = vmatpush1.bf16.msra.mxu0 0
        %2585 = vmatprep.subr.bf16.mxu0 0
        %2586 = vmatpush1.bf16.msra.mxu0 0
        %2587 = vmatprep.subr.bf16.mxu0 0
        %2588 = vmatpush1.bf16.msra.mxu0 0
        %2589 = vmatprep.subr.bf16.mxu0 0
        %2590 = vmatpush1.bf16.msra.mxu0 0
        %2591 = vmatprep.subr.bf16.mxu0 0
        %2592 = vmatpush1.bf16.msra.mxu0 0
        %2593 = vmatprep.mubr.bf16.mxu0 0
        %2594 = vmatmul.mubr.bf16.gmra.mrb[0].mxu0 %v2511
        %v2595 = vpop.f32.mrb[0].mxu0
        %v2596 = vadd.f32 0.0, %v2595
        %v2597 = vpop.f32.mrb[0].mxu0
        %v2598 = vpop.f32.mrb[0].mxu0
        %v2599 = vadd.f32 0.0, %v2598
        %v2600 = vpop.f32.mrb[0].mxu0
        %2601 = vmatprep.mubr.bf16.mxu0 0
        %2602 = vmatmul.mubr.bf16.gmra.mrb[0].mxu0 %v2514
        %v2603 = vpop.f32.mrb[0].mxu0
        %v2604 = vadd.f32 0.0, %v2603
        %v2605 = vpop.f32.mrb[0].mxu0
        %v2606 = vpop.f32.mrb[0].mxu0
        %v2607 = vadd.f32 0.0, %v2606
        %v2608 = vpop.f32.mrb[0].mxu0
        %2609 = vmatprep.mubr.bf16.mxu0 0
        %2610 = vmatmul.mubr.bf16.gmra.mrb[0].mxu0 %v2517
        %v2611 = vpop.f32.mrb[0].mxu0
        %v2612 = vadd.f32 0.0, %v2611
        %v2613 = vpop.f32.mrb[0].mxu0
        %v2614 = vpop.f32.mrb[0].mxu0
        %v2615 = vadd.f32 0.0, %v2614
        %v2616 = vpop.f32.mrb[0].mxu0
        %2617 = vmatprep.mubr.bf16.mxu0 0
        %2618 = vmatmul.mubr.bf16.gmra.mrb[0].mxu0 %v2520
        %v2619 = vpop.f32.mrb[0].mxu0
        %v2620 = vadd.f32 0.0, %v2619
        %v2621 = vpop.f32.mrb[0].mxu0
        %v2622 = vpop.f32.mrb[0].mxu0
        %v2623 = vadd.f32 0.0, %v2622
        %v2624 = vpop.f32.mrb[0].mxu0
        %2625 = vmatprep.mubr.bf16.mxu0 0
        %2626 = vmatmul.mubr.bf16.gmra.mrb[0].mxu0 %v2523
        %v2627 = vpop.f32.mrb[0].mxu0
        %v2628 = vadd.f32 0.0, %v2627
        %v2629 = vpop.f32.mrb[0].mxu0
        %v2630 = vpop.f32.mrb[0].mxu0
        %v2631 = vadd.f32 0.0, %v2630
        %v2632 = vpop.f32.mrb[0].mxu0
        %2633 = vmatprep.mubr.bf16.mxu0 0
        %2634 = vmatmul.mubr.bf16.gmra.mrb[0].mxu0 %v2526
        %v2635 = vpop.f32.mrb[0].mxu0
        %v2636 = vadd.f32 0.0, %v2635
        %v2637 = vpop.f32.mrb[0].mxu0
        %v2638 = vpop.f32.mrb[0].mxu0
        %v2639 = vadd.f32 0.0, %v2638
        %v2640 = vpop.f32.mrb[0].mxu0
        %2641 = vmatprep.mubr.bf16.mxu0 0
        %2642 = vmatmul.mubr.bf16.gmra.mrb[0].mxu0 %v2529
        %v2643 = vpop.f32.mrb[0].mxu0
        %v2644 = vadd.f32 0.0, %v2643
        %v2645 = vpop.f32.mrb[0].mxu0
        %v2646 = vpop.f32.mrb[0].mxu0
        %v2647 = vadd.f32 0.0, %v2646
        %v2648 = vpop.f32.mrb[0].mxu0
        %2649 = vmatprep.mubr.bf16.mxu0 0
        %2650 = vmatmul.mubr.bf16.gmra.mrb[0].mxu0 %v2532
        %v2651 = vpop.f32.mrb[0].mxu0
        %v2652 = vadd.f32 0.0, %v2651
        %v2653 = vpop.f32.mrb[0].mxu0
        %v2654 = vpop.f32.mrb[0].mxu0
        %v2655 = vadd.f32 0.0, %v2654
        %v2656 = vpop.f32.mrb[0].mxu0
        %2657 = vmatprep.mubr.bf16.mxu0 0
        %2658 = vmatmul.mubr.bf16.gmra.mrb[0].mxu0 %v2535
        %v2659 = vpop.f32.mrb[0].mxu0
        %v2660 = vadd.f32 0.0, %v2659
        %v2661 = vpop.f32.mrb[0].mxu0
        %v2662 = vpop.f32.mrb[0].mxu0
        %v2663 = vadd.f32 0.0, %v2662
        %v2664 = vpop.f32.mrb[0].mxu0
        %2665 = vmatprep.mubr.bf16.mxu0 0
        %2666 = vmatmul.mubr.bf16.gmra.mrb[0].mxu0 %v2538
        %v2667 = vpop.f32.mrb[0].mxu0
        %v2668 = vadd.f32 0.0, %v2667
        %v2669 = vpop.f32.mrb[0].mxu0
        %v2670 = vpop.f32.mrb[0].mxu0
        %v2671 = vadd.f32 0.0, %v2670
        %v2672 = vpop.f32.mrb[0].mxu0
        %2673 = vmatprep.mubr.bf16.mxu0 0
        %2674 = vmatmul.mubr.bf16.gmra.mrb[0].mxu0 %v2541
        %v2675 = vpop.f32.mrb[0].mxu0
        %v2676 = vadd.f32 0.0, %v2675
        %v2677 = vpop.f32.mrb[0].mxu0
        %v2678 = vpop.f32.mrb[0].mxu0
        %v2679 = vadd.f32 0.0, %v2678
        %v2680 = vpop.f32.mrb[0].mxu0
        %2681 = vmatprep.mubr.bf16.mxu0 0
        %2682 = vmatmul.mubr.bf16.gmra.mrb[0].mxu0 %v2544
        %v2683 = vpop.f32.mrb[0].mxu0
        %v2684 = vadd.f32 0.0, %v2683
        %v2685 = vpop.f32.mrb[0].mxu0
        %v2686 = vpop.f32.mrb[0].mxu0
        %v2687 = vadd.f32 0.0, %v2686
        %v2688 = vpop.f32.mrb[0].mxu0
        %2689 = vmatprep.mubr.bf16.mxu0 0
        %2690 = vmatmul.mubr.bf16.gmra.mrb[0].mxu0 %v2547
        %v2691 = vpop.f32.mrb[0].mxu0
        %v2692 = vadd.f32 0.0, %v2691
        %v2693 = vpop.f32.mrb[0].mxu0
        %v2694 = vpop.f32.mrb[0].mxu0
        %v2695 = vadd.f32 0.0, %v2694
        %v2696 = vpop.f32.mrb[0].mxu0
        %2697 = vmatprep.mubr.bf16.mxu0 0
        %2698 = vmatmul.mubr.bf16.gmra.mrb[0].mxu0 %v2550
        %v2699 = vpop.f32.mrb[0].mxu0
        %v2700 = vadd.f32 0.0, %v2699
        %v2701 = vpop.f32.mrb[0].mxu0
        %v2702 = vpop.f32.mrb[0].mxu0
        %v2703 = vadd.f32 0.0, %v2702
        %v2704 = vpop.f32.mrb[0].mxu0
        %2705 = vmatprep.mubr.bf16.mxu0 0
        %2706 = vmatmul.mubr.bf16.gmra.mrb[0].mxu0 %v2553
        %v2707 = vpop.f32.mrb[0].mxu0
        %v2708 = vadd.f32 0.0, %v2707
        %v2709 = vpop.f32.mrb[0].mxu0
        %v2710 = vpop.f32.mrb[0].mxu0
        %v2711 = vadd.f32 0.0, %v2710
        %v2712 = vpop.f32.mrb[0].mxu0
        %2713 = vmatprep.mubr.bf16.mxu0 0
        %2714 = vmatmul.mubr.bf16.gmra.mrb[0].mxu0 %v2556
        %v2715 = vpop.f32.mrb[0].mxu0
        %v2716 = vadd.f32 0.0, %v2715
        %v2717 = vpop.f32.mrb[0].mxu0
        %v2718 = vpop.f32.mrb[0].mxu0
        %v2719 = vadd.f32 0.0, %v2718
        %v2720 = vpop.f32.mrb[0].mxu0
        %2721 = vdwg.mxu0
        %v2722 = vadd.f32 %v2428, %v2596
        %v2723 = vadd.f32 %v2429, %v2599
        %v2724 = vadd.f32 %v2430, %v2604
        %v2725 = vadd.f32 %v2431, %v2607
        %v2726 = vadd.f32 %v2432, %v2612
        %v2727 = vadd.f32 %v2433, %v2615
        %v2728 = vadd.f32 %v2434, %v2620
        %v2729 = vadd.f32 %v2435, %v2623
        %v2730 = vadd.f32 %v2436, %v2628
        %v2731 = vadd.f32 %v2437, %v2631
        %v2732 = vadd.f32 %v2438, %v2636
        %v2733 = vadd.f32 %v2439, %v2639
        %v2734 = vadd.f32 %v2440, %v2644
        %v2735 = vadd.f32 %v2441, %v2647
        %v2736 = vadd.f32 %v2442, %v2652
        %v2737 = vadd.f32 %v2443, %v2655
        %v2738 = vadd.f32 %v2444, %v2660
        %v2739 = vadd.f32 %v2445, %v2663
        %v2740 = vadd.f32 %v2446, %v2668
        %v2741 = vadd.f32 %v2447, %v2671
        %v2742 = vadd.f32 %v2448, %v2676
        %v2743 = vadd.f32 %v2449, %v2679
        %v2744 = vadd.f32 %v2450, %v2684
        %v2745 = vadd.f32 %v2451, %v2687
        %v2746 = vadd.f32 %v2452, %v2692
        %v2747 = vadd.f32 %v2453, %v2695
        %v2748 = vadd.f32 %v2454, %v2700
        %v2749 = vadd.f32 %v2455, %v2703
        %v2750 = vadd.f32 %v2456, %v2708
        %v2751 = vadd.f32 %v2457, %v2711
        %v2752 = vadd.f32 %v2458, %v2716
        %v2753 = vadd.f32 %v2459, %v2719
        %v2754 = vld [vmem:[%s2] sm:$0x1]
        %v2756 = vlaneseq
        %v2757 = vshrl.u32 %v2756, 7
        %v2758 = vsub.s32 0, %v2757
        %v2759 = vrot.slane %v2754, %v2758
        %v2761 = vadd.f32 %v2722, %v2759
        %v2762 = vadd.f32 %v2723, %v2759
        %v2763 = vadd.f32 %v2724, %v2759
        %v2764 = vadd.f32 %v2725, %v2759
        %v2765 = vadd.f32 %v2726, %v2759
        %v2766 = vadd.f32 %v2727, %v2759
        %v2767 = vadd.f32 %v2728, %v2759
        %v2768 = vadd.f32 %v2729, %v2759
        %v2769 = vadd.f32 %v2730, %v2759
        %v2770 = vadd.f32 %v2731, %v2759
        %v2771 = vadd.f32 %v2732, %v2759
        %v2772 = vadd.f32 %v2733, %v2759
        %v2773 = vadd.f32 %v2734, %v2759
        %v2774 = vadd.f32 %v2735, %v2759
        %v2775 = vadd.f32 %v2736, %v2759
        %v2776 = vadd.f32 %v2737, %v2759
        %v2777 = vadd.f32 %v2738, %v2759
        %v2778 = vadd.f32 %v2739, %v2759
        %v2779 = vadd.f32 %v2740, %v2759
        %v2780 = vadd.f32 %v2741, %v2759
        %v2781 = vadd.f32 %v2742, %v2759
        %v2782 = vadd.f32 %v2743, %v2759
        %v2783 = vadd.f32 %v2744, %v2759
        %v2784 = vadd.f32 %v2745, %v2759
        %v2785 = vadd.f32 %v2746, %v2759
        %v2786 = vadd.f32 %v2747, %v2759
        %v2787 = vadd.f32 %v2748, %v2759
        %v2788 = vadd.f32 %v2749, %v2759
        %v2789 = vadd.f32 %v2750, %v2759
        %v2790 = vadd.f32 %v2751, %v2759
        %v2791 = vadd.f32 %v2752, %v2759
        %v2792 = vadd.f32 %v2753, %v2759
        %v2793 = vmax.f32 %v2761, 0.0
        %v2794 = vmax.f32 %v2762, 0.0
        %v2795 = vmax.f32 %v2763, 0.0
        %v2796 = vmax.f32 %v2764, 0.0
        %v2797 = vmax.f32 %v2765, 0.0
        %v2798 = vmax.f32 %v2766, 0.0
        %v2799 = vmax.f32 %v2767, 0.0
        %v2800 = vmax.f32 %v2768, 0.0
        %v2801 = vmax.f32 %v2769, 0.0
        %v2802 = vmax.f32 %v2770, 0.0
        %v2803 = vmax.f32 %v2771, 0.0
        %v2804 = vmax.f32 %v2772, 0.0
        %v2805 = vmax.f32 %v2773, 0.0
        %v2806 = vmax.f32 %v2774, 0.0
        %v2807 = vmax.f32 %v2775, 0.0
        %v2808 = vmax.f32 %v2776, 0.0
        %v2809 = vmax.f32 %v2777, 0.0
        %v2810 = vmax.f32 %v2778, 0.0
        %v2811 = vmax.f32 %v2779, 0.0
        %v2812 = vmax.f32 %v2780, 0.0
        %v2813 = vmax.f32 %v2781, 0.0
        %v2814 = vmax.f32 %v2782, 0.0
        %v2815 = vmax.f32 %v2783, 0.0
        %v2816 = vmax.f32 %v2784, 0.0
        %v2817 = vmax.f32 %v2785, 0.0
        %v2818 = vmax.f32 %v2786, 0.0
        %v2819 = vmax.f32 %v2787, 0.0
        %v2820 = vmax.f32 %v2788, 0.0
        %v2821 = vmax.f32 %v2789, 0.0
        %v2822 = vmax.f32 %v2790, 0.0
        %v2823 = vmax.f32 %v2791, 0.0
        %v2824 = vmax.f32 %v2792, 0.0
        %v2825 = vadd.f32 %v2793, %v2794
        %v2826 = vadd.f32 %v2825, %v2795
        %v2827 = vadd.f32 %v2826, %v2796
        %v2828 = vadd.f32 %v2827, %v2797
        %v2829 = vadd.f32 %v2828, %v2798
        %v2830 = vadd.f32 %v2829, %v2799
        %v2831 = vadd.f32 %v2830, %v2800
        %v2832 = vadd.f32 %v2831, %v2801
        %v2833 = vadd.f32 %v2832, %v2802
        %v2834 = vadd.f32 %v2833, %v2803
        %v2835 = vadd.f32 %v2834, %v2804
        %v2836 = vadd.f32 %v2835, %v2805
        %v2837 = vadd.f32 %v2836, %v2806
        %v2838 = vadd.f32 %v2837, %v2807
        %v2839 = vadd.f32 %v2838, %v2808
        %v2840 = vadd.f32 %v2839, %v2809
        %v2841 = vadd.f32 %v2840, %v2810
        %v2842 = vadd.f32 %v2841, %v2811
        %v2843 = vadd.f32 %v2842, %v2812
        %v2844 = vadd.f32 %v2843, %v2813
        %v2845 = vadd.f32 %v2844, %v2814
        %v2846 = vadd.f32 %v2845, %v2815
        %v2847 = vadd.f32 %v2846, %v2816
        %v2848 = vadd.f32 %v2847, %v2817
        %v2849 = vadd.f32 %v2848, %v2818
        %v2850 = vadd.f32 %v2849, %v2819
        %v2851 = vadd.f32 %v2850, %v2820
        %v2852 = vadd.f32 %v2851, %v2821
        %v2853 = vadd.f32 %v2852, %v2822
        %v2854 = vadd.f32 %v2853, %v2823
        %v2855 = vadd.f32 %v2854, %v2824
        %v2856 = vrot.slane %v2855, 4
        %v2857 = vadd.f32 %v2855, %v2856
        %v2858 = vrot.slane %v2857, 2
        %v2859 = vadd.f32 %v2857, %v2858
        %v2860 = vrot.slane %v2859, 1
        %v2861 = vadd.f32 %v2859, %v2860
        %v2862 = vmul.f32 %v2861, 0.00390625
        %2863 = vst [vmem:[%s162] sm:$0x1] %v2862
        %s2864 = sand.u32 %s93, 1
        %s2865 = scalar_lea.sflag [#allocation3], %s2864
        %s2866 = sand.u32 %s93, 1
        %s2867 = scalar_lea.vmem [#allocation2], %s2866
        // Predicated region
        $region33: #{tpu_custom_call.1} parent=31 // pred_check
          %p2868 = pneg %p103
        $region34: #{tpu_custom_call.1} parent=31 // pred_check_branch
          %2870 = sbr.rel (%p2868) target = $region36
        $region35: #{tpu_custom_call.1} parent=31 // pred_region
          %s2872 = ssub.s32 16, 16
          %2873 = vsyncadd %s2865, %s2872
          %s2874 = smul.addr %s17, 16
          %s2875 = scalar_lea.hbm %s3, %s2874
          %s2877 = sshll.u32 %s2867, 4
          %s2878 = int_to_ptr.vmem [resolvable:$true] %s2877
          %2880 = dma.vmem_to_hbm [thread:$0]  %s2878, 16, %s2875, %s2865
        $region36: #{tpu_custom_call.1} parent=31 // pred_fallthru
          _
      $region32: #{tpu_custom_call.1} parent=5 // pred_fallthru
        _
      %p2881 = scmp.le.s32.totalorder 2, %s12
      // Predicated region
      $region37: #{tpu_custom_call.1} parent=5 // pred_check
        %p2882 = pneg %p2881
      $region38: #{tpu_custom_call.1} parent=5 // pred_check_branch
        %2884 = sbr.rel (%p2882) target = $region40
      $region39: #{tpu_custom_call.1} parent=5 // pred_region
        %s2885 = ssub.s32 %s12, 2
        // Predicated region
        $region41: #{tpu_custom_call.1} parent=39 // pred_check
          %p2886 = pneg %p109
        $region42: #{tpu_custom_call.1} parent=39 // pred_check_branch
          %2888 = sbr.rel (%p2886) target = $region44
        $region43: #{tpu_custom_call.1} parent=39 // pred_region
          %s2889 = sand.u32 %s94, 1
          %s2890 = scalar_lea.sflag [#allocation3], %s2889
          %s2891 = sand.u32 %s94, 1
          %s2892 = scalar_lea.vmem [#allocation2], %s2891
          %2893 = dma.done %s2890, 16
        $region44: #{tpu_custom_call.1} parent=39 // pred_fallthru
          _
      $region40: #{tpu_custom_call.1} parent=5 // pred_fallthru
        _
    $region6: #{tpu_custom_call.1} parent=1 // loop_footer
      %s16 = sadd.s32 1, %s12
    $region7: #{tpu_custom_call.1} parent=1 // loop_footer_branch
      %11 = sbr.rel target = $region3
    $region8: #{tpu_custom_call.1} parent=1 // loop_exit
      _
    %2894 = vsyncpa [#allocation3], 1
    %s2895 = scalar_lea.sflag [#allocation3], 1
    %2896 = vsyncpa %s2895, 1

</llo_original>
